<compile_context>
chip_gen: v5e
topology: v5e:2x2
jax: 0.10.0
libtpu: 0.0.40
codegen_flags: <defaults>
</compile_context>

<pallas_src>
import jax
import jax.numpy as jnp
from jax.experimental import pallas as pl
from jax.experimental.pallas import tpu as pltpu


# ---------------------------------------------------------------------------
# Model configuration (matches VAE_Linear_Medium.__init__)
# ---------------------------------------------------------------------------
SEQ_LEN = 300
SEQ_PAD = 384            # 300 padded up to a multiple of 128
LATENT = 32
STATS_PAD = 256          # fused mean/logvar head padded to 2 x 128 lanes
LOGVAR_OFF = 128         # logvar starts at a 128-lane (vreg) boundary

# Original 12 Linear layers, (in, out), torch-transposed.
ENC_DIMS = [(SEQ_LEN, 256), (256, 512), (512, 512), (512, 256), (256, 128)]
MEAN_DIM = (128, LATENT)
LOGVAR_DIM = (128, LATENT)
DEC_DIMS = [(LATENT, 128), (128, 256), (256, 512), (512, 256), (256, SEQ_LEN)]
ALL_DIMS = ENC_DIMS + [MEAN_DIM, LOGVAR_DIM] + DEC_DIMS   # 12 layers

# Packed / padded layer dims actually used by the kernel (11 matmuls: mean &
# logvar heads fused into one lane-padded (128, 256) layer; first/last layers
# lane-padded to SEQ_PAD).
PACKED_DIMS = (
    [(SEQ_PAD, 256), (256, 512), (512, 512), (512, 256), (256, 128)]  # encoder
    + [(128, STATS_PAD)]                                              # fused head
    + [(LATENT, 128), (128, 256), (256, 512), (512, 256), (256, SEQ_PAD)]  # decoder
)
N_LIN = len(PACKED_DIMS)   # 11

TB_MAX = 512               # max batch tile (rows of the MXU M dimension)


def _round_up(x, m):
    return (x + m - 1) // m * m


def _leaky_relu(x, slope=0.2):
    # max(x, 0.2*x): 2 VALU ops instead of cmp+select+mul.
    return jnp.maximum(x, slope * x)


# ---------------------------------------------------------------------------
# Pallas kernel: one batch tile through the whole VAE, weights VMEM-resident.
# ---------------------------------------------------------------------------
def vae_kernel(x_ref, eps_ref, *refs):
    # refs = 22 param refs (w0, b0, ..., w10, b10) followed by 2 output refs.
    param_refs = refs[: 2 * N_LIN]
    xhat_ref, stats_ref = refs[2 * N_LIN:]

    def linear(h, layer_idx):
        w = param_refs[2 * layer_idx][...]          # (in, out) bf16
        b = param_refs[2 * layer_idx + 1][...]      # (1, out)  f32
        # bf16 operands, f32 accumulation on the MXU.
        return jnp.dot(h.astype(jnp.bfloat16), w,
                       preferred_element_type=jnp.float32) + b

    # ---- encoder: 5 x (Linear + LeakyReLU(0.2)) ----
    h = x_ref[...]
    for i in range(5):
        h = _leaky_relu(linear(h, i))

    # ---- fused mean / logvar head: one (128, 256) matmul ----
    # mean lives in lanes [0:32), logvar in lanes [128:160); the rest is zero
    # padding so the stats writeback is lane-dense and the logvar slice starts
    # on a vreg boundary.
    stats = linear(h, 5)                        # (TB, 256)
    mean = stats[:, :LATENT]
    log_var = stats[:, LOGVAR_OFF:LOGVAR_OFF + LATENT]

    # ---- reparameterization: z = mean + log_var * eps  (as in the source) ----
    z = mean + log_var * eps_ref[...]

    # ---- decoder: 4 x (Linear + LeakyReLU) + final Linear (padded to 384) ----
    d = z
    for i in range(6, 10):
        d = _leaky_relu(linear(d, i))
    x_hat = linear(d, 10)                       # (TB, SEQ_PAD)

    xhat_ref[...] = x_hat
    stats_ref[...] = stats


# ---------------------------------------------------------------------------
# Parameter packing: 12 torch-style layers -> 11 padded/fused kernel layers.
# ---------------------------------------------------------------------------
def _pack_params(params):
    """params: flat [w0, b0, ..., w11, b11] with w as (in, out) f32, b as (out,) f32.

    Returns flat [W0, B0, ..., W10, B10] with:
      * weights cast to bf16 (MXU-native), biases kept f32 (added to f32 acc),
      * W0 row-padded 300 -> 384 (zeros),
      * mean/logvar fused into one (128, 256) weight / (1, 256) bias with mean
        at lanes [0:32) and logvar at lanes [128:160),
      * final W/b column-padded 300 -> 384 (zeros),
      * all biases reshaped to (1, out).
    """
    ws = [params[2 * i] for i in range(len(ALL_DIMS))]
    bs = [params[2 * i + 1] for i in range(len(ALL_DIMS))]

    packed = []

    # encoder layer 0: pad input dim 300 -> 384
    w0 = jnp.zeros((SEQ_PAD, 256), jnp.float32).at[:SEQ_LEN, :].set(ws[0])
    packed += [w0.astype(jnp.bfloat16), bs[0].reshape(1, -1)]
    # encoder layers 1..4
    for i in range(1, 5):
        packed += [ws[i].astype(jnp.bfloat16), bs[i].reshape(1, -1)]
    # fused mean / logvar head, padded to 256 lanes
    w_ml = (jnp.zeros((128, STATS_PAD), jnp.float32)
            .at[:, :LATENT].set(ws[5])
            .at[:, LOGVAR_OFF:LOGVAR_OFF + LATENT].set(ws[6]))
    b_ml = (jnp.zeros((1, STATS_PAD), jnp.float32)
            .at[0, :LATENT].set(bs[5])
            .at[0, LOGVAR_OFF:LOGVAR_OFF + LATENT].set(bs[6]))
    packed += [w_ml.astype(jnp.bfloat16), b_ml]
    # decoder layers 0..3
    for i in range(7, 11):
        packed += [ws[i].astype(jnp.bfloat16), bs[i].reshape(1, -1)]
    # final decoder layer: pad output dim 300 -> 384
    w_last = jnp.zeros((256, SEQ_PAD), jnp.float32).at[:, :SEQ_LEN].set(ws[11])
    b_last = jnp.zeros((1, SEQ_PAD), jnp.float32).at[0, :SEQ_LEN].set(bs[11])
    packed += [w_last.astype(jnp.bfloat16), b_last]
    return packed


# ---------------------------------------------------------------------------
# Wrapper
# ---------------------------------------------------------------------------
def vae_forward(x, eps, params, tb=None):
    """x: (B, SEQ_LEN) f32, eps: (B, LATENT) f32, params: flat list of 12 W/b."""
    batch = x.shape[0]
    kp = _pack_params(params)

    # batch tile: sublane-aligned; for small/medium batches pick ~ceil(B/2) so
    # the grid has >= 2 steps (keeps both v7x TensorCores busy; harmless on
    # single-core v5e/v6e). Cap at TB_MAX.
    if tb is None:
        if batch >= 2 * TB_MAX:
            tb = TB_MAX
        else:
            tb = max(8, _round_up((batch + 1) // 2, 8))
    tb = min(TB_MAX, max(8, _round_up(tb, 8)))
    padded_b = _round_up(batch, tb)
    grid = (padded_b // tb,)

    # lane-pad x to 384 and batch-pad x / eps to padded_b.
    x_p = jnp.zeros((padded_b, SEQ_PAD), jnp.float32).at[:batch, :SEQ_LEN].set(x)
    eps_p = jnp.zeros((padded_b, LATENT), jnp.float32).at[:batch, :].set(eps)

    # activation blocks iterate over batch tiles; parameters stay resident
    # (constant index_map -> no re-DMA across grid steps).
    x_spec = pl.BlockSpec((tb, SEQ_PAD), lambda i: (i, 0))
    eps_spec = pl.BlockSpec((tb, LATENT), lambda i: (i, 0))
    param_specs = [pl.BlockSpec(p.shape, lambda i: (0, 0)) for p in kp]

    out_shapes = (
        jax.ShapeDtypeStruct((padded_b, SEQ_PAD), jnp.float32),     # x_hat (padded)
        jax.ShapeDtypeStruct((padded_b, STATS_PAD), jnp.float32),   # [mean | pad | logvar | pad]
    )
    out_specs = (
        pl.BlockSpec((tb, SEQ_PAD), lambda i: (i, 0)),
        pl.BlockSpec((tb, STATS_PAD), lambda i: (i, 0)),
    )

    flops = 2 * padded_b * sum(fi * fo for fi, fo in PACKED_DIMS)
    bytes_accessed = (
        sum(int(p.size) * p.dtype.itemsize for p in kp)
        + 4 * (x_p.size + eps_p.size)
        + 4 * (padded_b * SEQ_PAD + padded_b * STATS_PAD)
    )

    x_hat_p, stats_p = pl.pallas_call(
        vae_kernel,
        out_shape=out_shapes,
        grid=grid,
        in_specs=[x_spec, eps_spec] + param_specs,
        out_specs=out_specs,
        compiler_params=pltpu.CompilerParams(
            dimension_semantics=("parallel",),
            vmem_limit_bytes=32 << 20,
        ),
        cost_estimate=pl.CostEstimate(
            flops=flops, transcendentals=0, bytes_accessed=bytes_accessed),
    )(x_p, eps_p, *kp)

    x_hat = x_hat_p[:batch, :SEQ_LEN]
    mean = stats_p[:batch, :LATENT]
    log_var = stats_p[:batch, LOGVAR_OFF:LOGVAR_OFF + LATENT]
    return x_hat, mean, log_var


def init_params(key):
    """Deterministic init mimicking nn.Linear's U(-1/sqrt(in), 1/sqrt(in)).

    Weights stored as (in_features, out_features); biases 1-D (out,)."""
    params = []
    for (fan_in, fan_out) in ALL_DIMS:
        key, kw, kb = jax.random.split(key, 3)
        bound = 1.0 / jnp.sqrt(jnp.float32(fan_in))
        w = jax.random.uniform(kw, (fan_in, fan_out), jnp.float32, -bound, bound)
        b = jax.random.uniform(kb, (fan_out,), jnp.float32, -bound, bound)
        params.append(w)
        params.append(b)
    return params


# ---------------------------------------------------------------------------
# Pure-JAX references for sanity checks.
# ---------------------------------------------------------------------------
def vae_reference_f32(x, eps, params):
    """Full-f32 reference (unfused, unpadded)."""
    def linear(h, i):
        return h @ params[2 * i] + params[2 * i + 1]

    h = x
    for i in range(5):
        h = _leaky_relu(linear(h, i))
    mean = linear(h, 5)
    log_var = linear(h, 6)
    z = mean + log_var * eps
    d = z
    for i in range(7, 11):
        d = _leaky_relu(linear(d, i))
    x_hat = linear(d, 11)
    return x_hat, mean, log_var


def vae_reference_bf16(x, eps, params):
    """Reference matching the kernel's numerics: bf16 matmul operands, f32 acc."""
    def linear(h, i):
        w = params[2 * i].astype(jnp.bfloat16)
        return (jnp.dot(h.astype(jnp.bfloat16), w,
                        preferred_element_type=jnp.float32)
                + params[2 * i + 1])

    h = x
    for i in range(5):
        h = _leaky_relu(linear(h, i))
    mean = linear(h, 5)
    log_var = linear(h, 6)
    z = mean + log_var * eps
    d = z
    for i in range(7, 11):
        d = _leaky_relu(linear(d, i))
    x_hat = linear(d, 11)
    return x_hat, mean, log_var


if __name__ == "__main__":
    key = jax.random.PRNGKey(0)
    key, kx, keps, kparams = jax.random.split(key, 4)

    batch = 20                       # small, and not a multiple of the tile
    x = jax.random.normal(kx, (batch, SEQ_LEN), jnp.float32)
    # epsilon drawn outside the kernel (randn_like in the torch module)
    eps = jax.random.normal(keps, (batch, LATENT), jnp.float32)
    params = init_params(kparams)

    # default tb logic -> tb=16, grid of 2 batch tiles (exercises the
    # pipelined / batch-padded path and the v7x two-core split).
    x_hat, mean, log_var = jax.block_until_ready(vae_forward(x, eps, params))

    # tight correctness check vs a bf16-matched pure-JAX reference
    rbx, rbm, rbl = vae_reference_bf16(x, eps, params)
    assert jnp.allclose(x_hat, rbx, atol=2e-3, rtol=2e-3)
    assert jnp.allclose(mean, rbm, atol=2e-3, rtol=2e-3)
    assert jnp.allclose(log_var, rbl, atol=2e-3, rtol=2e-3)

    # looser numerics check vs the full-f32 reference (bf16 MXU drift)
    rfx, rfm, rfl = vae_reference_f32(x, eps, params)
    assert jnp.allclose(x_hat, rfx, atol=1e-1, rtol=1e-1)
    assert jnp.allclose(mean, rfm, atol=1e-1, rtol=1e-1)
    assert jnp.allclose(log_var, rfl, atol=1e-1, rtol=1e-1)

    print("KERNEL_OK")
</pallas_src>

<mosaic_0001>
module attributes {stable_mosaic.version = 11 : i64} {
  func.func @vae_kernel(%arg0: i32, %arg1: memref<16x384xf32, #tpu.memory_space<vmem>>, %arg2: memref<16x32xf32, #tpu.memory_space<vmem>>, %arg3: memref<384x256xbf16, #tpu.memory_space<vmem>>, %arg4: memref<1x256xf32, #tpu.memory_space<vmem>>, %arg5: memref<256x512xbf16, #tpu.memory_space<vmem>>, %arg6: memref<1x512xf32, #tpu.memory_space<vmem>>, %arg7: memref<512x512xbf16, #tpu.memory_space<vmem>>, %arg8: memref<1x512xf32, #tpu.memory_space<vmem>>, %arg9: memref<512x256xbf16, #tpu.memory_space<vmem>>, %arg10: memref<1x256xf32, #tpu.memory_space<vmem>>, %arg11: memref<256x128xbf16, #tpu.memory_space<vmem>>, %arg12: memref<1x128xf32, #tpu.memory_space<vmem>>, %arg13: memref<128x256xbf16, #tpu.memory_space<vmem>>, %arg14: memref<1x256xf32, #tpu.memory_space<vmem>>, %arg15: memref<32x128xbf16, #tpu.memory_space<vmem>>, %arg16: memref<1x128xf32, #tpu.memory_space<vmem>>, %arg17: memref<128x256xbf16, #tpu.memory_space<vmem>>, %arg18: memref<1x256xf32, #tpu.memory_space<vmem>>, %arg19: memref<256x512xbf16, #tpu.memory_space<vmem>>, %arg20: memref<1x512xf32, #tpu.memory_space<vmem>>, %arg21: memref<512x256xbf16, #tpu.memory_space<vmem>>, %arg22: memref<1x256xf32, #tpu.memory_space<vmem>>, %arg23: memref<256x384xbf16, #tpu.memory_space<vmem>>, %arg24: memref<1x384xf32, #tpu.memory_space<vmem>>, %arg25: memref<16x384xf32, #tpu.memory_space<vmem>>, %arg26: memref<16x256xf32, #tpu.memory_space<vmem>>) attributes {dimension_semantics = [#tpu.dimension_semantics<parallel>], iteration_bounds = array<i64: 2>, scalar_prefetch = 0 : i64, scratch_operands = 0 : i64, tpu.core_type = #tpu.core_type<tc>, window_params = [{transform_indices = @transform_0, window_bounds = array<i64: 16, 384>}, {transform_indices = @transform_1, window_bounds = array<i64: 16, 32>}, {pipeline_mode = #tpu.pipeline_mode<synchronous>, transform_indices = @transform_2, window_bounds = array<i64: 384, 256>}, {pipeline_mode = #tpu.pipeline_mode<synchronous>, transform_indices = @transform_3, window_bounds = array<i64: 1, 256>}, {pipeline_mode = #tpu.pipeline_mode<synchronous>, transform_indices = @transform_4, window_bounds = array<i64: 256, 512>}, {pipeline_mode = #tpu.pipeline_mode<synchronous>, transform_indices = @transform_5, window_bounds = array<i64: 1, 512>}, {pipeline_mode = #tpu.pipeline_mode<synchronous>, transform_indices = @transform_6, window_bounds = array<i64: 512, 512>}, {pipeline_mode = #tpu.pipeline_mode<synchronous>, transform_indices = @transform_7, window_bounds = array<i64: 1, 512>}, {pipeline_mode = #tpu.pipeline_mode<synchronous>, transform_indices = @transform_8, window_bounds = array<i64: 512, 256>}, {pipeline_mode = #tpu.pipeline_mode<synchronous>, transform_indices = @transform_9, window_bounds = array<i64: 1, 256>}, {pipeline_mode = #tpu.pipeline_mode<synchronous>, transform_indices = @transform_10, window_bounds = array<i64: 256, 128>}, {pipeline_mode = #tpu.pipeline_mode<synchronous>, transform_indices = @transform_11, window_bounds = array<i64: 1, 128>}, {pipeline_mode = #tpu.pipeline_mode<synchronous>, transform_indices = @transform_12, window_bounds = array<i64: 128, 256>}, {pipeline_mode = #tpu.pipeline_mode<synchronous>, transform_indices = @transform_13, window_bounds = array<i64: 1, 256>}, {pipeline_mode = #tpu.pipeline_mode<synchronous>, transform_indices = @transform_14, window_bounds = array<i64: 32, 128>}, {pipeline_mode = #tpu.pipeline_mode<synchronous>, transform_indices = @transform_15, window_bounds = array<i64: 1, 128>}, {pipeline_mode = #tpu.pipeline_mode<synchronous>, transform_indices = @transform_16, window_bounds = array<i64: 128, 256>}, {pipeline_mode = #tpu.pipeline_mode<synchronous>, transform_indices = @transform_17, window_bounds = array<i64: 1, 256>}, {pipeline_mode = #tpu.pipeline_mode<synchronous>, transform_indices = @transform_18, window_bounds = array<i64: 256, 512>}, {pipeline_mode = #tpu.pipeline_mode<synchronous>, transform_indices = @transform_19, window_bounds = array<i64: 1, 512>}, {pipeline_mode = #tpu.pipeline_mode<synchronous>, transform_indices = @transform_20, window_bounds = array<i64: 512, 256>}, {pipeline_mode = #tpu.pipeline_mode<synchronous>, transform_indices = @transform_21, window_bounds = array<i64: 1, 256>}, {pipeline_mode = #tpu.pipeline_mode<synchronous>, transform_indices = @transform_22, window_bounds = array<i64: 256, 384>}, {pipeline_mode = #tpu.pipeline_mode<synchronous>, transform_indices = @transform_23, window_bounds = array<i64: 1, 384>}, {transform_indices = @transform_24, window_bounds = array<i64: 16, 384>}, {transform_indices = @transform_25, window_bounds = array<i64: 16, 256>}]} {
    %c0 = arith.constant 0 : index
    %c0_0 = arith.constant 0 : index
    %0 = vector.load %arg1[%c0, %c0_0] : memref<16x384xf32, #tpu.memory_space<vmem>>, vector<16x384xf32>
    %c0_1 = arith.constant 0 : index
    %c0_2 = arith.constant 0 : index
    %1 = vector.load %arg3[%c0_1, %c0_2] : memref<384x256xbf16, #tpu.memory_space<vmem>>, vector<384x256xbf16>
    %c0_3 = arith.constant 0 : index
    %c0_4 = arith.constant 0 : index
    %2 = vector.load %arg4[%c0_3, %c0_4] : memref<1x256xf32, #tpu.memory_space<vmem>>, vector<1x256xf32>
    %3 = arith.truncf %0 : vector<16x384xf32> to vector<16x384xbf16>
    %cst = arith.constant dense<0.000000e+00> : vector<16x256xf32>
    %4 = tpu.matmul %3, %1, %cst {dimension_numbers = #tpu.dot_dimension_numbers<[1], [0], [0], [1], [0, 0, 1, 1], [], []>} : vector<16x384xbf16>, vector<384x256xbf16>, vector<16x256xf32> -> vector<16x256xf32>
    %5 = vector.broadcast %2 : vector<1x256xf32> to vector<16x256xf32>
    %6 = arith.addf %4, %5 : vector<16x256xf32>
    %cst_5 = arith.constant 2.000000e-01 : f32
    %7 = vector.broadcast %cst_5 : f32 to vector<16x256xf32>
    %8 = arith.mulf %7, %6 : vector<16x256xf32>
    %9 = arith.maximumf %6, %8 : vector<16x256xf32>
    %c0_6 = arith.constant 0 : index
    %c0_7 = arith.constant 0 : index
    %10 = vector.load %arg5[%c0_6, %c0_7] : memref<256x512xbf16, #tpu.memory_space<vmem>>, vector<256x512xbf16>
    %c0_8 = arith.constant 0 : index
    %c0_9 = arith.constant 0 : index
    %11 = vector.load %arg6[%c0_8, %c0_9] : memref<1x512xf32, #tpu.memory_space<vmem>>, vector<1x512xf32>
    %12 = arith.truncf %9 : vector<16x256xf32> to vector<16x256xbf16>
    %cst_10 = arith.constant dense<0.000000e+00> : vector<16x512xf32>
    %13 = tpu.matmul %12, %10, %cst_10 {dimension_numbers = #tpu.dot_dimension_numbers<[1], [0], [0], [1], [0, 0, 1, 1], [], []>} : vector<16x256xbf16>, vector<256x512xbf16>, vector<16x512xf32> -> vector<16x512xf32>
    %14 = vector.broadcast %11 : vector<1x512xf32> to vector<16x512xf32>
    %15 = arith.addf %13, %14 : vector<16x512xf32>
    %cst_11 = arith.constant 2.000000e-01 : f32
    %16 = vector.broadcast %cst_11 : f32 to vector<16x512xf32>
    %17 = arith.mulf %16, %15 : vector<16x512xf32>
    %18 = arith.maximumf %15, %17 : vector<16x512xf32>
    %c0_12 = arith.constant 0 : index
    %c0_13 = arith.constant 0 : index
    %19 = vector.load %arg7[%c0_12, %c0_13] : memref<512x512xbf16, #tpu.memory_space<vmem>>, vector<512x512xbf16>
    %c0_14 = arith.constant 0 : index
    %c0_15 = arith.constant 0 : index
    %20 = vector.load %arg8[%c0_14, %c0_15] : memref<1x512xf32, #tpu.memory_space<vmem>>, vector<1x512xf32>
    %21 = arith.truncf %18 : vector<16x512xf32> to vector<16x512xbf16>
    %cst_16 = arith.constant dense<0.000000e+00> : vector<16x512xf32>
    %22 = tpu.matmul %21, %19, %cst_16 {dimension_numbers = #tpu.dot_dimension_numbers<[1], [0], [0], [1], [0, 0, 1, 1], [], []>} : vector<16x512xbf16>, vector<512x512xbf16>, vector<16x512xf32> -> vector<16x512xf32>
    %23 = vector.broadcast %20 : vector<1x512xf32> to vector<16x512xf32>
    %24 = arith.addf %22, %23 : vector<16x512xf32>
    %cst_17 = arith.constant 2.000000e-01 : f32
    %25 = vector.broadcast %cst_17 : f32 to vector<16x512xf32>
    %26 = arith.mulf %25, %24 : vector<16x512xf32>
    %27 = arith.maximumf %24, %26 : vector<16x512xf32>
    %c0_18 = arith.constant 0 : index
    %c0_19 = arith.constant 0 : index
    %28 = vector.load %arg9[%c0_18, %c0_19] : memref<512x256xbf16, #tpu.memory_space<vmem>>, vector<512x256xbf16>
    %c0_20 = arith.constant 0 : index
    %c0_21 = arith.constant 0 : index
    %29 = vector.load %arg10[%c0_20, %c0_21] : memref<1x256xf32, #tpu.memory_space<vmem>>, vector<1x256xf32>
    %30 = arith.truncf %27 : vector<16x512xf32> to vector<16x512xbf16>
    %cst_22 = arith.constant dense<0.000000e+00> : vector<16x256xf32>
    %31 = tpu.matmul %30, %28, %cst_22 {dimension_numbers = #tpu.dot_dimension_numbers<[1], [0], [0], [1], [0, 0, 1, 1], [], []>} : vector<16x512xbf16>, vector<512x256xbf16>, vector<16x256xf32> -> vector<16x256xf32>
    %32 = vector.broadcast %29 : vector<1x256xf32> to vector<16x256xf32>
    %33 = arith.addf %31, %32 : vector<16x256xf32>
    %cst_23 = arith.constant 2.000000e-01 : f32
    %34 = vector.broadcast %cst_23 : f32 to vector<16x256xf32>
    %35 = arith.mulf %34, %33 : vector<16x256xf32>
    %36 = arith.maximumf %33, %35 : vector<16x256xf32>
    %c0_24 = arith.constant 0 : index
    %c0_25 = arith.constant 0 : index
    %37 = vector.load %arg11[%c0_24, %c0_25] : memref<256x128xbf16, #tpu.memory_space<vmem>>, vector<256x128xbf16>
    %c0_26 = arith.constant 0 : index
    %c0_27 = arith.constant 0 : index
    %38 = vector.load %arg12[%c0_26, %c0_27] : memref<1x128xf32, #tpu.memory_space<vmem>>, vector<1x128xf32>
    %39 = arith.truncf %36 : vector<16x256xf32> to vector<16x256xbf16>
    %cst_28 = arith.constant dense<0.000000e+00> : vector<16x128xf32>
    %40 = tpu.matmul %39, %37, %cst_28 {dimension_numbers = #tpu.dot_dimension_numbers<[1], [0], [0], [1], [0, 0, 1, 1], [], []>} : vector<16x256xbf16>, vector<256x128xbf16>, vector<16x128xf32> -> vector<16x128xf32>
    %41 = vector.broadcast %38 : vector<1x128xf32> to vector<16x128xf32>
    %42 = arith.addf %40, %41 : vector<16x128xf32>
    %cst_29 = arith.constant 2.000000e-01 : f32
    %43 = vector.broadcast %cst_29 : f32 to vector<16x128xf32>
    %44 = arith.mulf %43, %42 : vector<16x128xf32>
    %45 = arith.maximumf %42, %44 : vector<16x128xf32>
    %c0_30 = arith.constant 0 : index
    %c0_31 = arith.constant 0 : index
    %46 = vector.load %arg13[%c0_30, %c0_31] : memref<128x256xbf16, #tpu.memory_space<vmem>>, vector<128x256xbf16>
    %c0_32 = arith.constant 0 : index
    %c0_33 = arith.constant 0 : index
    %47 = vector.load %arg14[%c0_32, %c0_33] : memref<1x256xf32, #tpu.memory_space<vmem>>, vector<1x256xf32>
    %48 = arith.truncf %45 : vector<16x128xf32> to vector<16x128xbf16>
    %cst_34 = arith.constant dense<0.000000e+00> : vector<16x256xf32>
    %49 = tpu.matmul %48, %46, %cst_34 {dimension_numbers = #tpu.dot_dimension_numbers<[1], [0], [0], [1], [0, 0, 1, 1], [], []>} : vector<16x128xbf16>, vector<128x256xbf16>, vector<16x256xf32> -> vector<16x256xf32>
    %50 = vector.broadcast %47 : vector<1x256xf32> to vector<16x256xf32>
    %51 = arith.addf %49, %50 : vector<16x256xf32>
    %52 = vector.extract_strided_slice %51 {offsets = [0, 0], sizes = [16, 32], strides = [1, 1]} : vector<16x256xf32> to vector<16x32xf32>
    %53 = vector.extract_strided_slice %51 {offsets = [0, 128], sizes = [16, 32], strides = [1, 1]} : vector<16x256xf32> to vector<16x32xf32>
    %c0_35 = arith.constant 0 : index
    %c0_36 = arith.constant 0 : index
    %54 = vector.load %arg2[%c0_35, %c0_36] : memref<16x32xf32, #tpu.memory_space<vmem>>, vector<16x32xf32>
    %55 = arith.mulf %53, %54 : vector<16x32xf32>
    %56 = arith.addf %52, %55 : vector<16x32xf32>
    %c0_37 = arith.constant 0 : index
    %c0_38 = arith.constant 0 : index
    %57 = vector.load %arg15[%c0_37, %c0_38] : memref<32x128xbf16, #tpu.memory_space<vmem>>, vector<32x128xbf16>
    %c0_39 = arith.constant 0 : index
    %c0_40 = arith.constant 0 : index
    %58 = vector.load %arg16[%c0_39, %c0_40] : memref<1x128xf32, #tpu.memory_space<vmem>>, vector<1x128xf32>
    %59 = arith.truncf %56 : vector<16x32xf32> to vector<16x32xbf16>
    %cst_41 = arith.constant dense<0.000000e+00> : vector<16x128xf32>
    %60 = tpu.matmul %59, %57, %cst_41 {dimension_numbers = #tpu.dot_dimension_numbers<[1], [0], [0], [1], [0, 0, 1, 1], [], []>} : vector<16x32xbf16>, vector<32x128xbf16>, vector<16x128xf32> -> vector<16x128xf32>
    %61 = vector.broadcast %58 : vector<1x128xf32> to vector<16x128xf32>
    %62 = arith.addf %60, %61 : vector<16x128xf32>
    %cst_42 = arith.constant 2.000000e-01 : f32
    %63 = vector.broadcast %cst_42 : f32 to vector<16x128xf32>
    %64 = arith.mulf %63, %62 : vector<16x128xf32>
    %65 = arith.maximumf %62, %64 : vector<16x128xf32>
    %c0_43 = arith.constant 0 : index
    %c0_44 = arith.constant 0 : index
    %66 = vector.load %arg17[%c0_43, %c0_44] : memref<128x256xbf16, #tpu.memory_space<vmem>>, vector<128x256xbf16>
    %c0_45 = arith.constant 0 : index
    %c0_46 = arith.constant 0 : index
    %67 = vector.load %arg18[%c0_45, %c0_46] : memref<1x256xf32, #tpu.memory_space<vmem>>, vector<1x256xf32>
    %68 = arith.truncf %65 : vector<16x128xf32> to vector<16x128xbf16>
    %cst_47 = arith.constant dense<0.000000e+00> : vector<16x256xf32>
    %69 = tpu.matmul %68, %66, %cst_47 {dimension_numbers = #tpu.dot_dimension_numbers<[1], [0], [0], [1], [0, 0, 1, 1], [], []>} : vector<16x128xbf16>, vector<128x256xbf16>, vector<16x256xf32> -> vector<16x256xf32>
    %70 = vector.broadcast %67 : vector<1x256xf32> to vector<16x256xf32>
    %71 = arith.addf %69, %70 : vector<16x256xf32>
    %cst_48 = arith.constant 2.000000e-01 : f32
    %72 = vector.broadcast %cst_48 : f32 to vector<16x256xf32>
    %73 = arith.mulf %72, %71 : vector<16x256xf32>
    %74 = arith.maximumf %71, %73 : vector<16x256xf32>
    %c0_49 = arith.constant 0 : index
    %c0_50 = arith.constant 0 : index
    %75 = vector.load %arg19[%c0_49, %c0_50] : memref<256x512xbf16, #tpu.memory_space<vmem>>, vector<256x512xbf16>
    %c0_51 = arith.constant 0 : index
    %c0_52 = arith.constant 0 : index
    %76 = vector.load %arg20[%c0_51, %c0_52] : memref<1x512xf32, #tpu.memory_space<vmem>>, vector<1x512xf32>
    %77 = arith.truncf %74 : vector<16x256xf32> to vector<16x256xbf16>
    %cst_53 = arith.constant dense<0.000000e+00> : vector<16x512xf32>
    %78 = tpu.matmul %77, %75, %cst_53 {dimension_numbers = #tpu.dot_dimension_numbers<[1], [0], [0], [1], [0, 0, 1, 1], [], []>} : vector<16x256xbf16>, vector<256x512xbf16>, vector<16x512xf32> -> vector<16x512xf32>
    %79 = vector.broadcast %76 : vector<1x512xf32> to vector<16x512xf32>
    %80 = arith.addf %78, %79 : vector<16x512xf32>
    %cst_54 = arith.constant 2.000000e-01 : f32
    %81 = vector.broadcast %cst_54 : f32 to vector<16x512xf32>
    %82 = arith.mulf %81, %80 : vector<16x512xf32>
    %83 = arith.maximumf %80, %82 : vector<16x512xf32>
    %c0_55 = arith.constant 0 : index
    %c0_56 = arith.constant 0 : index
    %84 = vector.load %arg21[%c0_55, %c0_56] : memref<512x256xbf16, #tpu.memory_space<vmem>>, vector<512x256xbf16>
    %c0_57 = arith.constant 0 : index
    %c0_58 = arith.constant 0 : index
    %85 = vector.load %arg22[%c0_57, %c0_58] : memref<1x256xf32, #tpu.memory_space<vmem>>, vector<1x256xf32>
    %86 = arith.truncf %83 : vector<16x512xf32> to vector<16x512xbf16>
    %cst_59 = arith.constant dense<0.000000e+00> : vector<16x256xf32>
    %87 = tpu.matmul %86, %84, %cst_59 {dimension_numbers = #tpu.dot_dimension_numbers<[1], [0], [0], [1], [0, 0, 1, 1], [], []>} : vector<16x512xbf16>, vector<512x256xbf16>, vector<16x256xf32> -> vector<16x256xf32>
    %88 = vector.broadcast %85 : vector<1x256xf32> to vector<16x256xf32>
    %89 = arith.addf %87, %88 : vector<16x256xf32>
    %cst_60 = arith.constant 2.000000e-01 : f32
    %90 = vector.broadcast %cst_60 : f32 to vector<16x256xf32>
    %91 = arith.mulf %90, %89 : vector<16x256xf32>
    %92 = arith.maximumf %89, %91 : vector<16x256xf32>
    %c0_61 = arith.constant 0 : index
    %c0_62 = arith.constant 0 : index
    %93 = vector.load %arg23[%c0_61, %c0_62] : memref<256x384xbf16, #tpu.memory_space<vmem>>, vector<256x384xbf16>
    %c0_63 = arith.constant 0 : index
    %c0_64 = arith.constant 0 : index
    %94 = vector.load %arg24[%c0_63, %c0_64] : memref<1x384xf32, #tpu.memory_space<vmem>>, vector<1x384xf32>
    %95 = arith.truncf %92 : vector<16x256xf32> to vector<16x256xbf16>
    %cst_65 = arith.constant dense<0.000000e+00> : vector<16x384xf32>
    %96 = tpu.matmul %95, %93, %cst_65 {dimension_numbers = #tpu.dot_dimension_numbers<[1], [0], [0], [1], [0, 0, 1, 1], [], []>} : vector<16x256xbf16>, vector<256x384xbf16>, vector<16x384xf32> -> vector<16x384xf32>
    %97 = vector.broadcast %94 : vector<1x384xf32> to vector<16x384xf32>
    %98 = arith.addf %96, %97 : vector<16x384xf32>
    %c0_66 = arith.constant 0 : index
    %c0_67 = arith.constant 0 : index
    %99 = vector.load %arg25[%c0_66, %c0_67] : memref<16x384xf32, #tpu.memory_space<vmem>>, vector<16x384xf32>
    tpu.vector_store %arg25[%c0_66, %c0_67], %98 {strides = array<i32>} : memref<16x384xf32, #tpu.memory_space<vmem>>, vector<16x384xf32>,
    %c0_68 = arith.constant 0 : index
    %c0_69 = arith.constant 0 : index
    %100 = vector.load %arg26[%c0_68, %c0_69] : memref<16x256xf32, #tpu.memory_space<vmem>>, vector<16x256xf32>
    tpu.vector_store %arg26[%c0_68, %c0_69], %51 {strides = array<i32>} : memref<16x256xf32, #tpu.memory_space<vmem>>, vector<16x256xf32>,
    return
  }
  func.func @transform_0(%arg0: i32) -> (i32, i32) {
    %c0_i32 = arith.constant 0 : i32
    %c0_i32_0 = arith.constant 0 : i32
    return %arg0, %c0_i32 : i32, i32
  }
  func.func @transform_1(%arg0: i32) -> (i32, i32) {
    %c0_i32 = arith.constant 0 : i32
    %c0_i32_0 = arith.constant 0 : i32
    return %arg0, %c0_i32 : i32, i32
  }
  func.func @transform_2(%arg0: i32) -> (i32, i32) {
    %c0_i32 = arith.constant 0 : i32
    %c0_i32_0 = arith.constant 0 : i32
    %c0_i32_1 = arith.constant 0 : i32
    return %c0_i32, %c0_i32_0 : i32, i32
  }
  func.func @transform_3(%arg0: i32) -> (i32, i32) {
    %c0_i32 = arith.constant 0 : i32
    %c0_i32_0 = arith.constant 0 : i32
    %c0_i32_1 = arith.constant 0 : i32
    return %c0_i32, %c0_i32_0 : i32, i32
  }
  func.func @transform_4(%arg0: i32) -> (i32, i32) {
    %c0_i32 = arith.constant 0 : i32
    %c0_i32_0 = arith.constant 0 : i32
    %c0_i32_1 = arith.constant 0 : i32
    return %c0_i32, %c0_i32_0 : i32, i32
  }
  func.func @transform_5(%arg0: i32) -> (i32, i32) {
    %c0_i32 = arith.constant 0 : i32
    %c0_i32_0 = arith.constant 0 : i32
    %c0_i32_1 = arith.constant 0 : i32
    return %c0_i32, %c0_i32_0 : i32, i32
  }
  func.func @transform_6(%arg0: i32) -> (i32, i32) {
    %c0_i32 = arith.constant 0 : i32
    %c0_i32_0 = arith.constant 0 : i32
    %c0_i32_1 = arith.constant 0 : i32
    return %c0_i32, %c0_i32_0 : i32, i32
  }
  func.func @transform_7(%arg0: i32) -> (i32, i32) {
    %c0_i32 = arith.constant 0 : i32
    %c0_i32_0 = arith.constant 0 : i32
    %c0_i32_1 = arith.constant 0 : i32
    return %c0_i32, %c0_i32_0 : i32, i32
  }
  func.func @transform_8(%arg0: i32) -> (i32, i32) {
    %c0_i32 = arith.constant 0 : i32
    %c0_i32_0 = arith.constant 0 : i32
    %c0_i32_1 = arith.constant 0 : i32
    return %c0_i32, %c0_i32_0 : i32, i32
  }
  func.func @transform_9(%arg0: i32) -> (i32, i32) {
    %c0_i32 = arith.constant 0 : i32
    %c0_i32_0 = arith.constant 0 : i32
    %c0_i32_1 = arith.constant 0 : i32
    return %c0_i32, %c0_i32_0 : i32, i32
  }
  func.func @transform_10(%arg0: i32) -> (i32, i32) {
    %c0_i32 = arith.constant 0 : i32
    %c0_i32_0 = arith.constant 0 : i32
    %c0_i32_1 = arith.constant 0 : i32
    return %c0_i32, %c0_i32_0 : i32, i32
  }
  func.func @transform_11(%arg0: i32) -> (i32, i32) {
    %c0_i32 = arith.constant 0 : i32
    %c0_i32_0 = arith.constant 0 : i32
    %c0_i32_1 = arith.constant 0 : i32
    return %c0_i32, %c0_i32_0 : i32, i32
  }
  func.func @transform_12(%arg0: i32) -> (i32, i32) {
    %c0_i32 = arith.constant 0 : i32
    %c0_i32_0 = arith.constant 0 : i32
    %c0_i32_1 = arith.constant 0 : i32
    return %c0_i32, %c0_i32_0 : i32, i32
  }
  func.func @transform_13(%arg0: i32) -> (i32, i32) {
    %c0_i32 = arith.constant 0 : i32
    %c0_i32_0 = arith.constant 0 : i32
    %c0_i32_1 = arith.constant 0 : i32
    return %c0_i32, %c0_i32_0 : i32, i32
  }
  func.func @transform_14(%arg0: i32) -> (i32, i32) {
    %c0_i32 = arith.constant 0 : i32
    %c0_i32_0 = arith.constant 0 : i32
    %c0_i32_1 = arith.constant 0 : i32
    return %c0_i32, %c0_i32_0 : i32, i32
  }
  func.func @transform_15(%arg0: i32) -> (i32, i32) {
    %c0_i32 = arith.constant 0 : i32
    %c0_i32_0 = arith.constant 0 : i32
    %c0_i32_1 = arith.constant 0 : i32
    return %c0_i32, %c0_i32_0 : i32, i32
  }
  func.func @transform_16(%arg0: i32) -> (i32, i32) {
    %c0_i32 = arith.constant 0 : i32
    %c0_i32_0 = arith.constant 0 : i32
    %c0_i32_1 = arith.constant 0 : i32
    return %c0_i32, %c0_i32_0 : i32, i32
  }
  func.func @transform_17(%arg0: i32) -> (i32, i32) {
    %c0_i32 = arith.constant 0 : i32
    %c0_i32_0 = arith.constant 0 : i32
    %c0_i32_1 = arith.constant 0 : i32
    return %c0_i32, %c0_i32_0 : i32, i32
  }
  func.func @transform_18(%arg0: i32) -> (i32, i32) {
    %c0_i32 = arith.constant 0 : i32
    %c0_i32_0 = arith.constant 0 : i32
    %c0_i32_1 = arith.constant 0 : i32
    return %c0_i32, %c0_i32_0 : i32, i32
  }
  func.func @transform_19(%arg0: i32) -> (i32, i32) {
    %c0_i32 = arith.constant 0 : i32
    %c0_i32_0 = arith.constant 0 : i32
    %c0_i32_1 = arith.constant 0 : i32
    return %c0_i32, %c0_i32_0 : i32, i32
  }
  func.func @transform_20(%arg0: i32) -> (i32, i32) {
    %c0_i32 = arith.constant 0 : i32
    %c0_i32_0 = arith.constant 0 : i32
    %c0_i32_1 = arith.constant 0 : i32
    return %c0_i32, %c0_i32_0 : i32, i32
  }
  func.func @transform_21(%arg0: i32) -> (i32, i32) {
    %c0_i32 = arith.constant 0 : i32
    %c0_i32_0 = arith.constant 0 : i32
    %c0_i32_1 = arith.constant 0 : i32
    return %c0_i32, %c0_i32_0 : i32, i32
  }
  func.func @transform_22(%arg0: i32) -> (i32, i32) {
    %c0_i32 = arith.constant 0 : i32
    %c0_i32_0 = arith.constant 0 : i32
    %c0_i32_1 = arith.constant 0 : i32
    return %c0_i32, %c0_i32_0 : i32, i32
  }
  func.func @transform_23(%arg0: i32) -> (i32, i32) {
    %c0_i32 = arith.constant 0 : i32
    %c0_i32_0 = arith.constant 0 : i32
    %c0_i32_1 = arith.constant 0 : i32
    return %c0_i32, %c0_i32_0 : i32, i32
  }
  func.func @transform_24(%arg0: i32) -> (i32, i32) {
    %c0_i32 = arith.constant 0 : i32
    %c0_i32_0 = arith.constant 0 : i32
    return %arg0, %c0_i32 : i32, i32
  }
  func.func @transform_25(%arg0: i32) -> (i32, i32) {
    %c0_i32 = arith.constant 0 : i32
    %c0_i32_0 = arith.constant 0 : i32
    return %arg0, %c0_i32 : i32, i32
  }
}

</mosaic_0001>

<llo_original>
// kernel: tpu_custom_call.1
$region0: #{tpu_custom_call.1}
  #allocation0 [shape = 'u32[]', space=smem, size = 0x4, offset = 0x4, fixed_abs, tag = 'smem constant byte address 0x4 - core index']
  #allocation1 [shape = 'u32[72,128]{1,0:T(1,128)}', space=vmem, size = 0x9000, scoped, tag = 'internal scratch']
  %s0 = inlined_call_operand.hbm [shape: f32[32,384], index: 0, kind: input, shape index: {}]
  %s1 = inlined_call_operand.hbm [shape: f32[32,32], index: 1, kind: input, shape index: {}]
  %s2 = inlined_call_operand.hbm [shape: bf16[384,256], index: 2, kind: input, shape index: {}]
  %s3 = inlined_call_operand.hbm [shape: f32[1,256], index: 3, kind: input, shape index: {}]
  %s4 = inlined_call_operand.hbm [shape: bf16[256,512], index: 4, kind: input, shape index: {}]
  %s5 = inlined_call_operand.vmem [shape: f32[1,512], index: 5, kind: input, shape index: {}]
  %s6 = inlined_call_operand.hbm [shape: bf16[512,512], index: 6, kind: input, shape index: {}]
  %s7 = inlined_call_operand.hbm [shape: f32[1,512], index: 7, kind: input, shape index: {}]
  %s8 = inlined_call_operand.hbm [shape: bf16[512,256], index: 8, kind: input, shape index: {}]
  %s9 = inlined_call_operand.hbm [shape: f32[1,256], index: 9, kind: input, shape index: {}]
  %s10 = inlined_call_operand.hbm [shape: bf16[256,128], index: 10, kind: input, shape index: {}]
  %s11 = inlined_call_operand.hbm [shape: f32[1,128], index: 11, kind: input, shape index: {}]
  %s12 = inlined_call_operand.hbm [shape: bf16[128,256], index: 12, kind: input, shape index: {}]
  %s13 = inlined_call_operand.hbm [shape: f32[1,256], index: 13, kind: input, shape index: {}]
  %s14 = inlined_call_operand.hbm [shape: bf16[32,128], index: 14, kind: input, shape index: {}]
  %s15 = inlined_call_operand.hbm [shape: f32[1,128], index: 15, kind: input, shape index: {}]
  %s16 = inlined_call_operand.hbm [shape: bf16[128,256], index: 16, kind: input, shape index: {}]
  %s17 = inlined_call_operand.vmem [shape: f32[1,256], index: 17, kind: input, shape index: {}]
  %s18 = inlined_call_operand.hbm [shape: bf16[256,512], index: 18, kind: input, shape index: {}]
  %s19 = inlined_call_operand.vmem [shape: f32[1,512], index: 19, kind: input, shape index: {}]
  %s20 = inlined_call_operand.hbm [shape: bf16[512,256], index: 20, kind: input, shape index: {}]
  %s21 = inlined_call_operand.vmem [shape: f32[1,256], index: 21, kind: input, shape index: {}]
  %s22 = inlined_call_operand.hbm [shape: bf16[256,384], index: 22, kind: input, shape index: {}]
  %s23 = inlined_call_operand.vmem [shape: f32[1,384], index: 23, kind: input, shape index: {}]
  %s24 = inlined_call_operand.hbm [shape: f32[32,384], index: 24, kind: output, shape index: {0}]
  %s25 = inlined_call_operand.hbm [shape: f32[32,256], index: 25, kind: output, shape index: {1}]
  %26 = xla_tuple %s24, %s25
  %s27 = sld [smem:[#allocation0]]
  $region213: #{tpu_custom_call.1} parent=0
    _
  %s29 = ssub.s32 1, %s27
  %s30 = scalar_select 0, %s29, %s27
  $region1: #{tpu_custom_call.1} parent=0
    #allocation2 [shape = 'u8[49152]{0}', space=vmem, size = 0xc000, scoped, tag = 'input window, operand 0']
    #allocation3 [shape = 's32[2]{0}', space=sflag, size = 0x8, scoped, tag = 'scoped memory for tpu_custom_call.1']
    #allocation4 [shape = 's32[2]{0}', space=sflag, size = 0x8, scoped, tag = 'scoped memory for tpu_custom_call.1']
    #allocation5 [shape = 'u8[16384]{0}', space=vmem, size = 0x4000, scoped, tag = 'input window, operand 1']
    #allocation6 [shape = 's32[2]{0}', space=sflag, size = 0x8, scoped, tag = 'scoped memory for tpu_custom_call.1']
    #allocation7 [shape = 'u8[196608]{0}', space=vmem, size = 0x30000, scoped, tag = 'input window, operand 2, single buffered']
    #allocation8 [shape = 'u8[1024]{0}', space=vmem, size = 0x400, scoped, tag = 'input window, operand 3, single buffered']
    #allocation9 [shape = 's32[1]{0}', space=sflag, size = 0x4, scoped, tag = 'scoped memory for tpu_custom_call.1']
    #allocation10 [shape = 'u8[262144]{0}', space=vmem, size = 0x40000, scoped, tag = 'input window, operand 4, single buffered']
    #allocation11 [shape = 'u8[524288]{0}', space=vmem, size = 0x80000, scoped, tag = 'input window, operand 6, single buffered']
    #allocation12 [shape = 's32[1]{0}', space=sflag, size = 0x4, scoped, tag = 'scoped memory for tpu_custom_call.1']
    #allocation13 [shape = 'u8[2048]{0}', space=vmem, size = 0x800, scoped, tag = 'input window, operand 7, single buffered']
    #allocation14 [shape = 'u8[262144]{0}', space=vmem, size = 0x40000, scoped, tag = 'input window, operand 8, single buffered']
    #allocation15 [shape = 's32[1]{0}', space=sflag, size = 0x4, scoped, tag = 'scoped memory for tpu_custom_call.1']
    #allocation16 [shape = 'u8[1024]{0}', space=vmem, size = 0x400, scoped, tag = 'input window, operand 9, single buffered']
    #allocation17 [shape = 'u8[65536]{0}', space=vmem, size = 0x10000, scoped, tag = 'input window, operand 10, single buffered']
    #allocation18 [shape = 's32[1]{0}', space=sflag, size = 0x4, scoped, tag = 'scoped memory for tpu_custom_call.1']
    #allocation19 [shape = 'u8[512]{0}', space=vmem, size = 0x400, scoped, tag = 'input window, operand 11, single buffered']
    #allocation20 [shape = 'u8[65536]{0}', space=vmem, size = 0x10000, scoped, tag = 'input window, operand 12, single buffered']
    #allocation21 [shape = 's32[1]{0}', space=sflag, size = 0x4, scoped, tag = 'scoped memory for tpu_custom_call.1']
    #allocation22 [shape = 'u8[1024]{0}', space=vmem, size = 0x400, scoped, tag = 'input window, operand 13, single buffered']
    #allocation23 [shape = 'u8[8192]{0}', space=vmem, size = 0x2000, scoped, tag = 'input window, operand 14, single buffered']
    #allocation24 [shape = 's32[1]{0}', space=sflag, size = 0x4, scoped, tag = 'scoped memory for tpu_custom_call.1']
    #allocation25 [shape = 'u8[512]{0}', space=vmem, size = 0x400, scoped, tag = 'input window, operand 15, single buffered']
    #allocation26 [shape = 'u8[65536]{0}', space=vmem, size = 0x10000, scoped, tag = 'input window, operand 16, single buffered']
    #allocation27 [shape = 's32[1]{0}', space=sflag, size = 0x4, scoped, tag = 'scoped memory for tpu_custom_call.1']
    #allocation28 [shape = 'u8[262144]{0}', space=vmem, size = 0x40000, scoped, tag = 'input window, operand 18, single buffered']
    #allocation29 [shape = 'u8[262144]{0}', space=vmem, size = 0x40000, scoped, tag = 'input window, operand 20, single buffered']
    #allocation30 [shape = 's32[1]{0}', space=sflag, size = 0x4, scoped, tag = 'scoped memory for tpu_custom_call.1']
    #allocation31 [shape = 'u8[196608]{0}', space=vmem, size = 0x30000, scoped, tag = 'input window, operand 22, single buffered']
    #allocation32 [shape = 'u8[49152]{0}', space=vmem, size = 0xc000, scoped, tag = 'output window, operand 0']
    #allocation33 [shape = 'u8[32768]{0}', space=vmem, size = 0x8000, scoped, tag = 'output window, operand 1']
    #allocation34 [shape = 's32[2]{0}', space=sflag, size = 0x8, scoped, tag = 'scoped memory for tpu_custom_call.1']
    %31 = vsyncpa [#allocation3], 0
    %s32 = scalar_lea.sflag [#allocation3], 1
    %33 = vsyncpa %s32, 0
    %34 = vsyncpa [#allocation6], 0
    %s35 = scalar_lea.sflag [#allocation6], 1
    %36 = vsyncpa %s35, 0
    %37 = vsyncpa [#allocation9], 0
    %38 = vsyncpa [#allocation12], 0
    %39 = vsyncpa [#allocation15], 0
    %40 = vsyncpa [#allocation18], 0
    %41 = vsyncpa [#allocation21], 0
    %42 = vsyncpa [#allocation24], 0
    %43 = vsyncpa [#allocation27], 0
    %44 = vsyncpa [#allocation30], 0
    %45 = vsyncpa [#allocation4], 0
    %s46 = scalar_lea.sflag [#allocation4], 1
    %47 = vsyncpa %s46, 0
    %48 = vsyncpa [#allocation34], 0
    %s49 = scalar_lea.sflag [#allocation34], 1
    %50 = vsyncpa %s49, 0
    loop: start=0, step=1, limit=4
    $region2: #{tpu_custom_call.1} parent=1 // loop_pre_header
      _
    $region3: #{tpu_custom_call.1} parent=1 // loop_header
      %s52 = sphi 0, %s56
      %p53 = scmp.ge.s32.totalorder %s52, 4
      %s62 = sphi 0, %s64
      %s65 = sphi 0, %s62
      %s66 = sphi 0, %s65
      %s82 = sphi 0, %s66
      %s88 = sphi 0, %s90
      %s91 = sphi 0, %s88
      %s92 = sphi 0, %s91
      %s108 = sphi 0, %s92
      %s112 = sphi 0, %s112
      %s114 = sphi 0, %s112
      %s115 = sphi 0, %s114
      %s129 = sphi 0, %s115
      %s133 = sphi 0, %s133
      %s135 = sphi 0, %s133
      %s136 = sphi 0, %s135
      %s150 = sphi 0, %s136
      %s154 = sphi 0, %s154
      %s156 = sphi 0, %s154
      %s157 = sphi 0, %s156
      %s171 = sphi 0, %s157
      %s175 = sphi 0, %s175
      %s177 = sphi 0, %s175
      %s178 = sphi 0, %s177
      %s192 = sphi 0, %s178
      %s196 = sphi 0, %s196
      %s198 = sphi 0, %s196
      %s199 = sphi 0, %s198
      %s213 = sphi 0, %s199
      %s217 = sphi 0, %s217
      %s219 = sphi 0, %s217
      %s220 = sphi 0, %s219
      %s234 = sphi 0, %s220
      %s238 = sphi 0, %s238
      %s240 = sphi 0, %s238
      %s241 = sphi 0, %s240
      %s255 = sphi 0, %s241
      %s259 = sphi 0, %s259
      %s261 = sphi 0, %s259
      %s262 = sphi 0, %s261
      %s276 = sphi 0, %s262
      %s280 = sphi 0, %s280
      %s282 = sphi 0, %s280
      %s283 = sphi 0, %s282
      %s297 = sphi 0, %s283
      %s301 = sphi 0, %s301
      %s303 = sphi 0, %s301
      %s304 = sphi 0, %s303
      %s318 = sphi 0, %s304
      %s322 = sphi 0, %s322
      %s324 = sphi 0, %s322
      %s325 = sphi 0, %s324
      %s339 = sphi 0, %s325
      %s343 = sphi 0, %s343
      %s345 = sphi 0, %s343
      %s346 = sphi 0, %s345
      %s360 = sphi 0, %s346
      %s364 = sphi 0, %s364
      %s366 = sphi 0, %s364
      %s367 = sphi 0, %s366
      %s381 = sphi 0, %s367
      %s385 = sphi 0, %s385
      %s387 = sphi 0, %s385
      %s388 = sphi 0, %s387
      %s402 = sphi 0, %s388
      %s406 = sphi 0, %s406
      %s408 = sphi 0, %s406
      %s409 = sphi 0, %s408
      %s423 = sphi 0, %s409
      %s427 = sphi 0, %s427
      %s429 = sphi 0, %s427
      %s430 = sphi 0, %s429
      %s444 = sphi 0, %s430
      %s448 = sphi 0, %s448
      %s450 = sphi 0, %s448
      %s451 = sphi 0, %s450
      %s465 = sphi 0, %s451
      %s469 = sphi 0, %s469
      %s471 = sphi 0, %s469
      %s472 = sphi 0, %s471
      %s486 = sphi 0, %s472
      %s490 = sphi 0, %s490
      %s492 = sphi 0, %s490
      %s493 = sphi 0, %s492
      %s507 = sphi 0, %s493
      %s511 = sphi 0, %s511
      %s513 = sphi 0, %s511
      %s514 = sphi 0, %s513
      %s528 = sphi 0, %s514
      %s532 = sphi 0, %s532
      %s534 = sphi 0, %s532
      %s535 = sphi 0, %s534
      %s549 = sphi 0, %s535
      %s553 = sphi 0, %s553
      %s555 = sphi 0, %s553
      %s556 = sphi 0, %s555
      %s570 = sphi 0, %s556
      %s576 = sphi 0, %s578
      %s579 = sphi 0, %s576
      %s580 = sphi 0, %s579
      %s596 = sphi 0, %s580
      %s602 = sphi 0, %s604
      %s605 = sphi 0, %s602
      %s606 = sphi 0, %s605
      %s622 = sphi 0, %s606
    $region4: #{tpu_custom_call.1} parent=1 // loop_header_branch
      %55 = sbr.rel (%p53) target = $region8
    $region5: #{tpu_custom_call.1} parent=1 // loop_body
      %s57 = ssub.s32 %s52, 1
      %s58 = ssub.s32 %s52, 2
      %s59 = sadd.s32 %s52, 1
      %s60 = ssub.s32 %s52, %s59
      %p61 = scmp.eq.s32.totalorder %s60, 0
      %s63 = sadd.s32 %s62, 1
      %s64 = scalar_select %p61, %s62, %s63
      %p67 = pneg %p61
      %p68 = scmp.eq.s32.totalorder %s52, 1
      %p69 = por %p67, %p68
      %p70 = scmp.ne.s32.totalorder %s62, %s65
      %p71 = scmp.eq.s32.totalorder %s52, 0
      %p72 = por %p70, %p71
      %p73 = scmp.ne.s32.totalorder %s62, %s65
      %p74 = scmp.eq.s32.totalorder %s57, 1
      %p75 = por %p73, %p74
      %p76 = scmp.ne.s32.totalorder %s65, %s66
      %p77 = scmp.eq.s32.totalorder %s57, 0
      %p78 = por %p76, %p77
      %p79 = scmp.ne.s32.totalorder %s65, %s66
      %p80 = scmp.eq.s32.totalorder %s58, 1
      %p81 = por %p79, %p80
      %p83 = scmp.ne.s32.totalorder %s66, %s82
      %p84 = scmp.eq.s32.totalorder %s58, 0
      %p85 = por %p83, %p84
      %s86 = ssub.s32 %s52, %s59
      %p87 = scmp.eq.s32.totalorder %s86, 0
      %s89 = sadd.s32 %s88, 1
      %s90 = scalar_select %p87, %s88, %s89
      %p93 = pneg %p87
      %p94 = scmp.eq.s32.totalorder %s52, 1
      %p95 = por %p93, %p94
      %p96 = scmp.ne.s32.totalorder %s88, %s91
      %p97 = scmp.eq.s32.totalorder %s52, 0
      %p98 = por %p96, %p97
      %p99 = scmp.ne.s32.totalorder %s88, %s91
      %p100 = scmp.eq.s32.totalorder %s57, 1
      %p101 = por %p99, %p100
      %p102 = scmp.ne.s32.totalorder %s91, %s92
      %p103 = scmp.eq.s32.totalorder %s57, 0
      %p104 = por %p102, %p103
      %p105 = scmp.ne.s32.totalorder %s91, %s92
      %p106 = scmp.eq.s32.totalorder %s58, 1
      %p107 = por %p105, %p106
      %p109 = scmp.ne.s32.totalorder %s92, %s108
      %p110 = scmp.eq.s32.totalorder %s58, 0
      %p111 = por %p109, %p110
      %s113 = sadd.s32 %s112, 1
      %p116 = scmp.eq.s32.totalorder %s52, 1
      %p117 = scmp.ne.s32.totalorder %s112, %s114
      %p118 = scmp.eq.s32.totalorder %s52, 0
      %p119 = por %p117, %p118
      %p120 = scmp.ne.s32.totalorder %s112, %s114
      %p121 = scmp.eq.s32.totalorder %s57, 1
      %p122 = por %p120, %p121
      %p123 = scmp.ne.s32.totalorder %s114, %s115
      %p124 = scmp.eq.s32.totalorder %s57, 0
      %p125 = por %p123, %p124
      %p126 = scmp.ne.s32.totalorder %s114, %s115
      %p127 = scmp.eq.s32.totalorder %s58, 1
      %p128 = por %p126, %p127
      %p130 = scmp.ne.s32.totalorder %s115, %s129
      %p131 = scmp.eq.s32.totalorder %s58, 0
      %p132 = por %p130, %p131
      %s134 = sadd.s32 %s133, 1
      %p137 = scmp.eq.s32.totalorder %s52, 1
      %p138 = scmp.ne.s32.totalorder %s133, %s135
      %p139 = scmp.eq.s32.totalorder %s52, 0
      %p140 = por %p138, %p139
      %p141 = scmp.ne.s32.totalorder %s133, %s135
      %p142 = scmp.eq.s32.totalorder %s57, 1
      %p143 = por %p141, %p142
      %p144 = scmp.ne.s32.totalorder %s135, %s136
      %p145 = scmp.eq.s32.totalorder %s57, 0
      %p146 = por %p144, %p145
      %p147 = scmp.ne.s32.totalorder %s135, %s136
      %p148 = scmp.eq.s32.totalorder %s58, 1
      %p149 = por %p147, %p148
      %p151 = scmp.ne.s32.totalorder %s136, %s150
      %p152 = scmp.eq.s32.totalorder %s58, 0
      %p153 = por %p151, %p152
      %s155 = sadd.s32 %s154, 1
      %p158 = scmp.eq.s32.totalorder %s52, 1
      %p159 = scmp.ne.s32.totalorder %s154, %s156
      %p160 = scmp.eq.s32.totalorder %s52, 0
      %p161 = por %p159, %p160
      %p162 = scmp.ne.s32.totalorder %s154, %s156
      %p163 = scmp.eq.s32.totalorder %s57, 1
      %p164 = por %p162, %p163
      %p165 = scmp.ne.s32.totalorder %s156, %s157
      %p166 = scmp.eq.s32.totalorder %s57, 0
      %p167 = por %p165, %p166
      %p168 = scmp.ne.s32.totalorder %s156, %s157
      %p169 = scmp.eq.s32.totalorder %s58, 1
      %p170 = por %p168, %p169
      %p172 = scmp.ne.s32.totalorder %s157, %s171
      %p173 = scmp.eq.s32.totalorder %s58, 0
      %p174 = por %p172, %p173
      %s176 = sadd.s32 %s175, 1
      %p179 = scmp.eq.s32.totalorder %s52, 1
      %p180 = scmp.ne.s32.totalorder %s175, %s177
      %p181 = scmp.eq.s32.totalorder %s52, 0
      %p182 = por %p180, %p181
      %p183 = scmp.ne.s32.totalorder %s175, %s177
      %p184 = scmp.eq.s32.totalorder %s57, 1
      %p185 = por %p183, %p184
      %p186 = scmp.ne.s32.totalorder %s177, %s178
      %p187 = scmp.eq.s32.totalorder %s57, 0
      %p188 = por %p186, %p187
      %p189 = scmp.ne.s32.totalorder %s177, %s178
      %p190 = scmp.eq.s32.totalorder %s58, 1
      %p191 = por %p189, %p190
      %p193 = scmp.ne.s32.totalorder %s178, %s192
      %p194 = scmp.eq.s32.totalorder %s58, 0
      %p195 = por %p193, %p194
      %s197 = sadd.s32 %s196, 1
      %p200 = scmp.eq.s32.totalorder %s52, 1
      %p201 = scmp.ne.s32.totalorder %s196, %s198
      %p202 = scmp.eq.s32.totalorder %s52, 0
      %p203 = por %p201, %p202
      %p204 = scmp.ne.s32.totalorder %s196, %s198
      %p205 = scmp.eq.s32.totalorder %s57, 1
      %p206 = por %p204, %p205
      %p207 = scmp.ne.s32.totalorder %s198, %s199
      %p208 = scmp.eq.s32.totalorder %s57, 0
      %p209 = por %p207, %p208
      %p210 = scmp.ne.s32.totalorder %s198, %s199
      %p211 = scmp.eq.s32.totalorder %s58, 1
      %p212 = por %p210, %p211
      %p214 = scmp.ne.s32.totalorder %s199, %s213
      %p215 = scmp.eq.s32.totalorder %s58, 0
      %p216 = por %p214, %p215
      %s218 = sadd.s32 %s217, 1
      %p221 = scmp.eq.s32.totalorder %s52, 1
      %p222 = scmp.ne.s32.totalorder %s217, %s219
      %p223 = scmp.eq.s32.totalorder %s52, 0
      %p224 = por %p222, %p223
      %p225 = scmp.ne.s32.totalorder %s217, %s219
      %p226 = scmp.eq.s32.totalorder %s57, 1
      %p227 = por %p225, %p226
      %p228 = scmp.ne.s32.totalorder %s219, %s220
      %p229 = scmp.eq.s32.totalorder %s57, 0
      %p230 = por %p228, %p229
      %p231 = scmp.ne.s32.totalorder %s219, %s220
      %p232 = scmp.eq.s32.totalorder %s58, 1
      %p233 = por %p231, %p232
      %p235 = scmp.ne.s32.totalorder %s220, %s234
      %p236 = scmp.eq.s32.totalorder %s58, 0
      %p237 = por %p235, %p236
      %s239 = sadd.s32 %s238, 1
      %p242 = scmp.eq.s32.totalorder %s52, 1
      %p243 = scmp.ne.s32.totalorder %s238, %s240
      %p244 = scmp.eq.s32.totalorder %s52, 0
      %p245 = por %p243, %p244
      %p246 = scmp.ne.s32.totalorder %s238, %s240
      %p247 = scmp.eq.s32.totalorder %s57, 1
      %p248 = por %p246, %p247
      %p249 = scmp.ne.s32.totalorder %s240, %s241
      %p250 = scmp.eq.s32.totalorder %s57, 0
      %p251 = por %p249, %p250
      %p252 = scmp.ne.s32.totalorder %s240, %s241
      %p253 = scmp.eq.s32.totalorder %s58, 1
      %p254 = por %p252, %p253
      %p256 = scmp.ne.s32.totalorder %s241, %s255
      %p257 = scmp.eq.s32.totalorder %s58, 0
      %p258 = por %p256, %p257
      %s260 = sadd.s32 %s259, 1
      %p263 = scmp.eq.s32.totalorder %s52, 1
      %p264 = scmp.ne.s32.totalorder %s259, %s261
      %p265 = scmp.eq.s32.totalorder %s52, 0
      %p266 = por %p264, %p265
      %p267 = scmp.ne.s32.totalorder %s259, %s261
      %p268 = scmp.eq.s32.totalorder %s57, 1
      %p269 = por %p267, %p268
      %p270 = scmp.ne.s32.totalorder %s261, %s262
      %p271 = scmp.eq.s32.totalorder %s57, 0
      %p272 = por %p270, %p271
      %p273 = scmp.ne.s32.totalorder %s261, %s262
      %p274 = scmp.eq.s32.totalorder %s58, 1
      %p275 = por %p273, %p274
      %p277 = scmp.ne.s32.totalorder %s262, %s276
      %p278 = scmp.eq.s32.totalorder %s58, 0
      %p279 = por %p277, %p278
      %s281 = sadd.s32 %s280, 1
      %p284 = scmp.eq.s32.totalorder %s52, 1
      %p285 = scmp.ne.s32.totalorder %s280, %s282
      %p286 = scmp.eq.s32.totalorder %s52, 0
      %p287 = por %p285, %p286
      %p288 = scmp.ne.s32.totalorder %s280, %s282
      %p289 = scmp.eq.s32.totalorder %s57, 1
      %p290 = por %p288, %p289
      %p291 = scmp.ne.s32.totalorder %s282, %s283
      %p292 = scmp.eq.s32.totalorder %s57, 0
      %p293 = por %p291, %p292
      %p294 = scmp.ne.s32.totalorder %s282, %s283
      %p295 = scmp.eq.s32.totalorder %s58, 1
      %p296 = por %p294, %p295
      %p298 = scmp.ne.s32.totalorder %s283, %s297
      %p299 = scmp.eq.s32.totalorder %s58, 0
      %p300 = por %p298, %p299
      %s302 = sadd.s32 %s301, 1
      %p305 = scmp.eq.s32.totalorder %s52, 1
      %p306 = scmp.ne.s32.totalorder %s301, %s303
      %p307 = scmp.eq.s32.totalorder %s52, 0
      %p308 = por %p306, %p307
      %p309 = scmp.ne.s32.totalorder %s301, %s303
      %p310 = scmp.eq.s32.totalorder %s57, 1
      %p311 = por %p309, %p310
      %p312 = scmp.ne.s32.totalorder %s303, %s304
      %p313 = scmp.eq.s32.totalorder %s57, 0
      %p314 = por %p312, %p313
      %p315 = scmp.ne.s32.totalorder %s303, %s304
      %p316 = scmp.eq.s32.totalorder %s58, 1
      %p317 = por %p315, %p316
      %p319 = scmp.ne.s32.totalorder %s304, %s318
      %p320 = scmp.eq.s32.totalorder %s58, 0
      %p321 = por %p319, %p320
      %s323 = sadd.s32 %s322, 1
      %p326 = scmp.eq.s32.totalorder %s52, 1
      %p327 = scmp.ne.s32.totalorder %s322, %s324
      %p328 = scmp.eq.s32.totalorder %s52, 0
      %p329 = por %p327, %p328
      %p330 = scmp.ne.s32.totalorder %s322, %s324
      %p331 = scmp.eq.s32.totalorder %s57, 1
      %p332 = por %p330, %p331
      %p333 = scmp.ne.s32.totalorder %s324, %s325
      %p334 = scmp.eq.s32.totalorder %s57, 0
      %p335 = por %p333, %p334
      %p336 = scmp.ne.s32.totalorder %s324, %s325
      %p337 = scmp.eq.s32.totalorder %s58, 1
      %p338 = por %p336, %p337
      %p340 = scmp.ne.s32.totalorder %s325, %s339
      %p341 = scmp.eq.s32.totalorder %s58, 0
      %p342 = por %p340, %p341
      %s344 = sadd.s32 %s343, 1
      %p347 = scmp.eq.s32.totalorder %s52, 1
      %p348 = scmp.ne.s32.totalorder %s343, %s345
      %p349 = scmp.eq.s32.totalorder %s52, 0
      %p350 = por %p348, %p349
      %p351 = scmp.ne.s32.totalorder %s343, %s345
      %p352 = scmp.eq.s32.totalorder %s57, 1
      %p353 = por %p351, %p352
      %p354 = scmp.ne.s32.totalorder %s345, %s346
      %p355 = scmp.eq.s32.totalorder %s57, 0
      %p356 = por %p354, %p355
      %p357 = scmp.ne.s32.totalorder %s345, %s346
      %p358 = scmp.eq.s32.totalorder %s58, 1
      %p359 = por %p357, %p358
      %p361 = scmp.ne.s32.totalorder %s346, %s360
      %p362 = scmp.eq.s32.totalorder %s58, 0
      %p363 = por %p361, %p362
      %s365 = sadd.s32 %s364, 1
      %p368 = scmp.eq.s32.totalorder %s52, 1
      %p369 = scmp.ne.s32.totalorder %s364, %s366
      %p370 = scmp.eq.s32.totalorder %s52, 0
      %p371 = por %p369, %p370
      %p372 = scmp.ne.s32.totalorder %s364, %s366
      %p373 = scmp.eq.s32.totalorder %s57, 1
      %p374 = por %p372, %p373
      %p375 = scmp.ne.s32.totalorder %s366, %s367
      %p376 = scmp.eq.s32.totalorder %s57, 0
      %p377 = por %p375, %p376
      %p378 = scmp.ne.s32.totalorder %s366, %s367
      %p379 = scmp.eq.s32.totalorder %s58, 1
      %p380 = por %p378, %p379
      %p382 = scmp.ne.s32.totalorder %s367, %s381
      %p383 = scmp.eq.s32.totalorder %s58, 0
      %p384 = por %p382, %p383
      %s386 = sadd.s32 %s385, 1
      %p389 = scmp.eq.s32.totalorder %s52, 1
      %p390 = scmp.ne.s32.totalorder %s385, %s387
      %p391 = scmp.eq.s32.totalorder %s52, 0
      %p392 = por %p390, %p391
      %p393 = scmp.ne.s32.totalorder %s385, %s387
      %p394 = scmp.eq.s32.totalorder %s57, 1
      %p395 = por %p393, %p394
      %p396 = scmp.ne.s32.totalorder %s387, %s388
      %p397 = scmp.eq.s32.totalorder %s57, 0
      %p398 = por %p396, %p397
      %p399 = scmp.ne.s32.totalorder %s387, %s388
      %p400 = scmp.eq.s32.totalorder %s58, 1
      %p401 = por %p399, %p400
      %p403 = scmp.ne.s32.totalorder %s388, %s402
      %p404 = scmp.eq.s32.totalorder %s58, 0
      %p405 = por %p403, %p404
      %s407 = sadd.s32 %s406, 1
      %p410 = scmp.eq.s32.totalorder %s52, 1
      %p411 = scmp.ne.s32.totalorder %s406, %s408
      %p412 = scmp.eq.s32.totalorder %s52, 0
      %p413 = por %p411, %p412
      %p414 = scmp.ne.s32.totalorder %s406, %s408
      %p415 = scmp.eq.s32.totalorder %s57, 1
      %p416 = por %p414, %p415
      %p417 = scmp.ne.s32.totalorder %s408, %s409
      %p418 = scmp.eq.s32.totalorder %s57, 0
      %p419 = por %p417, %p418
      %p420 = scmp.ne.s32.totalorder %s408, %s409
      %p421 = scmp.eq.s32.totalorder %s58, 1
      %p422 = por %p420, %p421
      %p424 = scmp.ne.s32.totalorder %s409, %s423
      %p425 = scmp.eq.s32.totalorder %s58, 0
      %p426 = por %p424, %p425
      %s428 = sadd.s32 %s427, 1
      %p431 = scmp.eq.s32.totalorder %s52, 1
      %p432 = scmp.ne.s32.totalorder %s427, %s429
      %p433 = scmp.eq.s32.totalorder %s52, 0
      %p434 = por %p432, %p433
      %p435 = scmp.ne.s32.totalorder %s427, %s429
      %p436 = scmp.eq.s32.totalorder %s57, 1
      %p437 = por %p435, %p436
      %p438 = scmp.ne.s32.totalorder %s429, %s430
      %p439 = scmp.eq.s32.totalorder %s57, 0
      %p440 = por %p438, %p439
      %p441 = scmp.ne.s32.totalorder %s429, %s430
      %p442 = scmp.eq.s32.totalorder %s58, 1
      %p443 = por %p441, %p442
      %p445 = scmp.ne.s32.totalorder %s430, %s444
      %p446 = scmp.eq.s32.totalorder %s58, 0
      %p447 = por %p445, %p446
      %s449 = sadd.s32 %s448, 1
      %p452 = scmp.eq.s32.totalorder %s52, 1
      %p453 = scmp.ne.s32.totalorder %s448, %s450
      %p454 = scmp.eq.s32.totalorder %s52, 0
      %p455 = por %p453, %p454
      %p456 = scmp.ne.s32.totalorder %s448, %s450
      %p457 = scmp.eq.s32.totalorder %s57, 1
      %p458 = por %p456, %p457
      %p459 = scmp.ne.s32.totalorder %s450, %s451
      %p460 = scmp.eq.s32.totalorder %s57, 0
      %p461 = por %p459, %p460
      %p462 = scmp.ne.s32.totalorder %s450, %s451
      %p463 = scmp.eq.s32.totalorder %s58, 1
      %p464 = por %p462, %p463
      %p466 = scmp.ne.s32.totalorder %s451, %s465
      %p467 = scmp.eq.s32.totalorder %s58, 0
      %p468 = por %p466, %p467
      %s470 = sadd.s32 %s469, 1
      %p473 = scmp.eq.s32.totalorder %s52, 1
      %p474 = scmp.ne.s32.totalorder %s469, %s471
      %p475 = scmp.eq.s32.totalorder %s52, 0
      %p476 = por %p474, %p475
      %p477 = scmp.ne.s32.totalorder %s469, %s471
      %p478 = scmp.eq.s32.totalorder %s57, 1
      %p479 = por %p477, %p478
      %p480 = scmp.ne.s32.totalorder %s471, %s472
      %p481 = scmp.eq.s32.totalorder %s57, 0
      %p482 = por %p480, %p481
      %p483 = scmp.ne.s32.totalorder %s471, %s472
      %p484 = scmp.eq.s32.totalorder %s58, 1
      %p485 = por %p483, %p484
      %p487 = scmp.ne.s32.totalorder %s472, %s486
      %p488 = scmp.eq.s32.totalorder %s58, 0
      %p489 = por %p487, %p488
      %s491 = sadd.s32 %s490, 1
      %p494 = scmp.eq.s32.totalorder %s52, 1
      %p495 = scmp.ne.s32.totalorder %s490, %s492
      %p496 = scmp.eq.s32.totalorder %s52, 0
      %p497 = por %p495, %p496
      %p498 = scmp.ne.s32.totalorder %s490, %s492
      %p499 = scmp.eq.s32.totalorder %s57, 1
      %p500 = por %p498, %p499
      %p501 = scmp.ne.s32.totalorder %s492, %s493
      %p502 = scmp.eq.s32.totalorder %s57, 0
      %p503 = por %p501, %p502
      %p504 = scmp.ne.s32.totalorder %s492, %s493
      %p505 = scmp.eq.s32.totalorder %s58, 1
      %p506 = por %p504, %p505
      %p508 = scmp.ne.s32.totalorder %s493, %s507
      %p509 = scmp.eq.s32.totalorder %s58, 0
      %p510 = por %p508, %p509
      %s512 = sadd.s32 %s511, 1
      %p515 = scmp.eq.s32.totalorder %s52, 1
      %p516 = scmp.ne.s32.totalorder %s511, %s513
      %p517 = scmp.eq.s32.totalorder %s52, 0
      %p518 = por %p516, %p517
      %p519 = scmp.ne.s32.totalorder %s511, %s513
      %p520 = scmp.eq.s32.totalorder %s57, 1
      %p521 = por %p519, %p520
      %p522 = scmp.ne.s32.totalorder %s513, %s514
      %p523 = scmp.eq.s32.totalorder %s57, 0
      %p524 = por %p522, %p523
      %p525 = scmp.ne.s32.totalorder %s513, %s514
      %p526 = scmp.eq.s32.totalorder %s58, 1
      %p527 = por %p525, %p526
      %p529 = scmp.ne.s32.totalorder %s514, %s528
      %p530 = scmp.eq.s32.totalorder %s58, 0
      %p531 = por %p529, %p530
      %s533 = sadd.s32 %s532, 1
      %p536 = scmp.eq.s32.totalorder %s52, 1
      %p537 = scmp.ne.s32.totalorder %s532, %s534
      %p538 = scmp.eq.s32.totalorder %s52, 0
      %p539 = por %p537, %p538
      %p540 = scmp.ne.s32.totalorder %s532, %s534
      %p541 = scmp.eq.s32.totalorder %s57, 1
      %p542 = por %p540, %p541
      %p543 = scmp.ne.s32.totalorder %s534, %s535
      %p544 = scmp.eq.s32.totalorder %s57, 0
      %p545 = por %p543, %p544
      %p546 = scmp.ne.s32.totalorder %s534, %s535
      %p547 = scmp.eq.s32.totalorder %s58, 1
      %p548 = por %p546, %p547
      %p550 = scmp.ne.s32.totalorder %s535, %s549
      %p551 = scmp.eq.s32.totalorder %s58, 0
      %p552 = por %p550, %p551
      %s554 = sadd.s32 %s553, 1
      %p557 = scmp.eq.s32.totalorder %s52, 1
      %p558 = scmp.ne.s32.totalorder %s553, %s555
      %p559 = scmp.eq.s32.totalorder %s52, 0
      %p560 = por %p558, %p559
      %p561 = scmp.ne.s32.totalorder %s553, %s555
      %p562 = scmp.eq.s32.totalorder %s57, 1
      %p563 = por %p561, %p562
      %p564 = scmp.ne.s32.totalorder %s555, %s556
      %p565 = scmp.eq.s32.totalorder %s57, 0
      %p566 = por %p564, %p565
      %p567 = scmp.ne.s32.totalorder %s555, %s556
      %p568 = scmp.eq.s32.totalorder %s58, 1
      %p569 = por %p567, %p568
      %p571 = scmp.ne.s32.totalorder %s556, %s570
      %p572 = scmp.eq.s32.totalorder %s58, 0
      %p573 = por %p571, %p572
      %s574 = ssub.s32 %s52, %s59
      %p575 = scmp.eq.s32.totalorder %s574, 0
      %s577 = sadd.s32 %s576, 1
      %s578 = scalar_select %p575, %s576, %s577
      %p581 = pneg %p575
      %p582 = scmp.eq.s32.totalorder %s52, 1
      %p583 = por %p581, %p582
      %p584 = scmp.ne.s32.totalorder %s576, %s579
      %p585 = scmp.eq.s32.totalorder %s52, 0
      %p586 = por %p584, %p585
      %p587 = scmp.ne.s32.totalorder %s576, %s579
      %p588 = scmp.eq.s32.totalorder %s57, 1
      %p589 = por %p587, %p588
      %p590 = scmp.ne.s32.totalorder %s579, %s580
      %p591 = scmp.eq.s32.totalorder %s57, 0
      %p592 = por %p590, %p591
      %p593 = scmp.ne.s32.totalorder %s579, %s580
      %p594 = scmp.eq.s32.totalorder %s58, 1
      %p595 = por %p593, %p594
      %p597 = scmp.ne.s32.totalorder %s580, %s596
      %p598 = scmp.eq.s32.totalorder %s58, 0
      %p599 = por %p597, %p598
      %s600 = ssub.s32 %s52, %s59
      %p601 = scmp.eq.s32.totalorder %s600, 0
      %s603 = sadd.s32 %s602, 1
      %s604 = scalar_select %p601, %s602, %s603
      %p607 = pneg %p601
      %p608 = scmp.eq.s32.totalorder %s52, 1
      %p609 = por %p607, %p608
      %p610 = scmp.ne.s32.totalorder %s602, %s605
      %p611 = scmp.eq.s32.totalorder %s52, 0
      %p612 = por %p610, %p611
      %p613 = scmp.ne.s32.totalorder %s602, %s605
      %p614 = scmp.eq.s32.totalorder %s57, 1
      %p615 = por %p613, %p614
      %p616 = scmp.ne.s32.totalorder %s605, %s606
      %p617 = scmp.eq.s32.totalorder %s57, 0
      %p618 = por %p616, %p617
      %p619 = scmp.ne.s32.totalorder %s605, %s606
      %p620 = scmp.eq.s32.totalorder %s58, 1
      %p621 = por %p619, %p620
      %p623 = scmp.ne.s32.totalorder %s606, %s622
      %p624 = scmp.eq.s32.totalorder %s58, 0
      %p625 = por %p623, %p624
      %p626 = scmp.le.s32.totalorder 1, %s52
      %p627 = scmp.lt.s32.totalorder %s52, 3
      %p628 = pnand %p626, %p627
      %p629 = pneg %p628
      // Predicated region
      $region9: #{tpu_custom_call.1} parent=5 // pred_check
        _
      $region10: #{tpu_custom_call.1} parent=5 // pred_check_branch
        %631 = sbr.rel (%p628) target = $region12
      $region11: #{tpu_custom_call.1} parent=5 // pred_region
        %s632 = ssub.s32 %s52, 1
        // Predicated region
        $region13: #{tpu_custom_call.1} parent=11 // pred_check
          %p633 = pneg %p125
        $region14: #{tpu_custom_call.1} parent=11 // pred_check_branch
          %635 = sbr.rel (%p633) target = $region16
        $region15: #{tpu_custom_call.1} parent=11 // pred_region
          %637 = vsyncadd [#allocation6], 0
          %s638 = sshll.u32 %s2, 4
          %s639 = int_to_ptr.hbm [resolvable:$true] %s638
          %s640 = sshll.u32 [#allocation7], 4
          %s641 = int_to_ptr.vmem [resolvable:$true] %s640
          %646 = dma.hbm_to_vmem [thread:$0]  %s639, 6144, %s641, [#allocation6], 128, 128, 8
        $region16: #{tpu_custom_call.1} parent=11 // pred_fallthru
          _
        // Predicated region
        $region17: #{tpu_custom_call.1} parent=11 // pred_check
          %p647 = pneg %p146
        $region18: #{tpu_custom_call.1} parent=11 // pred_check_branch
          %649 = sbr.rel (%p647) target = $region20
        $region19: #{tpu_custom_call.1} parent=11 // pred_region
          %651 = vsyncadd [#allocation9], 0
          %s653 = sshll.u32 %s3, 4
          %s654 = int_to_ptr.hbm [resolvable:$true] %s653
          %s655 = sshll.u32 [#allocation8], 4
          %s656 = int_to_ptr.vmem [resolvable:$true] %s655
          %658 = dma.hbm_to_vmem [thread:$0]  %s654, 32, %s656, [#allocation9]
        $region20: #{tpu_custom_call.1} parent=11 // pred_fallthru
          _
        // Predicated region
        $region21: #{tpu_custom_call.1} parent=11 // pred_check
          %p659 = pneg %p167
        $region22: #{tpu_custom_call.1} parent=11 // pred_check_branch
          %661 = sbr.rel (%p659) target = $region24
        $region23: #{tpu_custom_call.1} parent=11 // pred_region
          %663 = vsyncadd [#allocation9], 0
          %s664 = sshll.u32 %s4, 4
          %s665 = int_to_ptr.hbm [resolvable:$true] %s664
          %s666 = sshll.u32 [#allocation10], 4
          %s667 = int_to_ptr.vmem [resolvable:$true] %s666
          %672 = dma.hbm_to_vmem [thread:$0]  %s665, 8192, %s667, [#allocation9], 256, 256, 16
        $region24: #{tpu_custom_call.1} parent=11 // pred_fallthru
          _
        // Predicated region
        $region25: #{tpu_custom_call.1} parent=11 // pred_check
          %p673 = pneg %p188
        $region26: #{tpu_custom_call.1} parent=11 // pred_check_branch
          %675 = sbr.rel (%p673) target = $region28
        $region27: #{tpu_custom_call.1} parent=11 // pred_region
          _
        $region28: #{tpu_custom_call.1} parent=11 // pred_fallthru
          _
        // Predicated region
        $region29: #{tpu_custom_call.1} parent=11 // pred_check
          %p676 = pneg %p209
        $region30: #{tpu_custom_call.1} parent=11 // pred_check_branch
          %678 = sbr.rel (%p676) target = $region32
        $region31: #{tpu_custom_call.1} parent=11 // pred_region
          %680 = vsyncadd [#allocation12], 0
          %s681 = sshll.u32 %s6, 4
          %s682 = int_to_ptr.hbm [resolvable:$true] %s681
          %s683 = sshll.u32 [#allocation11], 4
          %s684 = int_to_ptr.vmem [resolvable:$true] %s683
          %689 = dma.hbm_to_vmem [thread:$0]  %s682, 16384, %s684, [#allocation12], 256, 256, 16
        $region32: #{tpu_custom_call.1} parent=11 // pred_fallthru
          _
        // Predicated region
        $region33: #{tpu_custom_call.1} parent=11 // pred_check
          %p690 = pneg %p230
        $region34: #{tpu_custom_call.1} parent=11 // pred_check_branch
          %692 = sbr.rel (%p690) target = $region36
        $region35: #{tpu_custom_call.1} parent=11 // pred_region
          %694 = vsyncadd [#allocation12], 0
          %s696 = sshll.u32 %s7, 4
          %s697 = int_to_ptr.hbm [resolvable:$true] %s696
          %s698 = sshll.u32 [#allocation13], 4
          %s699 = int_to_ptr.vmem [resolvable:$true] %s698
          %701 = dma.hbm_to_vmem [thread:$0]  %s697, 64, %s699, [#allocation12]
        $region36: #{tpu_custom_call.1} parent=11 // pred_fallthru
          _
        // Predicated region
        $region37: #{tpu_custom_call.1} parent=11 // pred_check
          %p702 = pneg %p251
        $region38: #{tpu_custom_call.1} parent=11 // pred_check_branch
          %704 = sbr.rel (%p702) target = $region40
        $region39: #{tpu_custom_call.1} parent=11 // pred_region
          %706 = vsyncadd [#allocation15], 0
          %s707 = sshll.u32 %s8, 4
          %s708 = int_to_ptr.hbm [resolvable:$true] %s707
          %s709 = sshll.u32 [#allocation14], 4
          %s710 = int_to_ptr.vmem [resolvable:$true] %s709
          %715 = dma.hbm_to_vmem [thread:$0]  %s708, 8192, %s710, [#allocation15], 128, 128, 8
        $region40: #{tpu_custom_call.1} parent=11 // pred_fallthru
          _
        // Predicated region
        $region41: #{tpu_custom_call.1} parent=11 // pred_check
          %p716 = pneg %p272
        $region42: #{tpu_custom_call.1} parent=11 // pred_check_branch
          %718 = sbr.rel (%p716) target = $region44
        $region43: #{tpu_custom_call.1} parent=11 // pred_region
          %720 = vsyncadd [#allocation15], 0
          %s722 = sshll.u32 %s9, 4
          %s723 = int_to_ptr.hbm [resolvable:$true] %s722
          %s724 = sshll.u32 [#allocation16], 4
          %s725 = int_to_ptr.vmem [resolvable:$true] %s724
          %727 = dma.hbm_to_vmem [thread:$0]  %s723, 32, %s725, [#allocation15]
        $region44: #{tpu_custom_call.1} parent=11 // pred_fallthru
          _
        // Predicated region
        $region45: #{tpu_custom_call.1} parent=11 // pred_check
          %p728 = pneg %p293
        $region46: #{tpu_custom_call.1} parent=11 // pred_check_branch
          %730 = sbr.rel (%p728) target = $region48
        $region47: #{tpu_custom_call.1} parent=11 // pred_region
          %732 = vsyncadd [#allocation18], 0
          %s733 = sshll.u32 %s10, 4
          %s734 = int_to_ptr.hbm [resolvable:$true] %s733
          %s735 = sshll.u32 [#allocation17], 4
          %s736 = int_to_ptr.vmem [resolvable:$true] %s735
          %741 = dma.hbm_to_vmem [thread:$0]  %s734, 2048, %s736, [#allocation18], 64, 64, 4
        $region48: #{tpu_custom_call.1} parent=11 // pred_fallthru
          _
        // Predicated region
        $region49: #{tpu_custom_call.1} parent=11 // pred_check
          %p742 = pneg %p314
        $region50: #{tpu_custom_call.1} parent=11 // pred_check_branch
          %744 = sbr.rel (%p742) target = $region52
        $region51: #{tpu_custom_call.1} parent=11 // pred_region
          %746 = vsyncadd [#allocation18], 0
          %s748 = sshll.u32 %s11, 4
          %s749 = int_to_ptr.hbm [resolvable:$true] %s748
          %s750 = sshll.u32 [#allocation19], 4
          %s751 = int_to_ptr.vmem [resolvable:$true] %s750
          %753 = dma.hbm_to_vmem [thread:$0]  %s749, 16, %s751, [#allocation18]
        $region52: #{tpu_custom_call.1} parent=11 // pred_fallthru
          _
        // Predicated region
        $region53: #{tpu_custom_call.1} parent=11 // pred_check
          %p754 = pneg %p335
        $region54: #{tpu_custom_call.1} parent=11 // pred_check_branch
          %756 = sbr.rel (%p754) target = $region56
        $region55: #{tpu_custom_call.1} parent=11 // pred_region
          %758 = vsyncadd [#allocation21], 0
          %s759 = sshll.u32 %s12, 4
          %s760 = int_to_ptr.hbm [resolvable:$true] %s759
          %s761 = sshll.u32 [#allocation20], 4
          %s762 = int_to_ptr.vmem [resolvable:$true] %s761
          %767 = dma.hbm_to_vmem [thread:$0]  %s760, 2048, %s762, [#allocation21], 128, 128, 8
        $region56: #{tpu_custom_call.1} parent=11 // pred_fallthru
          _
        // Predicated region
        $region57: #{tpu_custom_call.1} parent=11 // pred_check
          %p768 = pneg %p356
        $region58: #{tpu_custom_call.1} parent=11 // pred_check_branch
          %770 = sbr.rel (%p768) target = $region60
        $region59: #{tpu_custom_call.1} parent=11 // pred_region
          %772 = vsyncadd [#allocation21], 0
          %s774 = sshll.u32 %s13, 4
          %s775 = int_to_ptr.hbm [resolvable:$true] %s774
          %s776 = sshll.u32 [#allocation22], 4
          %s777 = int_to_ptr.vmem [resolvable:$true] %s776
          %779 = dma.hbm_to_vmem [thread:$0]  %s775, 32, %s777, [#allocation21]
        $region60: #{tpu_custom_call.1} parent=11 // pred_fallthru
          _
        // Predicated region
        $region61: #{tpu_custom_call.1} parent=11 // pred_check
          %p780 = pneg %p377
        $region62: #{tpu_custom_call.1} parent=11 // pred_check_branch
          %782 = sbr.rel (%p780) target = $region64
        $region63: #{tpu_custom_call.1} parent=11 // pred_region
          %784 = vsyncadd [#allocation24], 0
          %s785 = sshll.u32 %s14, 4
          %s786 = int_to_ptr.hbm [resolvable:$true] %s785
          %s787 = sshll.u32 [#allocation23], 4
          %s788 = int_to_ptr.vmem [resolvable:$true] %s787
          %793 = dma.hbm_to_vmem [thread:$0]  %s786, 256, %s788, [#allocation24], 64, 64, 4
        $region64: #{tpu_custom_call.1} parent=11 // pred_fallthru
          _
        // Predicated region
        $region65: #{tpu_custom_call.1} parent=11 // pred_check
          %p794 = pneg %p398
        $region66: #{tpu_custom_call.1} parent=11 // pred_check_branch
          %796 = sbr.rel (%p794) target = $region68
        $region67: #{tpu_custom_call.1} parent=11 // pred_region
          %798 = vsyncadd [#allocation24], 0
          %s800 = sshll.u32 %s15, 4
          %s801 = int_to_ptr.hbm [resolvable:$true] %s800
          %s802 = sshll.u32 [#allocation25], 4
          %s803 = int_to_ptr.vmem [resolvable:$true] %s802
          %805 = dma.hbm_to_vmem [thread:$0]  %s801, 16, %s803, [#allocation24]
        $region68: #{tpu_custom_call.1} parent=11 // pred_fallthru
          _
        // Predicated region
        $region69: #{tpu_custom_call.1} parent=11 // pred_check
          %p806 = pneg %p419
        $region70: #{tpu_custom_call.1} parent=11 // pred_check_branch
          %808 = sbr.rel (%p806) target = $region72
        $region71: #{tpu_custom_call.1} parent=11 // pred_region
          %810 = vsyncadd [#allocation27], 0
          %s811 = sshll.u32 %s16, 4
          %s812 = int_to_ptr.hbm [resolvable:$true] %s811
          %s813 = sshll.u32 [#allocation26], 4
          %s814 = int_to_ptr.vmem [resolvable:$true] %s813
          %819 = dma.hbm_to_vmem [thread:$0]  %s812, 2048, %s814, [#allocation27], 128, 128, 8
        $region72: #{tpu_custom_call.1} parent=11 // pred_fallthru
          _
        // Predicated region
        $region73: #{tpu_custom_call.1} parent=11 // pred_check
          %p820 = pneg %p440
        $region74: #{tpu_custom_call.1} parent=11 // pred_check_branch
          %822 = sbr.rel (%p820) target = $region76
        $region75: #{tpu_custom_call.1} parent=11 // pred_region
          _
        $region76: #{tpu_custom_call.1} parent=11 // pred_fallthru
          _
        // Predicated region
        $region77: #{tpu_custom_call.1} parent=11 // pred_check
          %p823 = pneg %p461
        $region78: #{tpu_custom_call.1} parent=11 // pred_check_branch
          %825 = sbr.rel (%p823) target = $region80
        $region79: #{tpu_custom_call.1} parent=11 // pred_region
          %827 = vsyncadd [#allocation27], 0
          %s828 = sshll.u32 %s18, 4
          %s829 = int_to_ptr.hbm [resolvable:$true] %s828
          %s830 = sshll.u32 [#allocation28], 4
          %s831 = int_to_ptr.vmem [resolvable:$true] %s830
          %836 = dma.hbm_to_vmem [thread:$0]  %s829, 8192, %s831, [#allocation27], 256, 256, 16
        $region80: #{tpu_custom_call.1} parent=11 // pred_fallthru
          _
        // Predicated region
        $region81: #{tpu_custom_call.1} parent=11 // pred_check
          %p837 = pneg %p482
        $region82: #{tpu_custom_call.1} parent=11 // pred_check_branch
          %839 = sbr.rel (%p837) target = $region84
        $region83: #{tpu_custom_call.1} parent=11 // pred_region
          _
        $region84: #{tpu_custom_call.1} parent=11 // pred_fallthru
          _
        // Predicated region
        $region85: #{tpu_custom_call.1} parent=11 // pred_check
          %p840 = pneg %p503
        $region86: #{tpu_custom_call.1} parent=11 // pred_check_branch
          %842 = sbr.rel (%p840) target = $region88
        $region87: #{tpu_custom_call.1} parent=11 // pred_region
          %844 = vsyncadd [#allocation30], 0
          %s845 = sshll.u32 %s20, 4
          %s846 = int_to_ptr.hbm [resolvable:$true] %s845
          %s847 = sshll.u32 [#allocation29], 4
          %s848 = int_to_ptr.vmem [resolvable:$true] %s847
          %853 = dma.hbm_to_vmem [thread:$0]  %s846, 8192, %s848, [#allocation30], 128, 128, 8
        $region88: #{tpu_custom_call.1} parent=11 // pred_fallthru
          _
        // Predicated region
        $region89: #{tpu_custom_call.1} parent=11 // pred_check
          %p854 = pneg %p524
        $region90: #{tpu_custom_call.1} parent=11 // pred_check_branch
          %856 = sbr.rel (%p854) target = $region92
        $region91: #{tpu_custom_call.1} parent=11 // pred_region
          _
        $region92: #{tpu_custom_call.1} parent=11 // pred_fallthru
          _
        // Predicated region
        $region93: #{tpu_custom_call.1} parent=11 // pred_check
          %p857 = pneg %p545
        $region94: #{tpu_custom_call.1} parent=11 // pred_check_branch
          %859 = sbr.rel (%p857) target = $region96
        $region95: #{tpu_custom_call.1} parent=11 // pred_region
          %861 = vsyncadd [#allocation30], 0
          %s862 = sshll.u32 %s22, 4
          %s863 = int_to_ptr.hbm [resolvable:$true] %s862
          %s864 = sshll.u32 [#allocation31], 4
          %s865 = int_to_ptr.vmem [resolvable:$true] %s864
          %870 = dma.hbm_to_vmem [thread:$0]  %s863, 6144, %s865, [#allocation30], 192, 192, 12
        $region96: #{tpu_custom_call.1} parent=11 // pred_fallthru
          _
        // Predicated region
        $region97: #{tpu_custom_call.1} parent=11 // pred_check
          %p871 = pneg %p566
        $region98: #{tpu_custom_call.1} parent=11 // pred_check_branch
          %873 = sbr.rel (%p871) target = $region100
        $region99: #{tpu_custom_call.1} parent=11 // pred_region
          _
        $region100: #{tpu_custom_call.1} parent=11 // pred_fallthru
          _
      $region12: #{tpu_custom_call.1} parent=5 // pred_fallthru
        _
      %p874 = scmp.lt.s32.totalorder %s52, 2
      // Predicated region
      $region101: #{tpu_custom_call.1} parent=5 // pred_check
        %p875 = pneg %p874
      $region102: #{tpu_custom_call.1} parent=5 // pred_check_branch
        %877 = sbr.rel (%p875) target = $region104
      $region103: #{tpu_custom_call.1} parent=5 // pred_region
        // Predicated region
        $region105: #{tpu_custom_call.1} parent=103 // pred_check
          %p878 = pneg %p72
        $region106: #{tpu_custom_call.1} parent=103 // pred_check_branch
          %880 = sbr.rel (%p878) target = $region108
        $region107: #{tpu_custom_call.1} parent=103 // pred_region
          %s881 = sand.u32 %s62, 1
          %s882 = scalar_lea.sflag [#allocation3], %s881
          %s883 = sand.u32 %s62, 1
          %s884 = smul.addr %s883, 48
          %s885 = scalar_lea.vmem [#allocation2], %s884
          %s886 = smul.u32 2, %s52
          %888 = vsyncadd %s882, 0
          %s889 = smul.addr %s886, 3
          %s890 = smul.addr %s889, 8
          %s891 = scalar_lea.hbm %s0, %s890
          %s892 = sshll.u32 %s891, 4
          %s893 = int_to_ptr.hbm [resolvable:$true] %s892
          %s894 = sshll.u32 %s885, 4
          %s895 = int_to_ptr.vmem [resolvable:$true] %s894
          %900 = dma.hbm_to_vmem [thread:$0]  %s893, 768, %s895, %s882, 384, 384, 24
        $region108: #{tpu_custom_call.1} parent=103 // pred_fallthru
          _
        // Predicated region
        $region109: #{tpu_custom_call.1} parent=103 // pred_check
          %p901 = pneg %p98
        $region110: #{tpu_custom_call.1} parent=103 // pred_check_branch
          %903 = sbr.rel (%p901) target = $region112
        $region111: #{tpu_custom_call.1} parent=103 // pred_region
          %s904 = sand.u32 %s52, 1
          %s905 = scalar_lea.sflag [#allocation6], %s904
          %s906 = sand.u32 %s88, 1
          %s907 = smul.addr %s906, 16
          %s908 = scalar_lea.vmem [#allocation5], %s907
          %s909 = smul.u32 2, %s52
          %911 = vsyncadd %s905, 0
          %s912 = smul.addr %s909, 8
          %s913 = scalar_lea.hbm %s1, %s912
          %s914 = sshll.u32 %s913, 4
          %s915 = int_to_ptr.hbm [resolvable:$true] %s914
          %s916 = sshll.u32 %s908, 4
          %s917 = int_to_ptr.vmem [resolvable:$true] %s916
          %922 = dma.hbm_to_vmem [thread:$0]  %s915, 256, %s917, %s905, 128, 128, 8
        $region112: #{tpu_custom_call.1} parent=103 // pred_fallthru
          _
      $region104: #{tpu_custom_call.1} parent=5 // pred_fallthru
        _
      %p923 = scmp.le.s32.totalorder 1, %s52
      %p924 = scmp.lt.s32.totalorder %s52, 3
      %p925 = pnand %p923, %p924
      %p926 = pneg %p925
      // Predicated region
      $region113: #{tpu_custom_call.1} parent=5 // pred_check
        _
      $region114: #{tpu_custom_call.1} parent=5 // pred_check_branch
        %928 = sbr.rel (%p925) target = $region116
      $region115: #{tpu_custom_call.1} parent=5 // pred_region
        %s929 = ssub.s32 %s52, 1
        %s930 = sand.u32 %s65, 1
        %s931 = scalar_lea.sflag [#allocation3], %s930
        %s932 = sand.u32 %s65, 1
        %s933 = smul.addr %s932, 48
        %s934 = scalar_lea.vmem [#allocation2], %s933
        // Predicated region
        $region117: #{tpu_custom_call.1} parent=115 // pred_check
          %p935 = pneg %p78
        $region118: #{tpu_custom_call.1} parent=115 // pred_check_branch
          %937 = sbr.rel (%p935) target = $region120
        $region119: #{tpu_custom_call.1} parent=115 // pred_region
          %939 = dma.done %s931, 768
        $region120: #{tpu_custom_call.1} parent=115 // pred_fallthru
          _
        %s940 = sand.u32 %s57, 1
        %s941 = scalar_lea.sflag [#allocation6], %s940
        %s942 = sand.u32 %s91, 1
        %s943 = smul.addr %s942, 16
        %s944 = scalar_lea.vmem [#allocation5], %s943
        // Predicated region
        $region121: #{tpu_custom_call.1} parent=115 // pred_check
          %p945 = pneg %p104
        $region122: #{tpu_custom_call.1} parent=115 // pred_check_branch
          %947 = sbr.rel (%p945) target = $region124
        $region123: #{tpu_custom_call.1} parent=115 // pred_region
          %949 = dma.done %s941, 256
        $region124: #{tpu_custom_call.1} parent=115 // pred_fallthru
          _
        // Predicated region
        $region125: #{tpu_custom_call.1} parent=115 // pred_check
          %p950 = pneg %p125
        $region126: #{tpu_custom_call.1} parent=115 // pred_check_branch
          %952 = sbr.rel (%p950) target = $region128
        $region127: #{tpu_custom_call.1} parent=115 // pred_region
          %954 = dma.done [#allocation6], 6144
        $region128: #{tpu_custom_call.1} parent=115 // pred_fallthru
          _
        // Predicated region
        $region129: #{tpu_custom_call.1} parent=115 // pred_check
          %p955 = pneg %p146
        $region130: #{tpu_custom_call.1} parent=115 // pred_check_branch
          %957 = sbr.rel (%p955) target = $region132
        $region131: #{tpu_custom_call.1} parent=115 // pred_region
          %959 = dma.done [#allocation9], 32
        $region132: #{tpu_custom_call.1} parent=115 // pred_fallthru
          _
        // Predicated region
        $region133: #{tpu_custom_call.1} parent=115 // pred_check
          %p960 = pneg %p167
        $region134: #{tpu_custom_call.1} parent=115 // pred_check_branch
          %962 = sbr.rel (%p960) target = $region136
        $region135: #{tpu_custom_call.1} parent=115 // pred_region
          %964 = dma.done [#allocation9], 8192
        $region136: #{tpu_custom_call.1} parent=115 // pred_fallthru
          _
        // Predicated region
        $region137: #{tpu_custom_call.1} parent=115 // pred_check
          %p965 = pneg %p209
        $region138: #{tpu_custom_call.1} parent=115 // pred_check_branch
          %967 = sbr.rel (%p965) target = $region140
        $region139: #{tpu_custom_call.1} parent=115 // pred_region
          %969 = dma.done [#allocation12], 16384
        $region140: #{tpu_custom_call.1} parent=115 // pred_fallthru
          _
        // Predicated region
        $region141: #{tpu_custom_call.1} parent=115 // pred_check
          %p970 = pneg %p230
        $region142: #{tpu_custom_call.1} parent=115 // pred_check_branch
          %972 = sbr.rel (%p970) target = $region144
        $region143: #{tpu_custom_call.1} parent=115 // pred_region
          %974 = dma.done [#allocation12], 64
        $region144: #{tpu_custom_call.1} parent=115 // pred_fallthru
          _
        // Predicated region
        $region145: #{tpu_custom_call.1} parent=115 // pred_check
          %p975 = pneg %p251
        $region146: #{tpu_custom_call.1} parent=115 // pred_check_branch
          %977 = sbr.rel (%p975) target = $region148
        $region147: #{tpu_custom_call.1} parent=115 // pred_region
          %979 = dma.done [#allocation15], 8192
        $region148: #{tpu_custom_call.1} parent=115 // pred_fallthru
          _
        // Predicated region
        $region149: #{tpu_custom_call.1} parent=115 // pred_check
          %p980 = pneg %p272
        $region150: #{tpu_custom_call.1} parent=115 // pred_check_branch
          %982 = sbr.rel (%p980) target = $region152
        $region151: #{tpu_custom_call.1} parent=115 // pred_region
          %984 = dma.done [#allocation15], 32
        $region152: #{tpu_custom_call.1} parent=115 // pred_fallthru
          _
        // Predicated region
        $region153: #{tpu_custom_call.1} parent=115 // pred_check
          %p985 = pneg %p293
        $region154: #{tpu_custom_call.1} parent=115 // pred_check_branch
          %987 = sbr.rel (%p985) target = $region156
        $region155: #{tpu_custom_call.1} parent=115 // pred_region
          %989 = dma.done [#allocation18], 2048
        $region156: #{tpu_custom_call.1} parent=115 // pred_fallthru
          _
        // Predicated region
        $region157: #{tpu_custom_call.1} parent=115 // pred_check
          %p990 = pneg %p314
        $region158: #{tpu_custom_call.1} parent=115 // pred_check_branch
          %992 = sbr.rel (%p990) target = $region160
        $region159: #{tpu_custom_call.1} parent=115 // pred_region
          %994 = dma.done [#allocation18], 16
        $region160: #{tpu_custom_call.1} parent=115 // pred_fallthru
          _
        // Predicated region
        $region161: #{tpu_custom_call.1} parent=115 // pred_check
          %p995 = pneg %p335
        $region162: #{tpu_custom_call.1} parent=115 // pred_check_branch
          %997 = sbr.rel (%p995) target = $region164
        $region163: #{tpu_custom_call.1} parent=115 // pred_region
          %999 = dma.done [#allocation21], 2048
        $region164: #{tpu_custom_call.1} parent=115 // pred_fallthru
          _
        // Predicated region
        $region165: #{tpu_custom_call.1} parent=115 // pred_check
          %p1000 = pneg %p356
        $region166: #{tpu_custom_call.1} parent=115 // pred_check_branch
          %1002 = sbr.rel (%p1000) target = $region168
        $region167: #{tpu_custom_call.1} parent=115 // pred_region
          %1004 = dma.done [#allocation21], 32
        $region168: #{tpu_custom_call.1} parent=115 // pred_fallthru
          _
        // Predicated region
        $region169: #{tpu_custom_call.1} parent=115 // pred_check
          %p1005 = pneg %p377
        $region170: #{tpu_custom_call.1} parent=115 // pred_check_branch
          %1007 = sbr.rel (%p1005) target = $region172
        $region171: #{tpu_custom_call.1} parent=115 // pred_region
          %1009 = dma.done [#allocation24], 256
        $region172: #{tpu_custom_call.1} parent=115 // pred_fallthru
          _
        // Predicated region
        $region173: #{tpu_custom_call.1} parent=115 // pred_check
          %p1010 = pneg %p398
        $region174: #{tpu_custom_call.1} parent=115 // pred_check_branch
          %1012 = sbr.rel (%p1010) target = $region176
        $region175: #{tpu_custom_call.1} parent=115 // pred_region
          %1014 = dma.done [#allocation24], 16
        $region176: #{tpu_custom_call.1} parent=115 // pred_fallthru
          _
        // Predicated region
        $region177: #{tpu_custom_call.1} parent=115 // pred_check
          %p1015 = pneg %p419
        $region178: #{tpu_custom_call.1} parent=115 // pred_check_branch
          %1017 = sbr.rel (%p1015) target = $region180
        $region179: #{tpu_custom_call.1} parent=115 // pred_region
          %1019 = dma.done [#allocation27], 2048
        $region180: #{tpu_custom_call.1} parent=115 // pred_fallthru
          _
        // Predicated region
        $region181: #{tpu_custom_call.1} parent=115 // pred_check
          %p1020 = pneg %p461
        $region182: #{tpu_custom_call.1} parent=115 // pred_check_branch
          %1022 = sbr.rel (%p1020) target = $region184
        $region183: #{tpu_custom_call.1} parent=115 // pred_region
          %1024 = dma.done [#allocation27], 8192
        $region184: #{tpu_custom_call.1} parent=115 // pred_fallthru
          _
        // Predicated region
        $region185: #{tpu_custom_call.1} parent=115 // pred_check
          %p1025 = pneg %p503
        $region186: #{tpu_custom_call.1} parent=115 // pred_check_branch
          %1027 = sbr.rel (%p1025) target = $region188
        $region187: #{tpu_custom_call.1} parent=115 // pred_region
          %1029 = dma.done [#allocation30], 8192
        $region188: #{tpu_custom_call.1} parent=115 // pred_fallthru
          _
        // Predicated region
        $region189: #{tpu_custom_call.1} parent=115 // pred_check
          %p1030 = pneg %p545
        $region190: #{tpu_custom_call.1} parent=115 // pred_check_branch
          %1032 = sbr.rel (%p1030) target = $region192
        $region191: #{tpu_custom_call.1} parent=115 // pred_region
          %1034 = dma.done [#allocation30], 6144
        $region192: #{tpu_custom_call.1} parent=115 // pred_fallthru
          _
        %s1035 = sand.u32 %s65, 1
        %s1036 = scalar_lea.sflag [#allocation3], %s1035
        %s1037 = sand.u32 %s65, 1
        %s1038 = smul.addr %s1037, 48
        %s1039 = scalar_lea.vmem [#allocation2], %s1038
        %p1040 = pneg %p78
        %p1041 = pneg %p75
        %s1042 = sand.u32 %s57, 1
        %s1043 = scalar_lea.sflag [#allocation6], %s1042
        %s1044 = sand.u32 %s91, 1
        %s1045 = smul.addr %s1044, 16
        %s1046 = scalar_lea.vmem [#allocation5], %s1045
        %p1047 = pneg %p104
        %p1048 = pneg %p101
        %p1049 = pneg %p125
        %p1050 = pneg %p122
        %p1051 = pneg %p146
        %p1052 = pneg %p143
        %p1053 = pneg %p167
        %p1054 = pneg %p164
        %p1055 = pneg %p188
        %p1056 = pneg %p185
        %p1057 = pneg %p209
        %p1058 = pneg %p206
        %p1059 = pneg %p230
        %p1060 = pneg %p227
        %p1061 = pneg %p251
        %p1062 = pneg %p248
        %p1063 = pneg %p272
        %p1064 = pneg %p269
        %p1065 = pneg %p293
        %p1066 = pneg %p290
        %p1067 = pneg %p314
        %p1068 = pneg %p311
        %p1069 = pneg %p335
        %p1070 = pneg %p332
        %p1071 = pneg %p356
        %p1072 = pneg %p353
        %p1073 = pneg %p377
        %p1074 = pneg %p374
        %p1075 = pneg %p398
        %p1076 = pneg %p395
        %p1077 = pneg %p419
        %p1078 = pneg %p416
        %p1079 = pneg %p440
        %p1080 = pneg %p437
        %p1081 = pneg %p461
        %p1082 = pneg %p458
        %p1083 = pneg %p482
        %p1084 = pneg %p479
        %p1085 = pneg %p503
        %p1086 = pneg %p500
        %p1087 = pneg %p524
        %p1088 = pneg %p521
        %p1089 = pneg %p545
        %p1090 = pneg %p542
        %p1091 = pneg %p566
        %p1092 = pneg %p563
        %p1093 = pneg %p592
        %p1094 = pneg %p589
        %s1095 = sand.u32 %s579, 1
        %s1096 = scalar_lea.sflag [#allocation4], %s1095
        %s1097 = sand.u32 %s579, 1
        %s1098 = smul.addr %s1097, 48
        %s1099 = scalar_lea.vmem [#allocation32], %s1098
        %p1100 = pneg %p618
        %p1101 = pneg %p615
        %s1102 = sand.u32 %s605, 1
        %s1103 = scalar_lea.sflag [#allocation34], %s1102
        %s1104 = sand.u32 %s605, 1
        %s1105 = smul.addr %s1104, 32
        %s1106 = scalar_lea.vmem [#allocation33], %s1105
        %s1107 = smul.u32 2, %s57
        %s1108 = smul.u32 2, %s57
        %s1109 = smul.u32 2, %s57
        %s1110 = smul.u32 2, %s57
        %v1112 = vld [vmem:[%s934] sm:$0xff]
        %v1113 = vld [vmem:[%s934 + $0x8] sm:$0xff]
        %v1114 = vld [vmem:[%s934 + $0x10] sm:$0xff]
        %v1115 = vld [vmem:[%s934 + $0x18] sm:$0xff]
        %v1116 = vld [vmem:[%s934 + $0x20] sm:$0xff]
        %v1117 = vld [vmem:[%s934 + $0x28] sm:$0xff]
        %v1118 = vld [vmem:[#allocation7] sm:$0xff]
        %v1119 = vld [vmem:[#allocation7 + $0x8] sm:$0xff]
        %v1120 = vld [vmem:[#allocation7 + $0x10] sm:$0xff]
        %v1121 = vld [vmem:[#allocation7 + $0x18] sm:$0xff]
        %v1122 = vld [vmem:[#allocation7 + $0x20] sm:$0xff]
        %v1123 = vld [vmem:[#allocation7 + $0x28] sm:$0xff]
        %v1124 = vld [vmem:[#allocation7 + $0x30] sm:$0xff]
        %v1125 = vld [vmem:[#allocation7 + $0x38] sm:$0xff]
        %v1126 = vld [vmem:[#allocation7 + $0x40] sm:$0xff]
        %v1127 = vld [vmem:[#allocation7 + $0x48] sm:$0xff]
        %v1128 = vld [vmem:[#allocation7 + $0x50] sm:$0xff]
        %v1129 = vld [vmem:[#allocation7 + $0x58] sm:$0xff]
        %v1130 = vld [vmem:[#allocation7 + $0x60] sm:$0xff]
        %v1131 = vld [vmem:[#allocation7 + $0x68] sm:$0xff]
        %v1132 = vld [vmem:[#allocation7 + $0x70] sm:$0xff]
        %v1133 = vld [vmem:[#allocation7 + $0x78] sm:$0xff]
        %v1134 = vld [vmem:[#allocation7 + $0x80] sm:$0xff]
        %v1135 = vld [vmem:[#allocation7 + $0x88] sm:$0xff]
        %v1136 = vld [vmem:[#allocation7 + $0x90] sm:$0xff]
        %v1137 = vld [vmem:[#allocation7 + $0x98] sm:$0xff]
        %v1138 = vld [vmem:[#allocation7 + $0xa0] sm:$0xff]
        %v1139 = vld [vmem:[#allocation7 + $0xa8] sm:$0xff]
        %v1140 = vld [vmem:[#allocation7 + $0xb0] sm:$0xff]
        %v1141 = vld [vmem:[#allocation7 + $0xb8] sm:$0xff]
        %v1142 = vld [vmem:[#allocation7 + $0xc0] sm:$0xff]
        %v1143 = vld [vmem:[#allocation7 + $0xc8] sm:$0xff]
        %v1144 = vld [vmem:[#allocation7 + $0xd0] sm:$0xff]
        %v1145 = vld [vmem:[#allocation7 + $0xd8] sm:$0xff]
        %v1146 = vld [vmem:[#allocation7 + $0xe0] sm:$0xff]
        %v1147 = vld [vmem:[#allocation7 + $0xe8] sm:$0xff]
        %v1148 = vld [vmem:[#allocation7 + $0xf0] sm:$0xff]
        %v1149 = vld [vmem:[#allocation7 + $0xf8] sm:$0xff]
        %v1150 = vld [vmem:[#allocation7 + $0x100] sm:$0xff]
        %v1151 = vld [vmem:[#allocation7 + $0x108] sm:$0xff]
        %v1152 = vld [vmem:[#allocation7 + $0x110] sm:$0xff]
        %v1153 = vld [vmem:[#allocation7 + $0x118] sm:$0xff]
        %v1154 = vld [vmem:[#allocation7 + $0x120] sm:$0xff]
        %v1155 = vld [vmem:[#allocation7 + $0x128] sm:$0xff]
        %v1156 = vld [vmem:[#allocation7 + $0x130] sm:$0xff]
        %v1157 = vld [vmem:[#allocation7 + $0x138] sm:$0xff]
        %v1158 = vld [vmem:[#allocation7 + $0x140] sm:$0xff]
        %v1159 = vld [vmem:[#allocation7 + $0x148] sm:$0xff]
        %v1160 = vld [vmem:[#allocation7 + $0x150] sm:$0xff]
        %v1161 = vld [vmem:[#allocation7 + $0x158] sm:$0xff]
        %v1162 = vld [vmem:[#allocation7 + $0x160] sm:$0xff]
        %v1163 = vld [vmem:[#allocation7 + $0x168] sm:$0xff]
        %v1164 = vld [vmem:[#allocation7 + $0x170] sm:$0xff]
        %v1165 = vld [vmem:[#allocation7 + $0x178] sm:$0xff]
        %v1166 = vld [vmem:[#allocation8] sm:$0x3]
        %v1167 = vpack.c.bf16 %v1115, %v1112
        %v1168 = vpack.c.bf16 %v1116, %v1113
        %v1169 = vpack.c.bf16 %v1117, %v1114
        %v1171 = vperm.slane %v1166, 0
        %v1172 = vperm.slane %v1166, 1
        %v1223 = vunpack.c.l.b16 %v1118
        %v1224 = vunpack.c.h.b16 %v1118
        %v1225 = vunpack.c.l.b16 %v1119
        %v1226 = vunpack.c.h.b16 %v1119
        %v1227 = vunpack.c.l.b16 %v1120
        %v1228 = vunpack.c.h.b16 %v1120
        %v1229 = vunpack.c.l.b16 %v1121
        %v1230 = vunpack.c.h.b16 %v1121
        %v1231 = vunpack.c.l.b16 %v1122
        %v1232 = vunpack.c.h.b16 %v1122
        %v1233 = vunpack.c.l.b16 %v1123
        %v1234 = vunpack.c.h.b16 %v1123
        %v1235 = vunpack.c.l.b16 %v1124
        %v1236 = vunpack.c.h.b16 %v1124
        %v1237 = vunpack.c.l.b16 %v1125
        %v1238 = vunpack.c.h.b16 %v1125
        %v1239 = vunpack.c.l.b16 %v1126
        %v1240 = vunpack.c.h.b16 %v1126
        %v1241 = vunpack.c.l.b16 %v1127
        %v1242 = vunpack.c.h.b16 %v1127
        %v1243 = vunpack.c.l.b16 %v1128
        %v1244 = vunpack.c.h.b16 %v1128
        %v1245 = vunpack.c.l.b16 %v1129
        %v1246 = vunpack.c.h.b16 %v1129
        %v1247 = vunpack.c.l.b16 %v1130
        %v1248 = vunpack.c.h.b16 %v1130
        %v1249 = vunpack.c.l.b16 %v1131
        %v1250 = vunpack.c.h.b16 %v1131
        %v1251 = vunpack.c.l.b16 %v1132
        %v1252 = vunpack.c.h.b16 %v1132
        %v1253 = vunpack.c.l.b16 %v1133
        %v1254 = vunpack.c.h.b16 %v1133
        %v1255 = vunpack.c.l.b16 %v1134
        %v1256 = vunpack.c.h.b16 %v1134
        %v1257 = vunpack.c.l.b16 %v1135
        %v1258 = vunpack.c.h.b16 %v1135
        %v1259 = vunpack.c.l.b16 %v1136
        %v1260 = vunpack.c.h.b16 %v1136
        %v1261 = vunpack.c.l.b16 %v1137
        %v1262 = vunpack.c.h.b16 %v1137
        %v1263 = vunpack.c.l.b16 %v1138
        %v1264 = vunpack.c.h.b16 %v1138
        %v1265 = vunpack.c.l.b16 %v1139
        %v1266 = vunpack.c.h.b16 %v1139
        %v1267 = vunpack.c.l.b16 %v1140
        %v1268 = vunpack.c.h.b16 %v1140
        %v1269 = vunpack.c.l.b16 %v1141
        %v1270 = vunpack.c.h.b16 %v1141
        %v1271 = vunpack.c.l.b16 %v1142
        %v1272 = vunpack.c.h.b16 %v1142
        %v1273 = vunpack.c.l.b16 %v1143
        %v1274 = vunpack.c.h.b16 %v1143
        %v1275 = vunpack.c.l.b16 %v1144
        %v1276 = vunpack.c.h.b16 %v1144
        %v1277 = vunpack.c.l.b16 %v1145
        %v1278 = vunpack.c.h.b16 %v1145
        %v1279 = vunpack.c.l.b16 %v1146
        %v1280 = vunpack.c.h.b16 %v1146
        %v1281 = vunpack.c.l.b16 %v1147
        %v1282 = vunpack.c.h.b16 %v1147
        %v1283 = vunpack.c.l.b16 %v1148
        %v1284 = vunpack.c.h.b16 %v1148
        %v1285 = vunpack.c.l.b16 %v1149
        %v1286 = vunpack.c.h.b16 %v1149
        %v1287 = vunpack.c.l.b16 %v1150
        %v1288 = vunpack.c.h.b16 %v1150
        %v1289 = vunpack.c.l.b16 %v1151
        %v1290 = vunpack.c.h.b16 %v1151
        %v1291 = vunpack.c.l.b16 %v1152
        %v1292 = vunpack.c.h.b16 %v1152
        %v1293 = vunpack.c.l.b16 %v1153
        %v1294 = vunpack.c.h.b16 %v1153
        %v1295 = vunpack.c.l.b16 %v1154
        %v1296 = vunpack.c.h.b16 %v1154
        %v1297 = vunpack.c.l.b16 %v1155
        %v1298 = vunpack.c.h.b16 %v1155
        %v1299 = vunpack.c.l.b16 %v1156
        %v1300 = vunpack.c.h.b16 %v1156
        %v1301 = vunpack.c.l.b16 %v1157
        %v1302 = vunpack.c.h.b16 %v1157
        %v1303 = vunpack.c.l.b16 %v1158
        %v1304 = vunpack.c.h.b16 %v1158
        %v1305 = vunpack.c.l.b16 %v1159
        %v1306 = vunpack.c.h.b16 %v1159
        %v1307 = vunpack.c.l.b16 %v1160
        %v1308 = vunpack.c.h.b16 %v1160
        %v1309 = vunpack.c.l.b16 %v1161
        %v1310 = vunpack.c.h.b16 %v1161
        %v1311 = vunpack.c.l.b16 %v1162
        %v1312 = vunpack.c.h.b16 %v1162
        %v1313 = vunpack.c.l.b16 %v1163
        %v1314 = vunpack.c.h.b16 %v1163
        %v1315 = vunpack.c.l.b16 %v1164
        %v1316 = vunpack.c.h.b16 %v1164
        %v1317 = vunpack.c.l.b16 %v1165
        %v1318 = vunpack.c.h.b16 %v1165
        %v1319 = vpack.c.b16 %v1225, %v1223
        %v1320 = vpack.c.b16 %v1226, %v1224
        %v1321 = vpack.c.b16 %v1229, %v1227
        %v1322 = vpack.c.b16 %v1230, %v1228
        %v1323 = vpack.c.b16 %v1233, %v1231
        %v1324 = vpack.c.b16 %v1234, %v1232
        %v1325 = vpack.c.b16 %v1237, %v1235
        %v1326 = vpack.c.b16 %v1238, %v1236
        %v1327 = vpack.c.b16 %v1241, %v1239
        %v1328 = vpack.c.b16 %v1242, %v1240
        %v1329 = vpack.c.b16 %v1245, %v1243
        %v1330 = vpack.c.b16 %v1246, %v1244
        %v1331 = vpack.c.b16 %v1249, %v1247
        %v1332 = vpack.c.b16 %v1250, %v1248
        %v1333 = vpack.c.b16 %v1253, %v1251
        %v1334 = vpack.c.b16 %v1254, %v1252
        %v1335 = vpack.c.b16 %v1257, %v1255
        %v1336 = vpack.c.b16 %v1258, %v1256
        %v1337 = vpack.c.b16 %v1261, %v1259
        %v1338 = vpack.c.b16 %v1262, %v1260
        %v1339 = vpack.c.b16 %v1265, %v1263
        %v1340 = vpack.c.b16 %v1266, %v1264
        %v1341 = vpack.c.b16 %v1269, %v1267
        %v1342 = vpack.c.b16 %v1270, %v1268
        %v1343 = vpack.c.b16 %v1273, %v1271
        %v1344 = vpack.c.b16 %v1274, %v1272
        %v1345 = vpack.c.b16 %v1277, %v1275
        %v1346 = vpack.c.b16 %v1278, %v1276
        %v1347 = vpack.c.b16 %v1281, %v1279
        %v1348 = vpack.c.b16 %v1282, %v1280
        %v1349 = vpack.c.b16 %v1285, %v1283
        %v1350 = vpack.c.b16 %v1286, %v1284
        %v1351 = vpack.c.b16 %v1289, %v1287
        %v1352 = vpack.c.b16 %v1290, %v1288
        %v1353 = vpack.c.b16 %v1293, %v1291
        %v1354 = vpack.c.b16 %v1294, %v1292
        %v1355 = vpack.c.b16 %v1297, %v1295
        %v1356 = vpack.c.b16 %v1298, %v1296
        %v1357 = vpack.c.b16 %v1301, %v1299
        %v1358 = vpack.c.b16 %v1302, %v1300
        %v1359 = vpack.c.b16 %v1305, %v1303
        %v1360 = vpack.c.b16 %v1306, %v1304
        %v1361 = vpack.c.b16 %v1309, %v1307
        %v1362 = vpack.c.b16 %v1310, %v1308
        %v1363 = vpack.c.b16 %v1313, %v1311
        %v1364 = vpack.c.b16 %v1314, %v1312
        %v1365 = vpack.c.b16 %v1317, %v1315
        %v1366 = vpack.c.b16 %v1318, %v1316
        %1415 = vmatpush.bf16.msra.mxu0 %v1333
        %1416 = vmatpush.bf16.msra.mxu0 %v1331
        %1417 = vmatpush.bf16.msra.mxu0 %v1329
        %1418 = vmatpush.bf16.msra.mxu0 %v1327
        %1419 = vmatpush.bf16.msra.mxu0 %v1325
        %1420 = vmatpush.bf16.msra.mxu0 %v1323
        %1421 = vmatpush.bf16.msra.mxu0 %v1321
        %1422 = vmatpush.bf16.msra.mxu0 %v1319
        %1423 = vmatmul.bf16.gmra.mxu0 %v1167
        %v1424 = vpop.f32.mrf.mxu0
        %v1425 = vadd.f32 %v1171, %v1424
        %v1426 = vpop.f32.mrf.mxu0
        %v1427 = vadd.f32 %v1171, %v1426
        %1428 = vdwg.mxu0
        %1429 = vmatpush.bf16.msra.mxu0 %v1349
        %1430 = vmatpush.bf16.msra.mxu0 %v1347
        %1431 = vmatpush.bf16.msra.mxu0 %v1345
        %1432 = vmatpush.bf16.msra.mxu0 %v1343
        %1433 = vmatpush.bf16.msra.mxu0 %v1341
        %1434 = vmatpush.bf16.msra.mxu0 %v1339
        %1435 = vmatpush.bf16.msra.mxu0 %v1337
        %1436 = vmatpush.bf16.msra.mxu0 %v1335
        %1437 = vmatmul.bf16.gmra.mxu0 %v1168
        %v1438 = vpop.f32.mrf.mxu0
        %v1439 = vadd.f32 %v1425, %v1438
        %v1440 = vpop.f32.mrf.mxu0
        %v1441 = vadd.f32 %v1427, %v1440
        %1442 = vdwg.mxu0
        %1443 = vmatpush.bf16.msra.mxu0 %v1365
        %1444 = vmatpush.bf16.msra.mxu0 %v1363
        %1445 = vmatpush.bf16.msra.mxu0 %v1361
        %1446 = vmatpush.bf16.msra.mxu0 %v1359
        %1447 = vmatpush.bf16.msra.mxu0 %v1357
        %1448 = vmatpush.bf16.msra.mxu0 %v1355
        %1449 = vmatpush.bf16.msra.mxu0 %v1353
        %1450 = vmatpush.bf16.msra.mxu0 %v1351
        %1451 = vmatmul.bf16.gmra.mxu0 %v1169
        %v1452 = vpop.f32.mrf.mxu0
        %v1453 = vadd.f32 %v1439, %v1452
        %v1454 = vpop.f32.mrf.mxu0
        %v1455 = vadd.f32 %v1441, %v1454
        %1456 = vdwg.mxu0
        %1457 = vmatpush.bf16.msra.mxu0 %v1334
        %1458 = vmatpush.bf16.msra.mxu0 %v1332
        %1459 = vmatpush.bf16.msra.mxu0 %v1330
        %1460 = vmatpush.bf16.msra.mxu0 %v1328
        %1461 = vmatpush.bf16.msra.mxu0 %v1326
        %1462 = vmatpush.bf16.msra.mxu0 %v1324
        %1463 = vmatpush.bf16.msra.mxu0 %v1322
        %1464 = vmatpush.bf16.msra.mxu0 %v1320
        %1465 = vmatmul.bf16.gmra.mxu0 %v1167
        %v1466 = vpop.f32.mrf.mxu0
        %v1467 = vadd.f32 %v1172, %v1466
        %v1468 = vpop.f32.mrf.mxu0
        %v1469 = vadd.f32 %v1172, %v1468
        %1470 = vdwg.mxu0
        %1471 = vmatpush.bf16.msra.mxu0 %v1350
        %1472 = vmatpush.bf16.msra.mxu0 %v1348
        %1473 = vmatpush.bf16.msra.mxu0 %v1346
        %1474 = vmatpush.bf16.msra.mxu0 %v1344
        %1475 = vmatpush.bf16.msra.mxu0 %v1342
        %1476 = vmatpush.bf16.msra.mxu0 %v1340
        %1477 = vmatpush.bf16.msra.mxu0 %v1338
        %1478 = vmatpush.bf16.msra.mxu0 %v1336
        %1479 = vmatmul.bf16.gmra.mxu0 %v1168
        %v1480 = vpop.f32.mrf.mxu0
        %v1481 = vadd.f32 %v1467, %v1480
        %v1482 = vpop.f32.mrf.mxu0
        %v1483 = vadd.f32 %v1469, %v1482
        %1484 = vdwg.mxu0
        %1485 = vmatpush.bf16.msra.mxu0 %v1366
        %1486 = vmatpush.bf16.msra.mxu0 %v1364
        %1487 = vmatpush.bf16.msra.mxu0 %v1362
        %1488 = vmatpush.bf16.msra.mxu0 %v1360
        %1489 = vmatpush.bf16.msra.mxu0 %v1358
        %1490 = vmatpush.bf16.msra.mxu0 %v1356
        %1491 = vmatpush.bf16.msra.mxu0 %v1354
        %1492 = vmatpush.bf16.msra.mxu0 %v1352
        %1493 = vmatmul.bf16.gmra.mxu0 %v1169
        %v1494 = vpop.f32.mrf.mxu0
        %v1495 = vadd.f32 %v1481, %v1494
        %v1496 = vpop.f32.mrf.mxu0
        %v1497 = vadd.f32 %v1483, %v1496
        %1498 = vdwg.mxu0
        %v1499 = vmul.f32 %v1453, 0.2
        %v1500 = vmul.f32 %v1495, 0.2
        %v1501 = vmul.f32 %v1455, 0.2
        %v1502 = vmul.f32 %v1497, 0.2
        %v1503 = vmax.f32 %v1453, %v1499
        %v1504 = vmax.f32 %v1495, %v1500
        %v1505 = vmax.f32 %v1455, %v1501
        %v1506 = vmax.f32 %v1497, %v1502
        %v1507 = vld [vmem:[#allocation10] sm:$0xff]
        %v1508 = vld [vmem:[#allocation10 + $0x8] sm:$0xff]
        %v1509 = vld [vmem:[#allocation10 + $0x10] sm:$0xff]
        %v1510 = vld [vmem:[#allocation10 + $0x18] sm:$0xff]
        %v1511 = vld [vmem:[#allocation10 + $0x20] sm:$0xff]
        %v1512 = vld [vmem:[#allocation10 + $0x28] sm:$0xff]
        %v1513 = vld [vmem:[#allocation10 + $0x30] sm:$0xff]
        %v1514 = vld [vmem:[#allocation10 + $0x38] sm:$0xff]
        %v1515 = vld [vmem:[#allocation10 + $0x40] sm:$0xff]
        %v1516 = vld [vmem:[#allocation10 + $0x48] sm:$0xff]
        %v1517 = vld [vmem:[#allocation10 + $0x50] sm:$0xff]
        %v1518 = vld [vmem:[#allocation10 + $0x58] sm:$0xff]
        %v1519 = vld [vmem:[#allocation10 + $0x60] sm:$0xff]
        %v1520 = vld [vmem:[#allocation10 + $0x68] sm:$0xff]
        %v1521 = vld [vmem:[#allocation10 + $0x70] sm:$0xff]
        %v1522 = vld [vmem:[#allocation10 + $0x78] sm:$0xff]
        %v1523 = vld [vmem:[#allocation10 + $0x80] sm:$0xff]
        %v1524 = vld [vmem:[#allocation10 + $0x88] sm:$0xff]
        %v1525 = vld [vmem:[#allocation10 + $0x90] sm:$0xff]
        %v1526 = vld [vmem:[#allocation10 + $0x98] sm:$0xff]
        %v1527 = vld [vmem:[#allocation10 + $0xa0] sm:$0xff]
        %v1528 = vld [vmem:[#allocation10 + $0xa8] sm:$0xff]
        %v1529 = vld [vmem:[#allocation10 + $0xb0] sm:$0xff]
        %v1530 = vld [vmem:[#allocation10 + $0xb8] sm:$0xff]
        %v1531 = vld [vmem:[#allocation10 + $0xc0] sm:$0xff]
        %v1532 = vld [vmem:[#allocation10 + $0xc8] sm:$0xff]
        %v1533 = vld [vmem:[#allocation10 + $0xd0] sm:$0xff]
        %v1534 = vld [vmem:[#allocation10 + $0xd8] sm:$0xff]
        %v1535 = vld [vmem:[#allocation10 + $0xe0] sm:$0xff]
        %v1536 = vld [vmem:[#allocation10 + $0xe8] sm:$0xff]
        %v1537 = vld [vmem:[#allocation10 + $0xf0] sm:$0xff]
        %v1538 = vld [vmem:[#allocation10 + $0xf8] sm:$0xff]
        %v1539 = vld [vmem:[#allocation10 + $0x100] sm:$0xff]
        %v1540 = vld [vmem:[#allocation10 + $0x108] sm:$0xff]
        %v1541 = vld [vmem:[#allocation10 + $0x110] sm:$0xff]
        %v1542 = vld [vmem:[#allocation10 + $0x118] sm:$0xff]
        %v1543 = vld [vmem:[#allocation10 + $0x120] sm:$0xff]
        %v1544 = vld [vmem:[#allocation10 + $0x128] sm:$0xff]
        %v1545 = vld [vmem:[#allocation10 + $0x130] sm:$0xff]
        %v1546 = vld [vmem:[#allocation10 + $0x138] sm:$0xff]
        %v1547 = vld [vmem:[#allocation10 + $0x140] sm:$0xff]
        %v1548 = vld [vmem:[#allocation10 + $0x148] sm:$0xff]
        %v1549 = vld [vmem:[#allocation10 + $0x150] sm:$0xff]
        %v1550 = vld [vmem:[#allocation10 + $0x158] sm:$0xff]
        %v1551 = vld [vmem:[#allocation10 + $0x160] sm:$0xff]
        %v1552 = vld [vmem:[#allocation10 + $0x168] sm:$0xff]
        %v1553 = vld [vmem:[#allocation10 + $0x170] sm:$0xff]
        %v1554 = vld [vmem:[#allocation10 + $0x178] sm:$0xff]
        %v1555 = vld [vmem:[#allocation10 + $0x180] sm:$0xff]
        %v1556 = vld [vmem:[#allocation10 + $0x188] sm:$0xff]
        %v1557 = vld [vmem:[#allocation10 + $0x190] sm:$0xff]
        %v1558 = vld [vmem:[#allocation10 + $0x198] sm:$0xff]
        %v1559 = vld [vmem:[#allocation10 + $0x1a0] sm:$0xff]
        %v1560 = vld [vmem:[#allocation10 + $0x1a8] sm:$0xff]
        %v1561 = vld [vmem:[#allocation10 + $0x1b0] sm:$0xff]
        %v1562 = vld [vmem:[#allocation10 + $0x1b8] sm:$0xff]
        %v1563 = vld [vmem:[#allocation10 + $0x1c0] sm:$0xff]
        %v1564 = vld [vmem:[#allocation10 + $0x1c8] sm:$0xff]
        %v1565 = vld [vmem:[#allocation10 + $0x1d0] sm:$0xff]
        %v1566 = vld [vmem:[#allocation10 + $0x1d8] sm:$0xff]
        %v1567 = vld [vmem:[#allocation10 + $0x1e0] sm:$0xff]
        %v1568 = vld [vmem:[#allocation10 + $0x1e8] sm:$0xff]
        %v1569 = vld [vmem:[#allocation10 + $0x1f0] sm:$0xff]
        %v1570 = vld [vmem:[#allocation10 + $0x1f8] sm:$0xff]
        %v1571 = vld [vmem:[%s5] sm:$0xf]
        %v1572 = vpack.c.bf16 %v1505, %v1503
        %v1573 = vpack.c.bf16 %v1506, %v1504
        %v1575 = vperm.slane %v1571, 0
        %v1576 = vperm.slane %v1571, 1
        %v1577 = vperm.slane %v1571, 2
        %v1578 = vperm.slane %v1571, 3
        %v1647 = vunpack.c.l.b16 %v1507
        %v1648 = vunpack.c.h.b16 %v1507
        %v1649 = vunpack.c.l.b16 %v1508
        %v1650 = vunpack.c.h.b16 %v1508
        %v1651 = vunpack.c.l.b16 %v1509
        %v1652 = vunpack.c.h.b16 %v1509
        %v1653 = vunpack.c.l.b16 %v1510
        %v1654 = vunpack.c.h.b16 %v1510
        %v1655 = vunpack.c.l.b16 %v1511
        %v1656 = vunpack.c.h.b16 %v1511
        %v1657 = vunpack.c.l.b16 %v1512
        %v1658 = vunpack.c.h.b16 %v1512
        %v1659 = vunpack.c.l.b16 %v1513
        %v1660 = vunpack.c.h.b16 %v1513
        %v1661 = vunpack.c.l.b16 %v1514
        %v1662 = vunpack.c.h.b16 %v1514
        %v1663 = vunpack.c.l.b16 %v1515
        %v1664 = vunpack.c.h.b16 %v1515
        %v1665 = vunpack.c.l.b16 %v1516
        %v1666 = vunpack.c.h.b16 %v1516
        %v1667 = vunpack.c.l.b16 %v1517
        %v1668 = vunpack.c.h.b16 %v1517
        %v1669 = vunpack.c.l.b16 %v1518
        %v1670 = vunpack.c.h.b16 %v1518
        %v1671 = vunpack.c.l.b16 %v1519
        %v1672 = vunpack.c.h.b16 %v1519
        %v1673 = vunpack.c.l.b16 %v1520
        %v1674 = vunpack.c.h.b16 %v1520
        %v1675 = vunpack.c.l.b16 %v1521
        %v1676 = vunpack.c.h.b16 %v1521
        %v1677 = vunpack.c.l.b16 %v1522
        %v1678 = vunpack.c.h.b16 %v1522
        %v1679 = vunpack.c.l.b16 %v1523
        %v1680 = vunpack.c.h.b16 %v1523
        %v1681 = vunpack.c.l.b16 %v1524
        %v1682 = vunpack.c.h.b16 %v1524
        %v1683 = vunpack.c.l.b16 %v1525
        %v1684 = vunpack.c.h.b16 %v1525
        %v1685 = vunpack.c.l.b16 %v1526
        %v1686 = vunpack.c.h.b16 %v1526
        %v1687 = vunpack.c.l.b16 %v1527
        %v1688 = vunpack.c.h.b16 %v1527
        %v1689 = vunpack.c.l.b16 %v1528
        %v1690 = vunpack.c.h.b16 %v1528
        %v1691 = vunpack.c.l.b16 %v1529
        %v1692 = vunpack.c.h.b16 %v1529
        %v1693 = vunpack.c.l.b16 %v1530
        %v1694 = vunpack.c.h.b16 %v1530
        %v1695 = vunpack.c.l.b16 %v1531
        %v1696 = vunpack.c.h.b16 %v1531
        %v1697 = vunpack.c.l.b16 %v1532
        %v1698 = vunpack.c.h.b16 %v1532
        %v1699 = vunpack.c.l.b16 %v1533
        %v1700 = vunpack.c.h.b16 %v1533
        %v1701 = vunpack.c.l.b16 %v1534
        %v1702 = vunpack.c.h.b16 %v1534
        %v1703 = vunpack.c.l.b16 %v1535
        %v1704 = vunpack.c.h.b16 %v1535
        %v1705 = vunpack.c.l.b16 %v1536
        %v1706 = vunpack.c.h.b16 %v1536
        %v1707 = vunpack.c.l.b16 %v1537
        %v1708 = vunpack.c.h.b16 %v1537
        %v1709 = vunpack.c.l.b16 %v1538
        %v1710 = vunpack.c.h.b16 %v1538
        %v1711 = vunpack.c.l.b16 %v1539
        %v1712 = vunpack.c.h.b16 %v1539
        %v1713 = vunpack.c.l.b16 %v1540
        %v1714 = vunpack.c.h.b16 %v1540
        %v1715 = vunpack.c.l.b16 %v1541
        %v1716 = vunpack.c.h.b16 %v1541
        %v1717 = vunpack.c.l.b16 %v1542
        %v1718 = vunpack.c.h.b16 %v1542
        %v1719 = vunpack.c.l.b16 %v1543
        %v1720 = vunpack.c.h.b16 %v1543
        %v1721 = vunpack.c.l.b16 %v1544
        %v1722 = vunpack.c.h.b16 %v1544
        %v1723 = vunpack.c.l.b16 %v1545
        %v1724 = vunpack.c.h.b16 %v1545
        %v1725 = vunpack.c.l.b16 %v1546
        %v1726 = vunpack.c.h.b16 %v1546
        %v1727 = vunpack.c.l.b16 %v1547
        %v1728 = vunpack.c.h.b16 %v1547
        %v1729 = vunpack.c.l.b16 %v1548
        %v1730 = vunpack.c.h.b16 %v1548
        %v1731 = vunpack.c.l.b16 %v1549
        %v1732 = vunpack.c.h.b16 %v1549
        %v1733 = vunpack.c.l.b16 %v1550
        %v1734 = vunpack.c.h.b16 %v1550
        %v1735 = vunpack.c.l.b16 %v1551
        %v1736 = vunpack.c.h.b16 %v1551
        %v1737 = vunpack.c.l.b16 %v1552
        %v1738 = vunpack.c.h.b16 %v1552
        %v1739 = vunpack.c.l.b16 %v1553
        %v1740 = vunpack.c.h.b16 %v1553
        %v1741 = vunpack.c.l.b16 %v1554
        %v1742 = vunpack.c.h.b16 %v1554
        %v1743 = vunpack.c.l.b16 %v1555
        %v1744 = vunpack.c.h.b16 %v1555
        %v1745 = vunpack.c.l.b16 %v1556
        %v1746 = vunpack.c.h.b16 %v1556
        %v1747 = vunpack.c.l.b16 %v1557
        %v1748 = vunpack.c.h.b16 %v1557
        %v1749 = vunpack.c.l.b16 %v1558
        %v1750 = vunpack.c.h.b16 %v1558
        %v1751 = vunpack.c.l.b16 %v1559
        %v1752 = vunpack.c.h.b16 %v1559
        %v1753 = vunpack.c.l.b16 %v1560
        %v1754 = vunpack.c.h.b16 %v1560
        %v1755 = vunpack.c.l.b16 %v1561
        %v1756 = vunpack.c.h.b16 %v1561
        %v1757 = vunpack.c.l.b16 %v1562
        %v1758 = vunpack.c.h.b16 %v1562
        %v1759 = vunpack.c.l.b16 %v1563
        %v1760 = vunpack.c.h.b16 %v1563
        %v1761 = vunpack.c.l.b16 %v1564
        %v1762 = vunpack.c.h.b16 %v1564
        %v1763 = vunpack.c.l.b16 %v1565
        %v1764 = vunpack.c.h.b16 %v1565
        %v1765 = vunpack.c.l.b16 %v1566
        %v1766 = vunpack.c.h.b16 %v1566
        %v1767 = vunpack.c.l.b16 %v1567
        %v1768 = vunpack.c.h.b16 %v1567
        %v1769 = vunpack.c.l.b16 %v1568
        %v1770 = vunpack.c.h.b16 %v1568
        %v1771 = vunpack.c.l.b16 %v1569
        %v1772 = vunpack.c.h.b16 %v1569
        %v1773 = vunpack.c.l.b16 %v1570
        %v1774 = vunpack.c.h.b16 %v1570
        %v1775 = vpack.c.b16 %v1651, %v1647
        %v1776 = vpack.c.b16 %v1652, %v1648
        %v1777 = vpack.c.b16 %v1653, %v1649
        %v1778 = vpack.c.b16 %v1654, %v1650
        %v1779 = vpack.c.b16 %v1659, %v1655
        %v1780 = vpack.c.b16 %v1660, %v1656
        %v1781 = vpack.c.b16 %v1661, %v1657
        %v1782 = vpack.c.b16 %v1662, %v1658
        %v1783 = vpack.c.b16 %v1667, %v1663
        %v1784 = vpack.c.b16 %v1668, %v1664
        %v1785 = vpack.c.b16 %v1669, %v1665
        %v1786 = vpack.c.b16 %v1670, %v1666
        %v1787 = vpack.c.b16 %v1675, %v1671
        %v1788 = vpack.c.b16 %v1676, %v1672
        %v1789 = vpack.c.b16 %v1677, %v1673
        %v1790 = vpack.c.b16 %v1678, %v1674
        %v1791 = vpack.c.b16 %v1683, %v1679
        %v1792 = vpack.c.b16 %v1684, %v1680
        %v1793 = vpack.c.b16 %v1685, %v1681
        %v1794 = vpack.c.b16 %v1686, %v1682
        %v1795 = vpack.c.b16 %v1691, %v1687
        %v1796 = vpack.c.b16 %v1692, %v1688
        %v1797 = vpack.c.b16 %v1693, %v1689
        %v1798 = vpack.c.b16 %v1694, %v1690
        %v1799 = vpack.c.b16 %v1699, %v1695
        %v1800 = vpack.c.b16 %v1700, %v1696
        %v1801 = vpack.c.b16 %v1701, %v1697
        %v1802 = vpack.c.b16 %v1702, %v1698
        %v1803 = vpack.c.b16 %v1707, %v1703
        %v1804 = vpack.c.b16 %v1708, %v1704
        %v1805 = vpack.c.b16 %v1709, %v1705
        %v1806 = vpack.c.b16 %v1710, %v1706
        %v1807 = vpack.c.b16 %v1715, %v1711
        %v1808 = vpack.c.b16 %v1716, %v1712
        %v1809 = vpack.c.b16 %v1717, %v1713
        %v1810 = vpack.c.b16 %v1718, %v1714
        %v1811 = vpack.c.b16 %v1723, %v1719
        %v1812 = vpack.c.b16 %v1724, %v1720
        %v1813 = vpack.c.b16 %v1725, %v1721
        %v1814 = vpack.c.b16 %v1726, %v1722
        %v1815 = vpack.c.b16 %v1731, %v1727
        %v1816 = vpack.c.b16 %v1732, %v1728
        %v1817 = vpack.c.b16 %v1733, %v1729
        %v1818 = vpack.c.b16 %v1734, %v1730
        %v1819 = vpack.c.b16 %v1739, %v1735
        %v1820 = vpack.c.b16 %v1740, %v1736
        %v1821 = vpack.c.b16 %v1741, %v1737
        %v1822 = vpack.c.b16 %v1742, %v1738
        %v1823 = vpack.c.b16 %v1747, %v1743
        %v1824 = vpack.c.b16 %v1748, %v1744
        %v1825 = vpack.c.b16 %v1749, %v1745
        %v1826 = vpack.c.b16 %v1750, %v1746
        %v1827 = vpack.c.b16 %v1755, %v1751
        %v1828 = vpack.c.b16 %v1756, %v1752
        %v1829 = vpack.c.b16 %v1757, %v1753
        %v1830 = vpack.c.b16 %v1758, %v1754
        %v1831 = vpack.c.b16 %v1763, %v1759
        %v1832 = vpack.c.b16 %v1764, %v1760
        %v1833 = vpack.c.b16 %v1765, %v1761
        %v1834 = vpack.c.b16 %v1766, %v1762
        %v1835 = vpack.c.b16 %v1771, %v1767
        %v1836 = vpack.c.b16 %v1772, %v1768
        %v1837 = vpack.c.b16 %v1773, %v1769
        %v1838 = vpack.c.b16 %v1774, %v1770
        %1903 = vmatpush.bf16.msra.mxu0 %v1803
        %1904 = vmatpush.bf16.msra.mxu0 %v1799
        %1905 = vmatpush.bf16.msra.mxu0 %v1795
        %1906 = vmatpush.bf16.msra.mxu0 %v1791
        %1907 = vmatpush.bf16.msra.mxu0 %v1787
        %1908 = vmatpush.bf16.msra.mxu0 %v1783
        %1909 = vmatpush.bf16.msra.mxu0 %v1779
        %1910 = vmatpush.bf16.msra.mxu0 %v1775
        %1911 = vmatmul.bf16.gmra.mxu0 %v1572
        %v1912 = vpop.f32.mrf.mxu0
        %v1913 = vadd.f32 %v1575, %v1912
        %v1914 = vpop.f32.mrf.mxu0
        %v1915 = vadd.f32 %v1575, %v1914
        %1916 = vdwg.mxu0
        %1917 = vmatpush.bf16.msra.mxu0 %v1835
        %1918 = vmatpush.bf16.msra.mxu0 %v1831
        %1919 = vmatpush.bf16.msra.mxu0 %v1827
        %1920 = vmatpush.bf16.msra.mxu0 %v1823
        %1921 = vmatpush.bf16.msra.mxu0 %v1819
        %1922 = vmatpush.bf16.msra.mxu0 %v1815
        %1923 = vmatpush.bf16.msra.mxu0 %v1811
        %1924 = vmatpush.bf16.msra.mxu0 %v1807
        %1925 = vmatmul.bf16.gmra.mxu0 %v1573
        %v1926 = vpop.f32.mrf.mxu0
        %v1927 = vadd.f32 %v1913, %v1926
        %v1928 = vpop.f32.mrf.mxu0
        %v1929 = vadd.f32 %v1915, %v1928
        %1930 = vdwg.mxu0
        %1931 = vmatpush.bf16.msra.mxu0 %v1804
        %1932 = vmatpush.bf16.msra.mxu0 %v1800
        %1933 = vmatpush.bf16.msra.mxu0 %v1796
        %1934 = vmatpush.bf16.msra.mxu0 %v1792
        %1935 = vmatpush.bf16.msra.mxu0 %v1788
        %1936 = vmatpush.bf16.msra.mxu0 %v1784
        %1937 = vmatpush.bf16.msra.mxu0 %v1780
        %1938 = vmatpush.bf16.msra.mxu0 %v1776
        %1939 = vmatmul.bf16.gmra.mxu0 %v1572
        %v1940 = vpop.f32.mrf.mxu0
        %v1941 = vadd.f32 %v1576, %v1940
        %v1942 = vpop.f32.mrf.mxu0
        %v1943 = vadd.f32 %v1576, %v1942
        %1944 = vdwg.mxu0
        %1945 = vmatpush.bf16.msra.mxu0 %v1836
        %1946 = vmatpush.bf16.msra.mxu0 %v1832
        %1947 = vmatpush.bf16.msra.mxu0 %v1828
        %1948 = vmatpush.bf16.msra.mxu0 %v1824
        %1949 = vmatpush.bf16.msra.mxu0 %v1820
        %1950 = vmatpush.bf16.msra.mxu0 %v1816
        %1951 = vmatpush.bf16.msra.mxu0 %v1812
        %1952 = vmatpush.bf16.msra.mxu0 %v1808
        %1953 = vmatmul.bf16.gmra.mxu0 %v1573
        %v1954 = vpop.f32.mrf.mxu0
        %v1955 = vadd.f32 %v1941, %v1954
        %v1956 = vpop.f32.mrf.mxu0
        %v1957 = vadd.f32 %v1943, %v1956
        %1958 = vdwg.mxu0
        %1959 = vmatpush.bf16.msra.mxu0 %v1805
        %1960 = vmatpush.bf16.msra.mxu0 %v1801
        %1961 = vmatpush.bf16.msra.mxu0 %v1797
        %1962 = vmatpush.bf16.msra.mxu0 %v1793
        %1963 = vmatpush.bf16.msra.mxu0 %v1789
        %1964 = vmatpush.bf16.msra.mxu0 %v1785
        %1965 = vmatpush.bf16.msra.mxu0 %v1781
        %1966 = vmatpush.bf16.msra.mxu0 %v1777
        %1967 = vmatmul.bf16.gmra.mxu0 %v1572
        %v1968 = vpop.f32.mrf.mxu0
        %v1969 = vadd.f32 %v1577, %v1968
        %v1970 = vpop.f32.mrf.mxu0
        %v1971 = vadd.f32 %v1577, %v1970
        %1972 = vdwg.mxu0
        %1973 = vmatpush.bf16.msra.mxu0 %v1837
        %1974 = vmatpush.bf16.msra.mxu0 %v1833
        %1975 = vmatpush.bf16.msra.mxu0 %v1829
        %1976 = vmatpush.bf16.msra.mxu0 %v1825
        %1977 = vmatpush.bf16.msra.mxu0 %v1821
        %1978 = vmatpush.bf16.msra.mxu0 %v1817
        %1979 = vmatpush.bf16.msra.mxu0 %v1813
        %1980 = vmatpush.bf16.msra.mxu0 %v1809
        %1981 = vmatmul.bf16.gmra.mxu0 %v1573
        %v1982 = vpop.f32.mrf.mxu0
        %v1983 = vadd.f32 %v1969, %v1982
        %v1984 = vpop.f32.mrf.mxu0
        %v1985 = vadd.f32 %v1971, %v1984
        %1986 = vdwg.mxu0
        %1987 = vmatpush.bf16.msra.mxu0 %v1806
        %1988 = vmatpush.bf16.msra.mxu0 %v1802
        %1989 = vmatpush.bf16.msra.mxu0 %v1798
        %1990 = vmatpush.bf16.msra.mxu0 %v1794
        %1991 = vmatpush.bf16.msra.mxu0 %v1790
        %1992 = vmatpush.bf16.msra.mxu0 %v1786
        %1993 = vmatpush.bf16.msra.mxu0 %v1782
        %1994 = vmatpush.bf16.msra.mxu0 %v1778
        %1995 = vmatmul.bf16.gmra.mxu0 %v1572
        %v1996 = vpop.f32.mrf.mxu0
        %v1997 = vadd.f32 %v1578, %v1996
        %v1998 = vpop.f32.mrf.mxu0
        %v1999 = vadd.f32 %v1578, %v1998
        %2000 = vdwg.mxu0
        %2001 = vmatpush.bf16.msra.mxu0 %v1838
        %2002 = vmatpush.bf16.msra.mxu0 %v1834
        %2003 = vmatpush.bf16.msra.mxu0 %v1830
        %2004 = vmatpush.bf16.msra.mxu0 %v1826
        %2005 = vmatpush.bf16.msra.mxu0 %v1822
        %2006 = vmatpush.bf16.msra.mxu0 %v1818
        %2007 = vmatpush.bf16.msra.mxu0 %v1814
        %2008 = vmatpush.bf16.msra.mxu0 %v1810
        %2009 = vmatmul.bf16.gmra.mxu0 %v1573
        %v2010 = vpop.f32.mrf.mxu0
        %v2011 = vadd.f32 %v1997, %v2010
        %v2012 = vpop.f32.mrf.mxu0
        %v2013 = vadd.f32 %v1999, %v2012
        %2014 = vdwg.mxu0
        %v2015 = vmul.f32 %v1927, 0.2
        %v2016 = vmul.f32 %v1955, 0.2
        %v2017 = vmul.f32 %v1983, 0.2
        %v2018 = vmul.f32 %v2011, 0.2
        %v2019 = vmul.f32 %v1929, 0.2
        %v2020 = vmul.f32 %v1957, 0.2
        %v2021 = vmul.f32 %v1985, 0.2
        %v2022 = vmul.f32 %v2013, 0.2
        %v2023 = vmax.f32 %v1927, %v2015
        %v2024 = vmax.f32 %v1955, %v2016
        %v2025 = vmax.f32 %v1983, %v2017
        %v2026 = vmax.f32 %v2011, %v2018
        %v2027 = vmax.f32 %v1929, %v2019
        %v2028 = vmax.f32 %v1957, %v2020
        %v2029 = vmax.f32 %v1985, %v2021
        %v2030 = vmax.f32 %v2013, %v2022
        %v2031 = vld [vmem:[#allocation11] sm:$0xff]
        %v2032 = vld [vmem:[#allocation11 + $0x8] sm:$0xff]
        %v2033 = vld [vmem:[#allocation11 + $0x10] sm:$0xff]
        %v2034 = vld [vmem:[#allocation11 + $0x18] sm:$0xff]
        %v2035 = vld [vmem:[#allocation11 + $0x20] sm:$0xff]
        %v2036 = vld [vmem:[#allocation11 + $0x28] sm:$0xff]
        %v2037 = vld [vmem:[#allocation11 + $0x30] sm:$0xff]
        %v2038 = vld [vmem:[#allocation11 + $0x38] sm:$0xff]
        %v2039 = vld [vmem:[#allocation11 + $0x40] sm:$0xff]
        %v2040 = vld [vmem:[#allocation11 + $0x48] sm:$0xff]
        %v2041 = vld [vmem:[#allocation11 + $0x50] sm:$0xff]
        %v2042 = vld [vmem:[#allocation11 + $0x58] sm:$0xff]
        %v2043 = vld [vmem:[#allocation11 + $0x60] sm:$0xff]
        %v2044 = vld [vmem:[#allocation11 + $0x68] sm:$0xff]
        %v2045 = vld [vmem:[#allocation11 + $0x70] sm:$0xff]
        %v2046 = vld [vmem:[#allocation11 + $0x78] sm:$0xff]
        %v2047 = vld [vmem:[#allocation11 + $0x80] sm:$0xff]
        %v2048 = vld [vmem:[#allocation11 + $0x88] sm:$0xff]
        %v2049 = vld [vmem:[#allocation11 + $0x90] sm:$0xff]
        %v2050 = vld [vmem:[#allocation11 + $0x98] sm:$0xff]
        %v2051 = vld [vmem:[#allocation11 + $0xa0] sm:$0xff]
        %v2052 = vld [vmem:[#allocation11 + $0xa8] sm:$0xff]
        %v2053 = vld [vmem:[#allocation11 + $0xb0] sm:$0xff]
        %v2054 = vld [vmem:[#allocation11 + $0xb8] sm:$0xff]
        %v2055 = vld [vmem:[#allocation11 + $0xc0] sm:$0xff]
        %v2056 = vld [vmem:[#allocation11 + $0xc8] sm:$0xff]
        %v2057 = vld [vmem:[#allocation11 + $0xd0] sm:$0xff]
        %v2058 = vld [vmem:[#allocation11 + $0xd8] sm:$0xff]
        %v2059 = vld [vmem:[#allocation11 + $0xe0] sm:$0xff]
        %v2060 = vld [vmem:[#allocation11 + $0xe8] sm:$0xff]
        %v2061 = vld [vmem:[#allocation11 + $0xf0] sm:$0xff]
        %v2062 = vld [vmem:[#allocation11 + $0xf8] sm:$0xff]
        %v2063 = vld [vmem:[#allocation11 + $0x100] sm:$0xff]
        %v2064 = vld [vmem:[#allocation11 + $0x108] sm:$0xff]
        %v2065 = vld [vmem:[#allocation11 + $0x110] sm:$0xff]
        %v2066 = vld [vmem:[#allocation11 + $0x118] sm:$0xff]
        %v2067 = vld [vmem:[#allocation11 + $0x120] sm:$0xff]
        %v2068 = vld [vmem:[#allocation11 + $0x128] sm:$0xff]
        %v2069 = vld [vmem:[#allocation11 + $0x130] sm:$0xff]
        %v2070 = vld [vmem:[#allocation11 + $0x138] sm:$0xff]
        %v2071 = vld [vmem:[#allocation11 + $0x140] sm:$0xff]
        %v2072 = vld [vmem:[#allocation11 + $0x148] sm:$0xff]
        %v2073 = vld [vmem:[#allocation11 + $0x150] sm:$0xff]
        %v2074 = vld [vmem:[#allocation11 + $0x158] sm:$0xff]
        %v2075 = vld [vmem:[#allocation11 + $0x160] sm:$0xff]
        %v2076 = vld [vmem:[#allocation11 + $0x168] sm:$0xff]
        %v2077 = vld [vmem:[#allocation11 + $0x170] sm:$0xff]
        %v2078 = vld [vmem:[#allocation11 + $0x178] sm:$0xff]
        %v2079 = vld [vmem:[#allocation11 + $0x180] sm:$0xff]
        %v2080 = vld [vmem:[#allocation11 + $0x188] sm:$0xff]
        %v2081 = vld [vmem:[#allocation11 + $0x190] sm:$0xff]
        %v2082 = vld [vmem:[#allocation11 + $0x198] sm:$0xff]
        %v2083 = vld [vmem:[#allocation11 + $0x1a0] sm:$0xff]
        %v2084 = vld [vmem:[#allocation11 + $0x1a8] sm:$0xff]
        %v2085 = vld [vmem:[#allocation11 + $0x1b0] sm:$0xff]
        %v2086 = vld [vmem:[#allocation11 + $0x1b8] sm:$0xff]
        %v2087 = vld [vmem:[#allocation11 + $0x1c0] sm:$0xff]
        %v2088 = vld [vmem:[#allocation11 + $0x1c8] sm:$0xff]
        %v2089 = vld [vmem:[#allocation11 + $0x1d0] sm:$0xff]
        %v2090 = vld [vmem:[#allocation11 + $0x1d8] sm:$0xff]
        %v2091 = vld [vmem:[#allocation11 + $0x1e0] sm:$0xff]
        %v2092 = vld [vmem:[#allocation11 + $0x1e8] sm:$0xff]
        %v2093 = vld [vmem:[#allocation11 + $0x1f0] sm:$0xff]
        %v2094 = vld [vmem:[#allocation11 + $0x1f8] sm:$0xff]
        %v2095 = vld [vmem:[#allocation11 + $0x200] sm:$0xff]
        %v2096 = vld [vmem:[#allocation11 + $0x208] sm:$0xff]
        %v2097 = vld [vmem:[#allocation11 + $0x210] sm:$0xff]
        %v2098 = vld [vmem:[#allocation11 + $0x218] sm:$0xff]
        %v2099 = vld [vmem:[#allocation11 + $0x220] sm:$0xff]
        %v2100 = vld [vmem:[#allocation11 + $0x228] sm:$0xff]
        %v2101 = vld [vmem:[#allocation11 + $0x230] sm:$0xff]
        %v2102 = vld [vmem:[#allocation11 + $0x238] sm:$0xff]
        %v2103 = vld [vmem:[#allocation11 + $0x240] sm:$0xff]
        %v2104 = vld [vmem:[#allocation11 + $0x248] sm:$0xff]
        %v2105 = vld [vmem:[#allocation11 + $0x250] sm:$0xff]
        %v2106 = vld [vmem:[#allocation11 + $0x258] sm:$0xff]
        %v2107 = vld [vmem:[#allocation11 + $0x260] sm:$0xff]
        %v2108 = vld [vmem:[#allocation11 + $0x268] sm:$0xff]
        %v2109 = vld [vmem:[#allocation11 + $0x270] sm:$0xff]
        %v2110 = vld [vmem:[#allocation11 + $0x278] sm:$0xff]
        %v2111 = vld [vmem:[#allocation11 + $0x280] sm:$0xff]
        %v2112 = vld [vmem:[#allocation11 + $0x288] sm:$0xff]
        %v2113 = vld [vmem:[#allocation11 + $0x290] sm:$0xff]
        %v2114 = vld [vmem:[#allocation11 + $0x298] sm:$0xff]
        %v2115 = vld [vmem:[#allocation11 + $0x2a0] sm:$0xff]
        %v2116 = vld [vmem:[#allocation11 + $0x2a8] sm:$0xff]
        %v2117 = vld [vmem:[#allocation11 + $0x2b0] sm:$0xff]
        %v2118 = vld [vmem:[#allocation11 + $0x2b8] sm:$0xff]
        %v2119 = vld [vmem:[#allocation11 + $0x2c0] sm:$0xff]
        %v2120 = vld [vmem:[#allocation11 + $0x2c8] sm:$0xff]
        %v2121 = vld [vmem:[#allocation11 + $0x2d0] sm:$0xff]
        %v2122 = vld [vmem:[#allocation11 + $0x2d8] sm:$0xff]
        %v2123 = vld [vmem:[#allocation11 + $0x2e0] sm:$0xff]
        %v2124 = vld [vmem:[#allocation11 + $0x2e8] sm:$0xff]
        %v2125 = vld [vmem:[#allocation11 + $0x2f0] sm:$0xff]
        %v2126 = vld [vmem:[#allocation11 + $0x2f8] sm:$0xff]
        %v2127 = vld [vmem:[#allocation11 + $0x300] sm:$0xff]
        %v2128 = vld [vmem:[#allocation11 + $0x308] sm:$0xff]
        %v2129 = vld [vmem:[#allocation11 + $0x310] sm:$0xff]
        %v2130 = vld [vmem:[#allocation11 + $0x318] sm:$0xff]
        %v2131 = vld [vmem:[#allocation11 + $0x320] sm:$0xff]
        %v2132 = vld [vmem:[#allocation11 + $0x328] sm:$0xff]
        %v2133 = vld [vmem:[#allocation11 + $0x330] sm:$0xff]
        %v2134 = vld [vmem:[#allocation11 + $0x338] sm:$0xff]
        %v2135 = vld [vmem:[#allocation11 + $0x340] sm:$0xff]
        %v2136 = vld [vmem:[#allocation11 + $0x348] sm:$0xff]
        %v2137 = vld [vmem:[#allocation11 + $0x350] sm:$0xff]
        %v2138 = vld [vmem:[#allocation11 + $0x358] sm:$0xff]
        %v2139 = vld [vmem:[#allocation11 + $0x360] sm:$0xff]
        %v2140 = vld [vmem:[#allocation11 + $0x368] sm:$0xff]
        %v2141 = vld [vmem:[#allocation11 + $0x370] sm:$0xff]
        %v2142 = vld [vmem:[#allocation11 + $0x378] sm:$0xff]
        %v2143 = vld [vmem:[#allocation11 + $0x380] sm:$0xff]
        %v2144 = vld [vmem:[#allocation11 + $0x388] sm:$0xff]
        %v2145 = vld [vmem:[#allocation11 + $0x390] sm:$0xff]
        %v2146 = vld [vmem:[#allocation11 + $0x398] sm:$0xff]
        %v2147 = vld [vmem:[#allocation11 + $0x3a0] sm:$0xff]
        %v2148 = vld [vmem:[#allocation11 + $0x3a8] sm:$0xff]
        %v2149 = vld [vmem:[#allocation11 + $0x3b0] sm:$0xff]
        %v2150 = vld [vmem:[#allocation11 + $0x3b8] sm:$0xff]
        %v2151 = vld [vmem:[#allocation11 + $0x3c0] sm:$0xff]
        %v2152 = vld [vmem:[#allocation11 + $0x3c8] sm:$0xff]
        %v2153 = vld [vmem:[#allocation11 + $0x3d0] sm:$0xff]
        %v2154 = vld [vmem:[#allocation11 + $0x3d8] sm:$0xff]
        %v2155 = vld [vmem:[#allocation11 + $0x3e0] sm:$0xff]
        %v2156 = vld [vmem:[#allocation11 + $0x3e8] sm:$0xff]
        %v2157 = vld [vmem:[#allocation11 + $0x3f0] sm:$0xff]
        %v2158 = vld [vmem:[#allocation11 + $0x3f8] sm:$0xff]
        %v2159 = vld [vmem:[#allocation13] sm:$0xf]
        %v2160 = vpack.c.bf16 %v2027, %v2023
        %v2161 = vpack.c.bf16 %v2028, %v2024
        %v2162 = vpack.c.bf16 %v2029, %v2025
        %v2163 = vpack.c.bf16 %v2030, %v2026
        %v2165 = vperm.slane %v2159, 0
        %v2166 = vperm.slane %v2159, 1
        %v2167 = vperm.slane %v2159, 2
        %v2168 = vperm.slane %v2159, 3
        %v2301 = vunpack.c.l.b16 %v2031
        %v2302 = vunpack.c.h.b16 %v2031
        %v2303 = vunpack.c.l.b16 %v2032
        %v2304 = vunpack.c.h.b16 %v2032
        %v2305 = vunpack.c.l.b16 %v2033
        %v2306 = vunpack.c.h.b16 %v2033
        %v2307 = vunpack.c.l.b16 %v2034
        %v2308 = vunpack.c.h.b16 %v2034
        %v2309 = vunpack.c.l.b16 %v2035
        %v2310 = vunpack.c.h.b16 %v2035
        %v2311 = vunpack.c.l.b16 %v2036
        %v2312 = vunpack.c.h.b16 %v2036
        %v2313 = vunpack.c.l.b16 %v2037
        %v2314 = vunpack.c.h.b16 %v2037
        %v2315 = vunpack.c.l.b16 %v2038
        %v2316 = vunpack.c.h.b16 %v2038
        %v2317 = vunpack.c.l.b16 %v2039
        %v2318 = vunpack.c.h.b16 %v2039
        %v2319 = vunpack.c.l.b16 %v2040
        %v2320 = vunpack.c.h.b16 %v2040
        %v2321 = vunpack.c.l.b16 %v2041
        %v2322 = vunpack.c.h.b16 %v2041
        %v2323 = vunpack.c.l.b16 %v2042
        %v2324 = vunpack.c.h.b16 %v2042
        %v2325 = vunpack.c.l.b16 %v2043
        %v2326 = vunpack.c.h.b16 %v2043
        %v2327 = vunpack.c.l.b16 %v2044
        %v2328 = vunpack.c.h.b16 %v2044
        %v2329 = vunpack.c.l.b16 %v2045
        %v2330 = vunpack.c.h.b16 %v2045
        %v2331 = vunpack.c.l.b16 %v2046
        %v2332 = vunpack.c.h.b16 %v2046
        %v2333 = vunpack.c.l.b16 %v2047
        %v2334 = vunpack.c.h.b16 %v2047
        %v2335 = vunpack.c.l.b16 %v2048
        %v2336 = vunpack.c.h.b16 %v2048
        %v2337 = vunpack.c.l.b16 %v2049
        %v2338 = vunpack.c.h.b16 %v2049
        %v2339 = vunpack.c.l.b16 %v2050
        %v2340 = vunpack.c.h.b16 %v2050
        %v2341 = vunpack.c.l.b16 %v2051
        %v2342 = vunpack.c.h.b16 %v2051
        %v2343 = vunpack.c.l.b16 %v2052
        %v2344 = vunpack.c.h.b16 %v2052
        %v2345 = vunpack.c.l.b16 %v2053
        %v2346 = vunpack.c.h.b16 %v2053
        %v2347 = vunpack.c.l.b16 %v2054
        %v2348 = vunpack.c.h.b16 %v2054
        %v2349 = vunpack.c.l.b16 %v2055
        %v2350 = vunpack.c.h.b16 %v2055
        %v2351 = vunpack.c.l.b16 %v2056
        %v2352 = vunpack.c.h.b16 %v2056
        %v2353 = vunpack.c.l.b16 %v2057
        %v2354 = vunpack.c.h.b16 %v2057
        %v2355 = vunpack.c.l.b16 %v2058
        %v2356 = vunpack.c.h.b16 %v2058
        %v2357 = vunpack.c.l.b16 %v2059
        %v2358 = vunpack.c.h.b16 %v2059
        %v2359 = vunpack.c.l.b16 %v2060
        %v2360 = vunpack.c.h.b16 %v2060
        %v2361 = vunpack.c.l.b16 %v2061
        %v2362 = vunpack.c.h.b16 %v2061
        %v2363 = vunpack.c.l.b16 %v2062
        %v2364 = vunpack.c.h.b16 %v2062
        %v2365 = vunpack.c.l.b16 %v2063
        %v2366 = vunpack.c.h.b16 %v2063
        %v2367 = vunpack.c.l.b16 %v2064
        %v2368 = vunpack.c.h.b16 %v2064
        %v2369 = vunpack.c.l.b16 %v2065
        %v2370 = vunpack.c.h.b16 %v2065
        %v2371 = vunpack.c.l.b16 %v2066
        %v2372 = vunpack.c.h.b16 %v2066
        %v2373 = vunpack.c.l.b16 %v2067
        %v2374 = vunpack.c.h.b16 %v2067
        %v2375 = vunpack.c.l.b16 %v2068
        %v2376 = vunpack.c.h.b16 %v2068
        %v2377 = vunpack.c.l.b16 %v2069
        %v2378 = vunpack.c.h.b16 %v2069
        %v2379 = vunpack.c.l.b16 %v2070
        %v2380 = vunpack.c.h.b16 %v2070
        %v2381 = vunpack.c.l.b16 %v2071
        %v2382 = vunpack.c.h.b16 %v2071
        %v2383 = vunpack.c.l.b16 %v2072
        %v2384 = vunpack.c.h.b16 %v2072
        %v2385 = vunpack.c.l.b16 %v2073
        %v2386 = vunpack.c.h.b16 %v2073
        %v2387 = vunpack.c.l.b16 %v2074
        %v2388 = vunpack.c.h.b16 %v2074
        %v2389 = vunpack.c.l.b16 %v2075
        %v2390 = vunpack.c.h.b16 %v2075
        %v2391 = vunpack.c.l.b16 %v2076
        %v2392 = vunpack.c.h.b16 %v2076
        %v2393 = vunpack.c.l.b16 %v2077
        %v2394 = vunpack.c.h.b16 %v2077
        %v2395 = vunpack.c.l.b16 %v2078
        %v2396 = vunpack.c.h.b16 %v2078
        %v2397 = vunpack.c.l.b16 %v2079
        %v2398 = vunpack.c.h.b16 %v2079
        %v2399 = vunpack.c.l.b16 %v2080
        %v2400 = vunpack.c.h.b16 %v2080
        %v2401 = vunpack.c.l.b16 %v2081
        %v2402 = vunpack.c.h.b16 %v2081
        %v2403 = vunpack.c.l.b16 %v2082
        %v2404 = vunpack.c.h.b16 %v2082
        %v2405 = vunpack.c.l.b16 %v2083
        %v2406 = vunpack.c.h.b16 %v2083
        %v2407 = vunpack.c.l.b16 %v2084
        %v2408 = vunpack.c.h.b16 %v2084
        %v2409 = vunpack.c.l.b16 %v2085
        %v2410 = vunpack.c.h.b16 %v2085
        %v2411 = vunpack.c.l.b16 %v2086
        %v2412 = vunpack.c.h.b16 %v2086
        %v2413 = vunpack.c.l.b16 %v2087
        %v2414 = vunpack.c.h.b16 %v2087
        %v2415 = vunpack.c.l.b16 %v2088
        %v2416 = vunpack.c.h.b16 %v2088
        %v2417 = vunpack.c.l.b16 %v2089
        %v2418 = vunpack.c.h.b16 %v2089
        %v2419 = vunpack.c.l.b16 %v2090
        %v2420 = vunpack.c.h.b16 %v2090
        %v2421 = vunpack.c.l.b16 %v2091
        %v2422 = vunpack.c.h.b16 %v2091
        %v2423 = vunpack.c.l.b16 %v2092
        %v2424 = vunpack.c.h.b16 %v2092
        %v2425 = vunpack.c.l.b16 %v2093
        %v2426 = vunpack.c.h.b16 %v2093
        %v2427 = vunpack.c.l.b16 %v2094
        %v2428 = vunpack.c.h.b16 %v2094
        %v2429 = vunpack.c.l.b16 %v2095
        %v2430 = vunpack.c.h.b16 %v2095
        %v2431 = vunpack.c.l.b16 %v2096
        %v2432 = vunpack.c.h.b16 %v2096
        %v2433 = vunpack.c.l.b16 %v2097
        %v2434 = vunpack.c.h.b16 %v2097
        %v2435 = vunpack.c.l.b16 %v2098
        %v2436 = vunpack.c.h.b16 %v2098
        %v2437 = vunpack.c.l.b16 %v2099
        %v2438 = vunpack.c.h.b16 %v2099
        %v2439 = vunpack.c.l.b16 %v2100
        %v2440 = vunpack.c.h.b16 %v2100
        %v2441 = vunpack.c.l.b16 %v2101
        %v2442 = vunpack.c.h.b16 %v2101
        %v2443 = vunpack.c.l.b16 %v2102
        %v2444 = vunpack.c.h.b16 %v2102
        %v2445 = vunpack.c.l.b16 %v2103
        %v2446 = vunpack.c.h.b16 %v2103
        %v2447 = vunpack.c.l.b16 %v2104
        %v2448 = vunpack.c.h.b16 %v2104
        %v2449 = vunpack.c.l.b16 %v2105
        %v2450 = vunpack.c.h.b16 %v2105
        %v2451 = vunpack.c.l.b16 %v2106
        %v2452 = vunpack.c.h.b16 %v2106
        %v2453 = vunpack.c.l.b16 %v2107
        %v2454 = vunpack.c.h.b16 %v2107
        %v2455 = vunpack.c.l.b16 %v2108
        %v2456 = vunpack.c.h.b16 %v2108
        %v2457 = vunpack.c.l.b16 %v2109
        %v2458 = vunpack.c.h.b16 %v2109
        %v2459 = vunpack.c.l.b16 %v2110
        %v2460 = vunpack.c.h.b16 %v2110
        %v2461 = vunpack.c.l.b16 %v2111
        %v2462 = vunpack.c.h.b16 %v2111
        %v2463 = vunpack.c.l.b16 %v2112
        %v2464 = vunpack.c.h.b16 %v2112
        %v2465 = vunpack.c.l.b16 %v2113
        %v2466 = vunpack.c.h.b16 %v2113
        %v2467 = vunpack.c.l.b16 %v2114
        %v2468 = vunpack.c.h.b16 %v2114
        %v2469 = vunpack.c.l.b16 %v2115
        %v2470 = vunpack.c.h.b16 %v2115
        %v2471 = vunpack.c.l.b16 %v2116
        %v2472 = vunpack.c.h.b16 %v2116
        %v2473 = vunpack.c.l.b16 %v2117
        %v2474 = vunpack.c.h.b16 %v2117
        %v2475 = vunpack.c.l.b16 %v2118
        %v2476 = vunpack.c.h.b16 %v2118
        %v2477 = vunpack.c.l.b16 %v2119
        %v2478 = vunpack.c.h.b16 %v2119
        %v2479 = vunpack.c.l.b16 %v2120
        %v2480 = vunpack.c.h.b16 %v2120
        %v2481 = vunpack.c.l.b16 %v2121
        %v2482 = vunpack.c.h.b16 %v2121
        %v2483 = vunpack.c.l.b16 %v2122
        %v2484 = vunpack.c.h.b16 %v2122
        %v2485 = vunpack.c.l.b16 %v2123
        %v2486 = vunpack.c.h.b16 %v2123
        %v2487 = vunpack.c.l.b16 %v2124
        %v2488 = vunpack.c.h.b16 %v2124
        %v2489 = vunpack.c.l.b16 %v2125
        %v2490 = vunpack.c.h.b16 %v2125
        %v2491 = vunpack.c.l.b16 %v2126
        %v2492 = vunpack.c.h.b16 %v2126
        %v2493 = vunpack.c.l.b16 %v2127
        %v2494 = vunpack.c.h.b16 %v2127
        %v2495 = vunpack.c.l.b16 %v2128
        %v2496 = vunpack.c.h.b16 %v2128
        %v2497 = vunpack.c.l.b16 %v2129
        %v2498 = vunpack.c.h.b16 %v2129
        %v2499 = vunpack.c.l.b16 %v2130
        %v2500 = vunpack.c.h.b16 %v2130
        %v2501 = vunpack.c.l.b16 %v2131
        %v2502 = vunpack.c.h.b16 %v2131
        %v2503 = vunpack.c.l.b16 %v2132
        %v2504 = vunpack.c.h.b16 %v2132
        %v2505 = vunpack.c.l.b16 %v2133
        %v2506 = vunpack.c.h.b16 %v2133
        %v2507 = vunpack.c.l.b16 %v2134
        %v2508 = vunpack.c.h.b16 %v2134
        %v2509 = vunpack.c.l.b16 %v2135
        %v2510 = vunpack.c.h.b16 %v2135
        %v2511 = vunpack.c.l.b16 %v2136
        %v2512 = vunpack.c.h.b16 %v2136
        %v2513 = vunpack.c.l.b16 %v2137
        %v2514 = vunpack.c.h.b16 %v2137
        %v2515 = vunpack.c.l.b16 %v2138
        %v2516 = vunpack.c.h.b16 %v2138
        %v2517 = vunpack.c.l.b16 %v2139
        %v2518 = vunpack.c.h.b16 %v2139
        %v2519 = vunpack.c.l.b16 %v2140
        %v2520 = vunpack.c.h.b16 %v2140
        %v2521 = vunpack.c.l.b16 %v2141
        %v2522 = vunpack.c.h.b16 %v2141
        %v2523 = vunpack.c.l.b16 %v2142
        %v2524 = vunpack.c.h.b16 %v2142
        %v2525 = vunpack.c.l.b16 %v2143
        %v2526 = vunpack.c.h.b16 %v2143
        %v2527 = vunpack.c.l.b16 %v2144
        %v2528 = vunpack.c.h.b16 %v2144
        %v2529 = vunpack.c.l.b16 %v2145
        %v2530 = vunpack.c.h.b16 %v2145
        %v2531 = vunpack.c.l.b16 %v2146
        %v2532 = vunpack.c.h.b16 %v2146
        %v2533 = vunpack.c.l.b16 %v2147
        %v2534 = vunpack.c.h.b16 %v2147
        %v2535 = vunpack.c.l.b16 %v2148
        %v2536 = vunpack.c.h.b16 %v2148
        %v2537 = vunpack.c.l.b16 %v2149
        %v2538 = vunpack.c.h.b16 %v2149
        %v2539 = vunpack.c.l.b16 %v2150
        %v2540 = vunpack.c.h.b16 %v2150
        %v2541 = vunpack.c.l.b16 %v2151
        %v2542 = vunpack.c.h.b16 %v2151
        %v2543 = vunpack.c.l.b16 %v2152
        %v2544 = vunpack.c.h.b16 %v2152
        %v2545 = vunpack.c.l.b16 %v2153
        %v2546 = vunpack.c.h.b16 %v2153
        %v2547 = vunpack.c.l.b16 %v2154
        %v2548 = vunpack.c.h.b16 %v2154
        %v2549 = vunpack.c.l.b16 %v2155
        %v2550 = vunpack.c.h.b16 %v2155
        %v2551 = vunpack.c.l.b16 %v2156
        %v2552 = vunpack.c.h.b16 %v2156
        %v2553 = vunpack.c.l.b16 %v2157
        %v2554 = vunpack.c.h.b16 %v2157
        %v2555 = vunpack.c.l.b16 %v2158
        %v2556 = vunpack.c.h.b16 %v2158
        %v2557 = vpack.c.b16 %v2305, %v2301
        %v2558 = vpack.c.b16 %v2306, %v2302
        %v2559 = vpack.c.b16 %v2307, %v2303
        %v2560 = vpack.c.b16 %v2308, %v2304
        %v2561 = vpack.c.b16 %v2313, %v2309
        %v2562 = vpack.c.b16 %v2314, %v2310
        %v2563 = vpack.c.b16 %v2315, %v2311
        %v2564 = vpack.c.b16 %v2316, %v2312
        %v2565 = vpack.c.b16 %v2321, %v2317
        %v2566 = vpack.c.b16 %v2322, %v2318
        %v2567 = vpack.c.b16 %v2323, %v2319
        %v2568 = vpack.c.b16 %v2324, %v2320
        %v2569 = vpack.c.b16 %v2329, %v2325
        %v2570 = vpack.c.b16 %v2330, %v2326
        %v2571 = vpack.c.b16 %v2331, %v2327
        %v2572 = vpack.c.b16 %v2332, %v2328
        %v2573 = vpack.c.b16 %v2337, %v2333
        %v2574 = vpack.c.b16 %v2338, %v2334
        %v2575 = vpack.c.b16 %v2339, %v2335
        %v2576 = vpack.c.b16 %v2340, %v2336
        %v2577 = vpack.c.b16 %v2345, %v2341
        %v2578 = vpack.c.b16 %v2346, %v2342
        %v2579 = vpack.c.b16 %v2347, %v2343
        %v2580 = vpack.c.b16 %v2348, %v2344
        %v2581 = vpack.c.b16 %v2353, %v2349
        %v2582 = vpack.c.b16 %v2354, %v2350
        %v2583 = vpack.c.b16 %v2355, %v2351
        %v2584 = vpack.c.b16 %v2356, %v2352
        %v2585 = vpack.c.b16 %v2361, %v2357
        %v2586 = vpack.c.b16 %v2362, %v2358
        %v2587 = vpack.c.b16 %v2363, %v2359
        %v2588 = vpack.c.b16 %v2364, %v2360
        %v2589 = vpack.c.b16 %v2369, %v2365
        %v2590 = vpack.c.b16 %v2370, %v2366
        %v2591 = vpack.c.b16 %v2371, %v2367
        %v2592 = vpack.c.b16 %v2372, %v2368
        %v2593 = vpack.c.b16 %v2377, %v2373
        %v2594 = vpack.c.b16 %v2378, %v2374
        %v2595 = vpack.c.b16 %v2379, %v2375
        %v2596 = vpack.c.b16 %v2380, %v2376
        %v2597 = vpack.c.b16 %v2385, %v2381
        %v2598 = vpack.c.b16 %v2386, %v2382
        %v2599 = vpack.c.b16 %v2387, %v2383
        %v2600 = vpack.c.b16 %v2388, %v2384
        %v2601 = vpack.c.b16 %v2393, %v2389
        %v2602 = vpack.c.b16 %v2394, %v2390
        %v2603 = vpack.c.b16 %v2395, %v2391
        %v2604 = vpack.c.b16 %v2396, %v2392
        %v2605 = vpack.c.b16 %v2401, %v2397
        %v2606 = vpack.c.b16 %v2402, %v2398
        %v2607 = vpack.c.b16 %v2403, %v2399
        %v2608 = vpack.c.b16 %v2404, %v2400
        %v2609 = vpack.c.b16 %v2409, %v2405
        %v2610 = vpack.c.b16 %v2410, %v2406
        %v2611 = vpack.c.b16 %v2411, %v2407
        %v2612 = vpack.c.b16 %v2412, %v2408
        %v2613 = vpack.c.b16 %v2417, %v2413
        %v2614 = vpack.c.b16 %v2418, %v2414
        %v2615 = vpack.c.b16 %v2419, %v2415
        %v2616 = vpack.c.b16 %v2420, %v2416
        %v2617 = vpack.c.b16 %v2425, %v2421
        %v2618 = vpack.c.b16 %v2426, %v2422
        %v2619 = vpack.c.b16 %v2427, %v2423
        %v2620 = vpack.c.b16 %v2428, %v2424
        %v2621 = vpack.c.b16 %v2433, %v2429
        %v2622 = vpack.c.b16 %v2434, %v2430
        %v2623 = vpack.c.b16 %v2435, %v2431
        %v2624 = vpack.c.b16 %v2436, %v2432
        %v2625 = vpack.c.b16 %v2441, %v2437
        %v2626 = vpack.c.b16 %v2442, %v2438
        %v2627 = vpack.c.b16 %v2443, %v2439
        %v2628 = vpack.c.b16 %v2444, %v2440
        %v2629 = vpack.c.b16 %v2449, %v2445
        %v2630 = vpack.c.b16 %v2450, %v2446
        %v2631 = vpack.c.b16 %v2451, %v2447
        %v2632 = vpack.c.b16 %v2452, %v2448
        %v2633 = vpack.c.b16 %v2457, %v2453
        %v2634 = vpack.c.b16 %v2458, %v2454
        %v2635 = vpack.c.b16 %v2459, %v2455
        %v2636 = vpack.c.b16 %v2460, %v2456
        %v2637 = vpack.c.b16 %v2465, %v2461
        %v2638 = vpack.c.b16 %v2466, %v2462
        %v2639 = vpack.c.b16 %v2467, %v2463
        %v2640 = vpack.c.b16 %v2468, %v2464
        %v2641 = vpack.c.b16 %v2473, %v2469
        %v2642 = vpack.c.b16 %v2474, %v2470
        %v2643 = vpack.c.b16 %v2475, %v2471
        %v2644 = vpack.c.b16 %v2476, %v2472
        %v2645 = vpack.c.b16 %v2481, %v2477
        %v2646 = vpack.c.b16 %v2482, %v2478
        %v2647 = vpack.c.b16 %v2483, %v2479
        %v2648 = vpack.c.b16 %v2484, %v2480
        %v2649 = vpack.c.b16 %v2489, %v2485
        %v2650 = vpack.c.b16 %v2490, %v2486
        %v2651 = vpack.c.b16 %v2491, %v2487
        %v2652 = vpack.c.b16 %v2492, %v2488
        %v2653 = vpack.c.b16 %v2497, %v2493
        %v2654 = vpack.c.b16 %v2498, %v2494
        %v2655 = vpack.c.b16 %v2499, %v2495
        %v2656 = vpack.c.b16 %v2500, %v2496
        %v2657 = vpack.c.b16 %v2505, %v2501
        %v2658 = vpack.c.b16 %v2506, %v2502
        %v2659 = vpack.c.b16 %v2507, %v2503
        %v2660 = vpack.c.b16 %v2508, %v2504
        %v2661 = vpack.c.b16 %v2513, %v2509
        %v2662 = vpack.c.b16 %v2514, %v2510
        %v2663 = vpack.c.b16 %v2515, %v2511
        %v2664 = vpack.c.b16 %v2516, %v2512
        %v2665 = vpack.c.b16 %v2521, %v2517
        %v2666 = vpack.c.b16 %v2522, %v2518
        %v2667 = vpack.c.b16 %v2523, %v2519
        %v2668 = vpack.c.b16 %v2524, %v2520
        %v2669 = vpack.c.b16 %v2529, %v2525
        %v2670 = vpack.c.b16 %v2530, %v2526
        %v2671 = vpack.c.b16 %v2531, %v2527
        %v2672 = vpack.c.b16 %v2532, %v2528
        %v2673 = vpack.c.b16 %v2537, %v2533
        %v2674 = vpack.c.b16 %v2538, %v2534
        %v2675 = vpack.c.b16 %v2539, %v2535
        %v2676 = vpack.c.b16 %v2540, %v2536
        %v2677 = vpack.c.b16 %v2545, %v2541
        %v2678 = vpack.c.b16 %v2546, %v2542
        %v2679 = vpack.c.b16 %v2547, %v2543
        %v2680 = vpack.c.b16 %v2548, %v2544
        %v2681 = vpack.c.b16 %v2553, %v2549
        %v2682 = vpack.c.b16 %v2554, %v2550
        %v2683 = vpack.c.b16 %v2555, %v2551
        %v2684 = vpack.c.b16 %v2556, %v2552
        %2813 = vmatpush.bf16.msra.mxu0 %v2585
        %2814 = vmatpush.bf16.msra.mxu0 %v2581
        %2815 = vmatpush.bf16.msra.mxu0 %v2577
        %2816 = vmatpush.bf16.msra.mxu0 %v2573
        %2817 = vmatpush.bf16.msra.mxu0 %v2569
        %2818 = vmatpush.bf16.msra.mxu0 %v2565
        %2819 = vmatpush.bf16.msra.mxu0 %v2561
        %2820 = vmatpush.bf16.msra.mxu0 %v2557
        %2821 = vmatmul.bf16.gmra.mxu0 %v2160
        %v2822 = vpop.f32.mrf.mxu0
        %v2823 = vadd.f32 %v2165, %v2822
        %v2824 = vpop.f32.mrf.mxu0
        %v2825 = vadd.f32 %v2165, %v2824
        %2826 = vdwg.mxu0
        %2827 = vmatpush.bf16.msra.mxu0 %v2617
        %2828 = vmatpush.bf16.msra.mxu0 %v2613
        %2829 = vmatpush.bf16.msra.mxu0 %v2609
        %2830 = vmatpush.bf16.msra.mxu0 %v2605
        %2831 = vmatpush.bf16.msra.mxu0 %v2601
        %2832 = vmatpush.bf16.msra.mxu0 %v2597
        %2833 = vmatpush.bf16.msra.mxu0 %v2593
        %2834 = vmatpush.bf16.msra.mxu0 %v2589
        %2835 = vmatmul.bf16.gmra.mxu0 %v2161
        %v2836 = vpop.f32.mrf.mxu0
        %v2837 = vadd.f32 %v2823, %v2836
        %v2838 = vpop.f32.mrf.mxu0
        %v2839 = vadd.f32 %v2825, %v2838
        %2840 = vdwg.mxu0
        %2841 = vmatpush.bf16.msra.mxu0 %v2649
        %2842 = vmatpush.bf16.msra.mxu0 %v2645
        %2843 = vmatpush.bf16.msra.mxu0 %v2641
        %2844 = vmatpush.bf16.msra.mxu0 %v2637
        %2845 = vmatpush.bf16.msra.mxu0 %v2633
        %2846 = vmatpush.bf16.msra.mxu0 %v2629
        %2847 = vmatpush.bf16.msra.mxu0 %v2625
        %2848 = vmatpush.bf16.msra.mxu0 %v2621
        %2849 = vmatmul.bf16.gmra.mxu0 %v2162
        %v2850 = vpop.f32.mrf.mxu0
        %v2851 = vadd.f32 %v2837, %v2850
        %v2852 = vpop.f32.mrf.mxu0
        %v2853 = vadd.f32 %v2839, %v2852
        %2854 = vdwg.mxu0
        %2855 = vmatpush.bf16.msra.mxu0 %v2681
        %2856 = vmatpush.bf16.msra.mxu0 %v2677
        %2857 = vmatpush.bf16.msra.mxu0 %v2673
        %2858 = vmatpush.bf16.msra.mxu0 %v2669
        %2859 = vmatpush.bf16.msra.mxu0 %v2665
        %2860 = vmatpush.bf16.msra.mxu0 %v2661
        %2861 = vmatpush.bf16.msra.mxu0 %v2657
        %2862 = vmatpush.bf16.msra.mxu0 %v2653
        %2863 = vmatmul.bf16.gmra.mxu0 %v2163
        %v2864 = vpop.f32.mrf.mxu0
        %v2865 = vadd.f32 %v2851, %v2864
        %v2866 = vpop.f32.mrf.mxu0
        %v2867 = vadd.f32 %v2853, %v2866
        %2868 = vdwg.mxu0
        %2869 = vmatpush.bf16.msra.mxu0 %v2586
        %2870 = vmatpush.bf16.msra.mxu0 %v2582
        %2871 = vmatpush.bf16.msra.mxu0 %v2578
        %2872 = vmatpush.bf16.msra.mxu0 %v2574
        %2873 = vmatpush.bf16.msra.mxu0 %v2570
        %2874 = vmatpush.bf16.msra.mxu0 %v2566
        %2875 = vmatpush.bf16.msra.mxu0 %v2562
        %2876 = vmatpush.bf16.msra.mxu0 %v2558
        %2877 = vmatmul.bf16.gmra.mxu0 %v2160
        %v2878 = vpop.f32.mrf.mxu0
        %v2879 = vadd.f32 %v2166, %v2878
        %v2880 = vpop.f32.mrf.mxu0
        %v2881 = vadd.f32 %v2166, %v2880
        %2882 = vdwg.mxu0
        %2883 = vmatpush.bf16.msra.mxu0 %v2618
        %2884 = vmatpush.bf16.msra.mxu0 %v2614
        %2885 = vmatpush.bf16.msra.mxu0 %v2610
        %2886 = vmatpush.bf16.msra.mxu0 %v2606
        %2887 = vmatpush.bf16.msra.mxu0 %v2602
        %2888 = vmatpush.bf16.msra.mxu0 %v2598
        %2889 = vmatpush.bf16.msra.mxu0 %v2594
        %2890 = vmatpush.bf16.msra.mxu0 %v2590
        %2891 = vmatmul.bf16.gmra.mxu0 %v2161
        %v2892 = vpop.f32.mrf.mxu0
        %v2893 = vadd.f32 %v2879, %v2892
        %v2894 = vpop.f32.mrf.mxu0
        %v2895 = vadd.f32 %v2881, %v2894
        %2896 = vdwg.mxu0
        %2897 = vmatpush.bf16.msra.mxu0 %v2650
        %2898 = vmatpush.bf16.msra.mxu0 %v2646
        %2899 = vmatpush.bf16.msra.mxu0 %v2642
        %2900 = vmatpush.bf16.msra.mxu0 %v2638
        %2901 = vmatpush.bf16.msra.mxu0 %v2634
        %2902 = vmatpush.bf16.msra.mxu0 %v2630
        %2903 = vmatpush.bf16.msra.mxu0 %v2626
        %2904 = vmatpush.bf16.msra.mxu0 %v2622
        %2905 = vmatmul.bf16.gmra.mxu0 %v2162
        %v2906 = vpop.f32.mrf.mxu0
        %v2907 = vadd.f32 %v2893, %v2906
        %v2908 = vpop.f32.mrf.mxu0
        %v2909 = vadd.f32 %v2895, %v2908
        %2910 = vdwg.mxu0
        %2911 = vmatpush.bf16.msra.mxu0 %v2682
        %2912 = vmatpush.bf16.msra.mxu0 %v2678
        %2913 = vmatpush.bf16.msra.mxu0 %v2674
        %2914 = vmatpush.bf16.msra.mxu0 %v2670
        %2915 = vmatpush.bf16.msra.mxu0 %v2666
        %2916 = vmatpush.bf16.msra.mxu0 %v2662
        %2917 = vmatpush.bf16.msra.mxu0 %v2658
        %2918 = vmatpush.bf16.msra.mxu0 %v2654
        %2919 = vmatmul.bf16.gmra.mxu0 %v2163
        %v2920 = vpop.f32.mrf.mxu0
        %v2921 = vadd.f32 %v2907, %v2920
        %v2922 = vpop.f32.mrf.mxu0
        %v2923 = vadd.f32 %v2909, %v2922
        %2924 = vdwg.mxu0
        %2925 = vmatpush.bf16.msra.mxu0 %v2587
        %2926 = vmatpush.bf16.msra.mxu0 %v2583
        %2927 = vmatpush.bf16.msra.mxu0 %v2579
        %2928 = vmatpush.bf16.msra.mxu0 %v2575
        %2929 = vmatpush.bf16.msra.mxu0 %v2571
        %2930 = vmatpush.bf16.msra.mxu0 %v2567
        %2931 = vmatpush.bf16.msra.mxu0 %v2563
        %2932 = vmatpush.bf16.msra.mxu0 %v2559
        %2933 = vmatmul.bf16.gmra.mxu0 %v2160
        %v2934 = vpop.f32.mrf.mxu0
        %v2935 = vadd.f32 %v2167, %v2934
        %v2936 = vpop.f32.mrf.mxu0
        %v2937 = vadd.f32 %v2167, %v2936
        %2938 = vdwg.mxu0
        %2939 = vmatpush.bf16.msra.mxu0 %v2619
        %2940 = vmatpush.bf16.msra.mxu0 %v2615
        %2941 = vmatpush.bf16.msra.mxu0 %v2611
        %2942 = vmatpush.bf16.msra.mxu0 %v2607
        %2943 = vmatpush.bf16.msra.mxu0 %v2603
        %2944 = vmatpush.bf16.msra.mxu0 %v2599
        %2945 = vmatpush.bf16.msra.mxu0 %v2595
        %2946 = vmatpush.bf16.msra.mxu0 %v2591
        %2947 = vmatmul.bf16.gmra.mxu0 %v2161
        %v2948 = vpop.f32.mrf.mxu0
        %v2949 = vadd.f32 %v2935, %v2948
        %v2950 = vpop.f32.mrf.mxu0
        %v2951 = vadd.f32 %v2937, %v2950
        %2952 = vdwg.mxu0
        %2953 = vmatpush.bf16.msra.mxu0 %v2651
        %2954 = vmatpush.bf16.msra.mxu0 %v2647
        %2955 = vmatpush.bf16.msra.mxu0 %v2643
        %2956 = vmatpush.bf16.msra.mxu0 %v2639
        %2957 = vmatpush.bf16.msra.mxu0 %v2635
        %2958 = vmatpush.bf16.msra.mxu0 %v2631
        %2959 = vmatpush.bf16.msra.mxu0 %v2627
        %2960 = vmatpush.bf16.msra.mxu0 %v2623
        %2961 = vmatmul.bf16.gmra.mxu0 %v2162
        %v2962 = vpop.f32.mrf.mxu0
        %v2963 = vadd.f32 %v2949, %v2962
        %v2964 = vpop.f32.mrf.mxu0
        %v2965 = vadd.f32 %v2951, %v2964
        %2966 = vdwg.mxu0
        %2967 = vmatpush.bf16.msra.mxu0 %v2683
        %2968 = vmatpush.bf16.msra.mxu0 %v2679
        %2969 = vmatpush.bf16.msra.mxu0 %v2675
        %2970 = vmatpush.bf16.msra.mxu0 %v2671
        %2971 = vmatpush.bf16.msra.mxu0 %v2667
        %2972 = vmatpush.bf16.msra.mxu0 %v2663
        %2973 = vmatpush.bf16.msra.mxu0 %v2659
        %2974 = vmatpush.bf16.msra.mxu0 %v2655
        %2975 = vmatmul.bf16.gmra.mxu0 %v2163
        %v2976 = vpop.f32.mrf.mxu0
        %v2977 = vadd.f32 %v2963, %v2976
        %v2978 = vpop.f32.mrf.mxu0
        %v2979 = vadd.f32 %v2965, %v2978
        %2980 = vdwg.mxu0
        %2981 = vmatpush.bf16.msra.mxu0 %v2588
        %2982 = vmatpush.bf16.msra.mxu0 %v2584
        %2983 = vmatpush.bf16.msra.mxu0 %v2580
        %2984 = vmatpush.bf16.msra.mxu0 %v2576
        %2985 = vmatpush.bf16.msra.mxu0 %v2572
        %2986 = vmatpush.bf16.msra.mxu0 %v2568
        %2987 = vmatpush.bf16.msra.mxu0 %v2564
        %2988 = vmatpush.bf16.msra.mxu0 %v2560
        %2989 = vmatmul.bf16.gmra.mxu0 %v2160
        %v2990 = vpop.f32.mrf.mxu0
        %v2991 = vadd.f32 %v2168, %v2990
        %v2992 = vpop.f32.mrf.mxu0
        %v2993 = vadd.f32 %v2168, %v2992
        %2994 = vdwg.mxu0
        %2995 = vmatpush.bf16.msra.mxu0 %v2620
        %2996 = vmatpush.bf16.msra.mxu0 %v2616
        %2997 = vmatpush.bf16.msra.mxu0 %v2612
        %2998 = vmatpush.bf16.msra.mxu0 %v2608
        %2999 = vmatpush.bf16.msra.mxu0 %v2604
        %3000 = vmatpush.bf16.msra.mxu0 %v2600
        %3001 = vmatpush.bf16.msra.mxu0 %v2596
        %3002 = vmatpush.bf16.msra.mxu0 %v2592
        %3003 = vmatmul.bf16.gmra.mxu0 %v2161
        %v3004 = vpop.f32.mrf.mxu0
        %v3005 = vadd.f32 %v2991, %v3004
        %v3006 = vpop.f32.mrf.mxu0
        %v3007 = vadd.f32 %v2993, %v3006
        %3008 = vdwg.mxu0
        %3009 = vmatpush.bf16.msra.mxu0 %v2652
        %3010 = vmatpush.bf16.msra.mxu0 %v2648
        %3011 = vmatpush.bf16.msra.mxu0 %v2644
        %3012 = vmatpush.bf16.msra.mxu0 %v2640
        %3013 = vmatpush.bf16.msra.mxu0 %v2636
        %3014 = vmatpush.bf16.msra.mxu0 %v2632
        %3015 = vmatpush.bf16.msra.mxu0 %v2628
        %3016 = vmatpush.bf16.msra.mxu0 %v2624
        %3017 = vmatmul.bf16.gmra.mxu0 %v2162
        %v3018 = vpop.f32.mrf.mxu0
        %v3019 = vadd.f32 %v3005, %v3018
        %v3020 = vpop.f32.mrf.mxu0
        %v3021 = vadd.f32 %v3007, %v3020
        %3022 = vdwg.mxu0
        %3023 = vmatpush.bf16.msra.mxu0 %v2684
        %3024 = vmatpush.bf16.msra.mxu0 %v2680
        %3025 = vmatpush.bf16.msra.mxu0 %v2676
        %3026 = vmatpush.bf16.msra.mxu0 %v2672
        %3027 = vmatpush.bf16.msra.mxu0 %v2668
        %3028 = vmatpush.bf16.msra.mxu0 %v2664
        %3029 = vmatpush.bf16.msra.mxu0 %v2660
        %3030 = vmatpush.bf16.msra.mxu0 %v2656
        %3031 = vmatmul.bf16.gmra.mxu0 %v2163
        %v3032 = vpop.f32.mrf.mxu0
        %v3033 = vadd.f32 %v3019, %v3032
        %v3034 = vpop.f32.mrf.mxu0
        %v3035 = vadd.f32 %v3021, %v3034
        %3036 = vdwg.mxu0
        %v3037 = vmul.f32 %v2865, 0.2
        %v3038 = vmul.f32 %v2921, 0.2
        %v3039 = vmul.f32 %v2977, 0.2
        %v3040 = vmul.f32 %v3033, 0.2
        %v3041 = vmul.f32 %v2867, 0.2
        %v3042 = vmul.f32 %v2923, 0.2
        %v3043 = vmul.f32 %v2979, 0.2
        %v3044 = vmul.f32 %v3035, 0.2
        %v3045 = vmax.f32 %v2865, %v3037
        %v3046 = vmax.f32 %v2921, %v3038
        %v3047 = vmax.f32 %v2977, %v3039
        %v3048 = vmax.f32 %v3033, %v3040
        %v3049 = vmax.f32 %v2867, %v3041
        %v3050 = vmax.f32 %v2923, %v3042
        %v3051 = vmax.f32 %v2979, %v3043
        %v3052 = vmax.f32 %v3035, %v3044
        %v3053 = vld [vmem:[#allocation14] sm:$0xff]
        %v3054 = vld [vmem:[#allocation14 + $0x8] sm:$0xff]
        %v3055 = vld [vmem:[#allocation14 + $0x10] sm:$0xff]
        %v3056 = vld [vmem:[#allocation14 + $0x18] sm:$0xff]
        %v3057 = vld [vmem:[#allocation14 + $0x20] sm:$0xff]
        %v3058 = vld [vmem:[#allocation14 + $0x28] sm:$0xff]
        %v3059 = vld [vmem:[#allocation14 + $0x30] sm:$0xff]
        %v3060 = vld [vmem:[#allocation14 + $0x38] sm:$0xff]
        %v3061 = vld [vmem:[#allocation14 + $0x40] sm:$0xff]
        %v3062 = vld [vmem:[#allocation14 + $0x48] sm:$0xff]
        %v3063 = vld [vmem:[#allocation14 + $0x50] sm:$0xff]
        %v3064 = vld [vmem:[#allocation14 + $0x58] sm:$0xff]
        %v3065 = vld [vmem:[#allocation14 + $0x60] sm:$0xff]
        %v3066 = vld [vmem:[#allocation14 + $0x68] sm:$0xff]
        %v3067 = vld [vmem:[#allocation14 + $0x70] sm:$0xff]
        %v3068 = vld [vmem:[#allocation14 + $0x78] sm:$0xff]
        %v3069 = vld [vmem:[#allocation14 + $0x80] sm:$0xff]
        %v3070 = vld [vmem:[#allocation14 + $0x88] sm:$0xff]
        %v3071 = vld [vmem:[#allocation14 + $0x90] sm:$0xff]
        %v3072 = vld [vmem:[#allocation14 + $0x98] sm:$0xff]
        %v3073 = vld [vmem:[#allocation14 + $0xa0] sm:$0xff]
        %v3074 = vld [vmem:[#allocation14 + $0xa8] sm:$0xff]
        %v3075 = vld [vmem:[#allocation14 + $0xb0] sm:$0xff]
        %v3076 = vld [vmem:[#allocation14 + $0xb8] sm:$0xff]
        %v3077 = vld [vmem:[#allocation14 + $0xc0] sm:$0xff]
        %v3078 = vld [vmem:[#allocation14 + $0xc8] sm:$0xff]
        %v3079 = vld [vmem:[#allocation14 + $0xd0] sm:$0xff]
        %v3080 = vld [vmem:[#allocation14 + $0xd8] sm:$0xff]
        %v3081 = vld [vmem:[#allocation14 + $0xe0] sm:$0xff]
        %v3082 = vld [vmem:[#allocation14 + $0xe8] sm:$0xff]
        %v3083 = vld [vmem:[#allocation14 + $0xf0] sm:$0xff]
        %v3084 = vld [vmem:[#allocation14 + $0xf8] sm:$0xff]
        %v3085 = vld [vmem:[#allocation14 + $0x100] sm:$0xff]
        %v3086 = vld [vmem:[#allocation14 + $0x108] sm:$0xff]
        %v3087 = vld [vmem:[#allocation14 + $0x110] sm:$0xff]
        %v3088 = vld [vmem:[#allocation14 + $0x118] sm:$0xff]
        %v3089 = vld [vmem:[#allocation14 + $0x120] sm:$0xff]
        %v3090 = vld [vmem:[#allocation14 + $0x128] sm:$0xff]
        %v3091 = vld [vmem:[#allocation14 + $0x130] sm:$0xff]
        %v3092 = vld [vmem:[#allocation14 + $0x138] sm:$0xff]
        %v3093 = vld [vmem:[#allocation14 + $0x140] sm:$0xff]
        %v3094 = vld [vmem:[#allocation14 + $0x148] sm:$0xff]
        %v3095 = vld [vmem:[#allocation14 + $0x150] sm:$0xff]
        %v3096 = vld [vmem:[#allocation14 + $0x158] sm:$0xff]
        %v3097 = vld [vmem:[#allocation14 + $0x160] sm:$0xff]
        %v3098 = vld [vmem:[#allocation14 + $0x168] sm:$0xff]
        %v3099 = vld [vmem:[#allocation14 + $0x170] sm:$0xff]
        %v3100 = vld [vmem:[#allocation14 + $0x178] sm:$0xff]
        %v3101 = vld [vmem:[#allocation14 + $0x180] sm:$0xff]
        %v3102 = vld [vmem:[#allocation14 + $0x188] sm:$0xff]
        %v3103 = vld [vmem:[#allocation14 + $0x190] sm:$0xff]
        %v3104 = vld [vmem:[#allocation14 + $0x198] sm:$0xff]
        %v3105 = vld [vmem:[#allocation14 + $0x1a0] sm:$0xff]
        %v3106 = vld [vmem:[#allocation14 + $0x1a8] sm:$0xff]
        %v3107 = vld [vmem:[#allocation14 + $0x1b0] sm:$0xff]
        %v3108 = vld [vmem:[#allocation14 + $0x1b8] sm:$0xff]
        %v3109 = vld [vmem:[#allocation14 + $0x1c0] sm:$0xff]
        %v3110 = vld [vmem:[#allocation14 + $0x1c8] sm:$0xff]
        %v3111 = vld [vmem:[#allocation14 + $0x1d0] sm:$0xff]
        %v3112 = vld [vmem:[#allocation14 + $0x1d8] sm:$0xff]
        %v3113 = vld [vmem:[#allocation14 + $0x1e0] sm:$0xff]
        %v3114 = vld [vmem:[#allocation14 + $0x1e8] sm:$0xff]
        %v3115 = vld [vmem:[#allocation14 + $0x1f0] sm:$0xff]
        %v3116 = vld [vmem:[#allocation14 + $0x1f8] sm:$0xff]
        %v3117 = vld [vmem:[#allocation16] sm:$0x3]
        %v3118 = vpack.c.bf16 %v3049, %v3045
        %v3119 = vpack.c.bf16 %v3050, %v3046
        %v3120 = vpack.c.bf16 %v3051, %v3047
        %v3121 = vpack.c.bf16 %v3052, %v3048
        %v3123 = vperm.slane %v3117, 0
        %v3124 = vperm.slane %v3117, 1
        %v3191 = vunpack.c.l.b16 %v3053
        %v3192 = vunpack.c.h.b16 %v3053
        %v3193 = vunpack.c.l.b16 %v3054
        %v3194 = vunpack.c.h.b16 %v3054
        %v3195 = vunpack.c.l.b16 %v3055
        %v3196 = vunpack.c.h.b16 %v3055
        %v3197 = vunpack.c.l.b16 %v3056
        %v3198 = vunpack.c.h.b16 %v3056
        %v3199 = vunpack.c.l.b16 %v3057
        %v3200 = vunpack.c.h.b16 %v3057
        %v3201 = vunpack.c.l.b16 %v3058
        %v3202 = vunpack.c.h.b16 %v3058
        %v3203 = vunpack.c.l.b16 %v3059
        %v3204 = vunpack.c.h.b16 %v3059
        %v3205 = vunpack.c.l.b16 %v3060
        %v3206 = vunpack.c.h.b16 %v3060
        %v3207 = vunpack.c.l.b16 %v3061
        %v3208 = vunpack.c.h.b16 %v3061
        %v3209 = vunpack.c.l.b16 %v3062
        %v3210 = vunpack.c.h.b16 %v3062
        %v3211 = vunpack.c.l.b16 %v3063
        %v3212 = vunpack.c.h.b16 %v3063
        %v3213 = vunpack.c.l.b16 %v3064
        %v3214 = vunpack.c.h.b16 %v3064
        %v3215 = vunpack.c.l.b16 %v3065
        %v3216 = vunpack.c.h.b16 %v3065
        %v3217 = vunpack.c.l.b16 %v3066
        %v3218 = vunpack.c.h.b16 %v3066
        %v3219 = vunpack.c.l.b16 %v3067
        %v3220 = vunpack.c.h.b16 %v3067
        %v3221 = vunpack.c.l.b16 %v3068
        %v3222 = vunpack.c.h.b16 %v3068
        %v3223 = vunpack.c.l.b16 %v3069
        %v3224 = vunpack.c.h.b16 %v3069
        %v3225 = vunpack.c.l.b16 %v3070
        %v3226 = vunpack.c.h.b16 %v3070
        %v3227 = vunpack.c.l.b16 %v3071
        %v3228 = vunpack.c.h.b16 %v3071
        %v3229 = vunpack.c.l.b16 %v3072
        %v3230 = vunpack.c.h.b16 %v3072
        %v3231 = vunpack.c.l.b16 %v3073
        %v3232 = vunpack.c.h.b16 %v3073
        %v3233 = vunpack.c.l.b16 %v3074
        %v3234 = vunpack.c.h.b16 %v3074
        %v3235 = vunpack.c.l.b16 %v3075
        %v3236 = vunpack.c.h.b16 %v3075
        %v3237 = vunpack.c.l.b16 %v3076
        %v3238 = vunpack.c.h.b16 %v3076
        %v3239 = vunpack.c.l.b16 %v3077
        %v3240 = vunpack.c.h.b16 %v3077
        %v3241 = vunpack.c.l.b16 %v3078
        %v3242 = vunpack.c.h.b16 %v3078
        %v3243 = vunpack.c.l.b16 %v3079
        %v3244 = vunpack.c.h.b16 %v3079
        %v3245 = vunpack.c.l.b16 %v3080
        %v3246 = vunpack.c.h.b16 %v3080
        %v3247 = vunpack.c.l.b16 %v3081
        %v3248 = vunpack.c.h.b16 %v3081
        %v3249 = vunpack.c.l.b16 %v3082
        %v3250 = vunpack.c.h.b16 %v3082
        %v3251 = vunpack.c.l.b16 %v3083
        %v3252 = vunpack.c.h.b16 %v3083
        %v3253 = vunpack.c.l.b16 %v3084
        %v3254 = vunpack.c.h.b16 %v3084
        %v3255 = vunpack.c.l.b16 %v3085
        %v3256 = vunpack.c.h.b16 %v3085
        %v3257 = vunpack.c.l.b16 %v3086
        %v3258 = vunpack.c.h.b16 %v3086
        %v3259 = vunpack.c.l.b16 %v3087
        %v3260 = vunpack.c.h.b16 %v3087
        %v3261 = vunpack.c.l.b16 %v3088
        %v3262 = vunpack.c.h.b16 %v3088
        %v3263 = vunpack.c.l.b16 %v3089
        %v3264 = vunpack.c.h.b16 %v3089
        %v3265 = vunpack.c.l.b16 %v3090
        %v3266 = vunpack.c.h.b16 %v3090
        %v3267 = vunpack.c.l.b16 %v3091
        %v3268 = vunpack.c.h.b16 %v3091
        %v3269 = vunpack.c.l.b16 %v3092
        %v3270 = vunpack.c.h.b16 %v3092
        %v3271 = vunpack.c.l.b16 %v3093
        %v3272 = vunpack.c.h.b16 %v3093
        %v3273 = vunpack.c.l.b16 %v3094
        %v3274 = vunpack.c.h.b16 %v3094
        %v3275 = vunpack.c.l.b16 %v3095
        %v3276 = vunpack.c.h.b16 %v3095
        %v3277 = vunpack.c.l.b16 %v3096
        %v3278 = vunpack.c.h.b16 %v3096
        %v3279 = vunpack.c.l.b16 %v3097
        %v3280 = vunpack.c.h.b16 %v3097
        %v3281 = vunpack.c.l.b16 %v3098
        %v3282 = vunpack.c.h.b16 %v3098
        %v3283 = vunpack.c.l.b16 %v3099
        %v3284 = vunpack.c.h.b16 %v3099
        %v3285 = vunpack.c.l.b16 %v3100
        %v3286 = vunpack.c.h.b16 %v3100
        %v3287 = vunpack.c.l.b16 %v3101
        %v3288 = vunpack.c.h.b16 %v3101
        %v3289 = vunpack.c.l.b16 %v3102
        %v3290 = vunpack.c.h.b16 %v3102
        %v3291 = vunpack.c.l.b16 %v3103
        %v3292 = vunpack.c.h.b16 %v3103
        %v3293 = vunpack.c.l.b16 %v3104
        %v3294 = vunpack.c.h.b16 %v3104
        %v3295 = vunpack.c.l.b16 %v3105
        %v3296 = vunpack.c.h.b16 %v3105
        %v3297 = vunpack.c.l.b16 %v3106
        %v3298 = vunpack.c.h.b16 %v3106
        %v3299 = vunpack.c.l.b16 %v3107
        %v3300 = vunpack.c.h.b16 %v3107
        %v3301 = vunpack.c.l.b16 %v3108
        %v3302 = vunpack.c.h.b16 %v3108
        %v3303 = vunpack.c.l.b16 %v3109
        %v3304 = vunpack.c.h.b16 %v3109
        %v3305 = vunpack.c.l.b16 %v3110
        %v3306 = vunpack.c.h.b16 %v3110
        %v3307 = vunpack.c.l.b16 %v3111
        %v3308 = vunpack.c.h.b16 %v3111
        %v3309 = vunpack.c.l.b16 %v3112
        %v3310 = vunpack.c.h.b16 %v3112
        %v3311 = vunpack.c.l.b16 %v3113
        %v3312 = vunpack.c.h.b16 %v3113
        %v3313 = vunpack.c.l.b16 %v3114
        %v3314 = vunpack.c.h.b16 %v3114
        %v3315 = vunpack.c.l.b16 %v3115
        %v3316 = vunpack.c.h.b16 %v3115
        %v3317 = vunpack.c.l.b16 %v3116
        %v3318 = vunpack.c.h.b16 %v3116
        %v3319 = vpack.c.b16 %v3193, %v3191
        %v3320 = vpack.c.b16 %v3194, %v3192
        %v3321 = vpack.c.b16 %v3197, %v3195
        %v3322 = vpack.c.b16 %v3198, %v3196
        %v3323 = vpack.c.b16 %v3201, %v3199
        %v3324 = vpack.c.b16 %v3202, %v3200
        %v3325 = vpack.c.b16 %v3205, %v3203
        %v3326 = vpack.c.b16 %v3206, %v3204
        %v3327 = vpack.c.b16 %v3209, %v3207
        %v3328 = vpack.c.b16 %v3210, %v3208
        %v3329 = vpack.c.b16 %v3213, %v3211
        %v3330 = vpack.c.b16 %v3214, %v3212
        %v3331 = vpack.c.b16 %v3217, %v3215
        %v3332 = vpack.c.b16 %v3218, %v3216
        %v3333 = vpack.c.b16 %v3221, %v3219
        %v3334 = vpack.c.b16 %v3222, %v3220
        %v3335 = vpack.c.b16 %v3225, %v3223
        %v3336 = vpack.c.b16 %v3226, %v3224
        %v3337 = vpack.c.b16 %v3229, %v3227
        %v3338 = vpack.c.b16 %v3230, %v3228
        %v3339 = vpack.c.b16 %v3233, %v3231
        %v3340 = vpack.c.b16 %v3234, %v3232
        %v3341 = vpack.c.b16 %v3237, %v3235
        %v3342 = vpack.c.b16 %v3238, %v3236
        %v3343 = vpack.c.b16 %v3241, %v3239
        %v3344 = vpack.c.b16 %v3242, %v3240
        %v3345 = vpack.c.b16 %v3245, %v3243
        %v3346 = vpack.c.b16 %v3246, %v3244
        %v3347 = vpack.c.b16 %v3249, %v3247
        %v3348 = vpack.c.b16 %v3250, %v3248
        %v3349 = vpack.c.b16 %v3253, %v3251
        %v3350 = vpack.c.b16 %v3254, %v3252
        %v3351 = vpack.c.b16 %v3257, %v3255
        %v3352 = vpack.c.b16 %v3258, %v3256
        %v3353 = vpack.c.b16 %v3261, %v3259
        %v3354 = vpack.c.b16 %v3262, %v3260
        %v3355 = vpack.c.b16 %v3265, %v3263
        %v3356 = vpack.c.b16 %v3266, %v3264
        %v3357 = vpack.c.b16 %v3269, %v3267
        %v3358 = vpack.c.b16 %v3270, %v3268
        %v3359 = vpack.c.b16 %v3273, %v3271
        %v3360 = vpack.c.b16 %v3274, %v3272
        %v3361 = vpack.c.b16 %v3277, %v3275
        %v3362 = vpack.c.b16 %v3278, %v3276
        %v3363 = vpack.c.b16 %v3281, %v3279
        %v3364 = vpack.c.b16 %v3282, %v3280
        %v3365 = vpack.c.b16 %v3285, %v3283
        %v3366 = vpack.c.b16 %v3286, %v3284
        %v3367 = vpack.c.b16 %v3289, %v3287
        %v3368 = vpack.c.b16 %v3290, %v3288
        %v3369 = vpack.c.b16 %v3293, %v3291
        %v3370 = vpack.c.b16 %v3294, %v3292
        %v3371 = vpack.c.b16 %v3297, %v3295
        %v3372 = vpack.c.b16 %v3298, %v3296
        %v3373 = vpack.c.b16 %v3301, %v3299
        %v3374 = vpack.c.b16 %v3302, %v3300
        %v3375 = vpack.c.b16 %v3305, %v3303
        %v3376 = vpack.c.b16 %v3306, %v3304
        %v3377 = vpack.c.b16 %v3309, %v3307
        %v3378 = vpack.c.b16 %v3310, %v3308
        %v3379 = vpack.c.b16 %v3313, %v3311
        %v3380 = vpack.c.b16 %v3314, %v3312
        %v3381 = vpack.c.b16 %v3317, %v3315
        %v3382 = vpack.c.b16 %v3318, %v3316
        %3447 = vmatpush.bf16.msra.mxu0 %v3333
        %3448 = vmatpush.bf16.msra.mxu0 %v3331
        %3449 = vmatpush.bf16.msra.mxu0 %v3329
        %3450 = vmatpush.bf16.msra.mxu0 %v3327
        %3451 = vmatpush.bf16.msra.mxu0 %v3325
        %3452 = vmatpush.bf16.msra.mxu0 %v3323
        %3453 = vmatpush.bf16.msra.mxu0 %v3321
        %3454 = vmatpush.bf16.msra.mxu0 %v3319
        %3455 = vmatmul.bf16.gmra.mxu0 %v3118
        %v3456 = vpop.f32.mrf.mxu0
        %v3457 = vadd.f32 %v3123, %v3456
        %v3458 = vpop.f32.mrf.mxu0
        %v3459 = vadd.f32 %v3123, %v3458
        %3460 = vdwg.mxu0
        %3461 = vmatpush.bf16.msra.mxu0 %v3349
        %3462 = vmatpush.bf16.msra.mxu0 %v3347
        %3463 = vmatpush.bf16.msra.mxu0 %v3345
        %3464 = vmatpush.bf16.msra.mxu0 %v3343
        %3465 = vmatpush.bf16.msra.mxu0 %v3341
        %3466 = vmatpush.bf16.msra.mxu0 %v3339
        %3467 = vmatpush.bf16.msra.mxu0 %v3337
        %3468 = vmatpush.bf16.msra.mxu0 %v3335
        %3469 = vmatmul.bf16.gmra.mxu0 %v3119
        %v3470 = vpop.f32.mrf.mxu0
        %v3471 = vadd.f32 %v3457, %v3470
        %v3472 = vpop.f32.mrf.mxu0
        %v3473 = vadd.f32 %v3459, %v3472
        %3474 = vdwg.mxu0
        %3475 = vmatpush.bf16.msra.mxu0 %v3365
        %3476 = vmatpush.bf16.msra.mxu0 %v3363
        %3477 = vmatpush.bf16.msra.mxu0 %v3361
        %3478 = vmatpush.bf16.msra.mxu0 %v3359
        %3479 = vmatpush.bf16.msra.mxu0 %v3357
        %3480 = vmatpush.bf16.msra.mxu0 %v3355
        %3481 = vmatpush.bf16.msra.mxu0 %v3353
        %3482 = vmatpush.bf16.msra.mxu0 %v3351
        %3483 = vmatmul.bf16.gmra.mxu0 %v3120
        %v3484 = vpop.f32.mrf.mxu0
        %v3485 = vadd.f32 %v3471, %v3484
        %v3486 = vpop.f32.mrf.mxu0
        %v3487 = vadd.f32 %v3473, %v3486
        %3488 = vdwg.mxu0
        %3489 = vmatpush.bf16.msra.mxu0 %v3381
        %3490 = vmatpush.bf16.msra.mxu0 %v3379
        %3491 = vmatpush.bf16.msra.mxu0 %v3377
        %3492 = vmatpush.bf16.msra.mxu0 %v3375
        %3493 = vmatpush.bf16.msra.mxu0 %v3373
        %3494 = vmatpush.bf16.msra.mxu0 %v3371
        %3495 = vmatpush.bf16.msra.mxu0 %v3369
        %3496 = vmatpush.bf16.msra.mxu0 %v3367
        %3497 = vmatmul.bf16.gmra.mxu0 %v3121
        %v3498 = vpop.f32.mrf.mxu0
        %v3499 = vadd.f32 %v3485, %v3498
        %v3500 = vpop.f32.mrf.mxu0
        %v3501 = vadd.f32 %v3487, %v3500
        %3502 = vdwg.mxu0
        %3503 = vmatpush.bf16.msra.mxu0 %v3334
        %3504 = vmatpush.bf16.msra.mxu0 %v3332
        %3505 = vmatpush.bf16.msra.mxu0 %v3330
        %3506 = vmatpush.bf16.msra.mxu0 %v3328
        %3507 = vmatpush.bf16.msra.mxu0 %v3326
        %3508 = vmatpush.bf16.msra.mxu0 %v3324
        %3509 = vmatpush.bf16.msra.mxu0 %v3322
        %3510 = vmatpush.bf16.msra.mxu0 %v3320
        %3511 = vmatmul.bf16.gmra.mxu0 %v3118
        %v3512 = vpop.f32.mrf.mxu0
        %v3513 = vadd.f32 %v3124, %v3512
        %v3514 = vpop.f32.mrf.mxu0
        %v3515 = vadd.f32 %v3124, %v3514
        %3516 = vdwg.mxu0
        %3517 = vmatpush.bf16.msra.mxu0 %v3350
        %3518 = vmatpush.bf16.msra.mxu0 %v3348
        %3519 = vmatpush.bf16.msra.mxu0 %v3346
        %3520 = vmatpush.bf16.msra.mxu0 %v3344
        %3521 = vmatpush.bf16.msra.mxu0 %v3342
        %3522 = vmatpush.bf16.msra.mxu0 %v3340
        %3523 = vmatpush.bf16.msra.mxu0 %v3338
        %3524 = vmatpush.bf16.msra.mxu0 %v3336
        %3525 = vmatmul.bf16.gmra.mxu0 %v3119
        %v3526 = vpop.f32.mrf.mxu0
        %v3527 = vadd.f32 %v3513, %v3526
        %v3528 = vpop.f32.mrf.mxu0
        %v3529 = vadd.f32 %v3515, %v3528
        %3530 = vdwg.mxu0
        %3531 = vmatpush.bf16.msra.mxu0 %v3366
        %3532 = vmatpush.bf16.msra.mxu0 %v3364
        %3533 = vmatpush.bf16.msra.mxu0 %v3362
        %3534 = vmatpush.bf16.msra.mxu0 %v3360
        %3535 = vmatpush.bf16.msra.mxu0 %v3358
        %3536 = vmatpush.bf16.msra.mxu0 %v3356
        %3537 = vmatpush.bf16.msra.mxu0 %v3354
        %3538 = vmatpush.bf16.msra.mxu0 %v3352
        %3539 = vmatmul.bf16.gmra.mxu0 %v3120
        %v3540 = vpop.f32.mrf.mxu0
        %v3541 = vadd.f32 %v3527, %v3540
        %v3542 = vpop.f32.mrf.mxu0
        %v3543 = vadd.f32 %v3529, %v3542
        %3544 = vdwg.mxu0
        %3545 = vmatpush.bf16.msra.mxu0 %v3382
        %3546 = vmatpush.bf16.msra.mxu0 %v3380
        %3547 = vmatpush.bf16.msra.mxu0 %v3378
        %3548 = vmatpush.bf16.msra.mxu0 %v3376
        %3549 = vmatpush.bf16.msra.mxu0 %v3374
        %3550 = vmatpush.bf16.msra.mxu0 %v3372
        %3551 = vmatpush.bf16.msra.mxu0 %v3370
        %3552 = vmatpush.bf16.msra.mxu0 %v3368
        %3553 = vmatmul.bf16.gmra.mxu0 %v3121
        %v3554 = vpop.f32.mrf.mxu0
        %v3555 = vadd.f32 %v3541, %v3554
        %v3556 = vpop.f32.mrf.mxu0
        %v3557 = vadd.f32 %v3543, %v3556
        %3558 = vdwg.mxu0
        %v3559 = vmul.f32 %v3499, 0.2
        %v3560 = vmul.f32 %v3555, 0.2
        %v3561 = vmul.f32 %v3501, 0.2
        %v3562 = vmul.f32 %v3557, 0.2
        %v3563 = vmax.f32 %v3499, %v3559
        %v3564 = vmax.f32 %v3555, %v3560
        %v3565 = vmax.f32 %v3501, %v3561
        %v3566 = vmax.f32 %v3557, %v3562
        %v3567 = vld [vmem:[#allocation17] sm:$0xf]
        %v3568 = vld [vmem:[#allocation17 + $0x4] sm:$0xf]
        %v3569 = vld [vmem:[#allocation17 + $0x8] sm:$0xf]
        %v3570 = vld [vmem:[#allocation17 + $0xc] sm:$0xf]
        %v3571 = vld [vmem:[#allocation17 + $0x10] sm:$0xf]
        %v3572 = vld [vmem:[#allocation17 + $0x14] sm:$0xf]
        %v3573 = vld [vmem:[#allocation17 + $0x18] sm:$0xf]
        %v3574 = vld [vmem:[#allocation17 + $0x1c] sm:$0xf]
        %v3575 = vld [vmem:[#allocation17 + $0x20] sm:$0xf]
        %v3576 = vld [vmem:[#allocation17 + $0x24] sm:$0xf]
        %v3577 = vld [vmem:[#allocation17 + $0x28] sm:$0xf]
        %v3578 = vld [vmem:[#allocation17 + $0x2c] sm:$0xf]
        %v3579 = vld [vmem:[#allocation17 + $0x30] sm:$0xf]
        %v3580 = vld [vmem:[#allocation17 + $0x34] sm:$0xf]
        %v3581 = vld [vmem:[#allocation17 + $0x38] sm:$0xf]
        %v3582 = vld [vmem:[#allocation17 + $0x3c] sm:$0xf]
        %v3583 = vld [vmem:[#allocation17 + $0x40] sm:$0xf]
        %v3584 = vld [vmem:[#allocation17 + $0x44] sm:$0xf]
        %v3585 = vld [vmem:[#allocation17 + $0x48] sm:$0xf]
        %v3586 = vld [vmem:[#allocation17 + $0x4c] sm:$0xf]
        %v3587 = vld [vmem:[#allocation17 + $0x50] sm:$0xf]
        %v3588 = vld [vmem:[#allocation17 + $0x54] sm:$0xf]
        %v3589 = vld [vmem:[#allocation17 + $0x58] sm:$0xf]
        %v3590 = vld [vmem:[#allocation17 + $0x5c] sm:$0xf]
        %v3591 = vld [vmem:[#allocation17 + $0x60] sm:$0xf]
        %v3592 = vld [vmem:[#allocation17 + $0x64] sm:$0xf]
        %v3593 = vld [vmem:[#allocation17 + $0x68] sm:$0xf]
        %v3594 = vld [vmem:[#allocation17 + $0x6c] sm:$0xf]
        %v3595 = vld [vmem:[#allocation17 + $0x70] sm:$0xf]
        %v3596 = vld [vmem:[#allocation17 + $0x74] sm:$0xf]
        %v3597 = vld [vmem:[#allocation17 + $0x78] sm:$0xf]
        %v3598 = vld [vmem:[#allocation17 + $0x7c] sm:$0xf]
        %v3599 = vld [vmem:[#allocation19] sm:$0x1]
        %v3600 = vpack.c.bf16 %v3565, %v3563
        %v3601 = vpack.c.bf16 %v3566, %v3564
        %v3603 = vperm.slane %v3599, 0
        %v3637 = vunpack.c.l.b16 %v3567
        %v3638 = vunpack.c.l.b16 %v3568
        %v3639 = vunpack.c.l.b16 %v3569
        %v3640 = vunpack.c.l.b16 %v3570
        %v3641 = vunpack.c.l.b16 %v3571
        %v3642 = vunpack.c.l.b16 %v3572
        %v3643 = vunpack.c.l.b16 %v3573
        %v3644 = vunpack.c.l.b16 %v3574
        %v3645 = vunpack.c.l.b16 %v3575
        %v3646 = vunpack.c.l.b16 %v3576
        %v3647 = vunpack.c.l.b16 %v3577
        %v3648 = vunpack.c.l.b16 %v3578
        %v3649 = vunpack.c.l.b16 %v3579
        %v3650 = vunpack.c.l.b16 %v3580
        %v3651 = vunpack.c.l.b16 %v3581
        %v3652 = vunpack.c.l.b16 %v3582
        %v3653 = vunpack.c.l.b16 %v3583
        %v3654 = vunpack.c.l.b16 %v3584
        %v3655 = vunpack.c.l.b16 %v3585
        %v3656 = vunpack.c.l.b16 %v3586
        %v3657 = vunpack.c.l.b16 %v3587
        %v3658 = vunpack.c.l.b16 %v3588
        %v3659 = vunpack.c.l.b16 %v3589
        %v3660 = vunpack.c.l.b16 %v3590
        %v3661 = vunpack.c.l.b16 %v3591
        %v3662 = vunpack.c.l.b16 %v3592
        %v3663 = vunpack.c.l.b16 %v3593
        %v3664 = vunpack.c.l.b16 %v3594
        %v3665 = vunpack.c.l.b16 %v3595
        %v3666 = vunpack.c.l.b16 %v3596
        %v3667 = vunpack.c.l.b16 %v3597
        %v3668 = vunpack.c.l.b16 %v3598
        %v3669 = vpack.c.b16 %v3638, %v3637
        %v3670 = vpack.c.b16 %v3640, %v3639
        %v3671 = vpack.c.b16 %v3642, %v3641
        %v3672 = vpack.c.b16 %v3644, %v3643
        %v3673 = vpack.c.b16 %v3646, %v3645
        %v3674 = vpack.c.b16 %v3648, %v3647
        %v3675 = vpack.c.b16 %v3650, %v3649
        %v3676 = vpack.c.b16 %v3652, %v3651
        %v3677 = vpack.c.b16 %v3654, %v3653
        %v3678 = vpack.c.b16 %v3656, %v3655
        %v3679 = vpack.c.b16 %v3658, %v3657
        %v3680 = vpack.c.b16 %v3660, %v3659
        %v3681 = vpack.c.b16 %v3662, %v3661
        %v3682 = vpack.c.b16 %v3664, %v3663
        %v3683 = vpack.c.b16 %v3666, %v3665
        %v3684 = vpack.c.b16 %v3668, %v3667
        %3701 = vmatpush.bf16.msra.mxu0 %v3676
        %3702 = vmatpush.bf16.msra.mxu0 %v3675
        %3703 = vmatpush.bf16.msra.mxu0 %v3674
        %3704 = vmatpush.bf16.msra.mxu0 %v3673
        %3705 = vmatpush.bf16.msra.mxu0 %v3672
        %3706 = vmatpush.bf16.msra.mxu0 %v3671
        %3707 = vmatpush.bf16.msra.mxu0 %v3670
        %3708 = vmatpush.bf16.msra.mxu0 %v3669
        %3709 = vmatmul.bf16.gmra.mxu0 %v3600
        %v3710 = vpop.f32.mrf.mxu0
        %v3711 = vadd.f32 %v3603, %v3710
        %v3712 = vpop.f32.mrf.mxu0
        %v3713 = vadd.f32 %v3603, %v3712
        %3714 = vdwg.mxu0
        %3715 = vmatpush.bf16.msra.mxu0 %v3684
        %3716 = vmatpush.bf16.msra.mxu0 %v3683
        %3717 = vmatpush.bf16.msra.mxu0 %v3682
        %3718 = vmatpush.bf16.msra.mxu0 %v3681
        %3719 = vmatpush.bf16.msra.mxu0 %v3680
        %3720 = vmatpush.bf16.msra.mxu0 %v3679
        %3721 = vmatpush.bf16.msra.mxu0 %v3678
        %3722 = vmatpush.bf16.msra.mxu0 %v3677
        %3723 = vmatmul.bf16.gmra.mxu0 %v3601
        %v3724 = vpop.f32.mrf.mxu0
        %v3725 = vadd.f32 %v3711, %v3724
        %v3726 = vpop.f32.mrf.mxu0
        %v3727 = vadd.f32 %v3713, %v3726
        %3728 = vdwg.mxu0
        %v3729 = vmul.f32 %v3725, 0.2
        %v3730 = vmul.f32 %v3727, 0.2
        %v3731 = vmax.f32 %v3725, %v3729
        %v3732 = vmax.f32 %v3727, %v3730
        %v3733 = vld [vmem:[#allocation20] sm:$0xff]
        %v3734 = vld [vmem:[#allocation20 + $0x8] sm:$0xff]
        %v3735 = vld [vmem:[#allocation20 + $0x10] sm:$0xff]
        %v3736 = vld [vmem:[#allocation20 + $0x18] sm:$0xff]
        %v3737 = vld [vmem:[#allocation20 + $0x20] sm:$0xff]
        %v3738 = vld [vmem:[#allocation20 + $0x28] sm:$0xff]
        %v3739 = vld [vmem:[#allocation20 + $0x30] sm:$0xff]
        %v3740 = vld [vmem:[#allocation20 + $0x38] sm:$0xff]
        %v3741 = vld [vmem:[#allocation20 + $0x40] sm:$0xff]
        %v3742 = vld [vmem:[#allocation20 + $0x48] sm:$0xff]
        %v3743 = vld [vmem:[#allocation20 + $0x50] sm:$0xff]
        %v3744 = vld [vmem:[#allocation20 + $0x58] sm:$0xff]
        %v3745 = vld [vmem:[#allocation20 + $0x60] sm:$0xff]
        %v3746 = vld [vmem:[#allocation20 + $0x68] sm:$0xff]
        %v3747 = vld [vmem:[#allocation20 + $0x70] sm:$0xff]
        %v3748 = vld [vmem:[#allocation20 + $0x78] sm:$0xff]
        %v3749 = vld [vmem:[#allocation22] sm:$0x3]
        %v3750 = vpack.c.bf16 %v3732, %v3731
        %v3752 = vperm.slane %v3749, 0
        %v3753 = vperm.slane %v3749, 1
        %v3772 = vunpack.c.l.b16 %v3733
        %v3773 = vunpack.c.h.b16 %v3733
        %v3774 = vunpack.c.l.b16 %v3734
        %v3775 = vunpack.c.h.b16 %v3734
        %v3776 = vunpack.c.l.b16 %v3735
        %v3777 = vunpack.c.h.b16 %v3735
        %v3778 = vunpack.c.l.b16 %v3736
        %v3779 = vunpack.c.h.b16 %v3736
        %v3780 = vunpack.c.l.b16 %v3737
        %v3781 = vunpack.c.h.b16 %v3737
        %v3782 = vunpack.c.l.b16 %v3738
        %v3783 = vunpack.c.h.b16 %v3738
        %v3784 = vunpack.c.l.b16 %v3739
        %v3785 = vunpack.c.h.b16 %v3739
        %v3786 = vunpack.c.l.b16 %v3740
        %v3787 = vunpack.c.h.b16 %v3740
        %v3788 = vunpack.c.l.b16 %v3741
        %v3789 = vunpack.c.h.b16 %v3741
        %v3790 = vunpack.c.l.b16 %v3742
        %v3791 = vunpack.c.h.b16 %v3742
        %v3792 = vunpack.c.l.b16 %v3743
        %v3793 = vunpack.c.h.b16 %v3743
        %v3794 = vunpack.c.l.b16 %v3744
        %v3795 = vunpack.c.h.b16 %v3744
        %v3796 = vunpack.c.l.b16 %v3745
        %v3797 = vunpack.c.h.b16 %v3745
        %v3798 = vunpack.c.l.b16 %v3746
        %v3799 = vunpack.c.h.b16 %v3746
        %v3800 = vunpack.c.l.b16 %v3747
        %v3801 = vunpack.c.h.b16 %v3747
        %v3802 = vunpack.c.l.b16 %v3748
        %v3803 = vunpack.c.h.b16 %v3748
        %v3804 = vpack.c.b16 %v3774, %v3772
        %v3805 = vpack.c.b16 %v3775, %v3773
        %v3806 = vpack.c.b16 %v3778, %v3776
        %v3807 = vpack.c.b16 %v3779, %v3777
        %v3808 = vpack.c.b16 %v3782, %v3780
        %v3809 = vpack.c.b16 %v3783, %v3781
        %v3810 = vpack.c.b16 %v3786, %v3784
        %v3811 = vpack.c.b16 %v3787, %v3785
        %v3812 = vpack.c.b16 %v3790, %v3788
        %v3813 = vpack.c.b16 %v3791, %v3789
        %v3814 = vpack.c.b16 %v3794, %v3792
        %v3815 = vpack.c.b16 %v3795, %v3793
        %v3816 = vpack.c.b16 %v3798, %v3796
        %v3817 = vpack.c.b16 %v3799, %v3797
        %v3818 = vpack.c.b16 %v3802, %v3800
        %v3819 = vpack.c.b16 %v3803, %v3801
        %3836 = vmatpush.bf16.msra.mxu0 %v3818
        %3837 = vmatpush.bf16.msra.mxu0 %v3816
        %3838 = vmatpush.bf16.msra.mxu0 %v3814
        %3839 = vmatpush.bf16.msra.mxu0 %v3812
        %3840 = vmatpush.bf16.msra.mxu0 %v3810
        %3841 = vmatpush.bf16.msra.mxu0 %v3808
        %3842 = vmatpush.bf16.msra.mxu0 %v3806
        %3843 = vmatpush.bf16.msra.mxu0 %v3804
        %3844 = vmatmul.bf16.gmra.mxu0 %v3750
        %v3845 = vpop.f32.mrf.mxu0
        %v3846 = vadd.f32 %v3752, %v3845
        %v3847 = vpop.f32.mrf.mxu0
        %v3848 = vadd.f32 %v3752, %v3847
        %3849 = vdwg.mxu0
        %3850 = vmatpush.bf16.msra.mxu0 %v3819
        %3851 = vmatpush.bf16.msra.mxu0 %v3817
        %3852 = vmatpush.bf16.msra.mxu0 %v3815
        %3853 = vmatpush.bf16.msra.mxu0 %v3813
        %3854 = vmatpush.bf16.msra.mxu0 %v3811
        %3855 = vmatpush.bf16.msra.mxu0 %v3809
        %3856 = vmatpush.bf16.msra.mxu0 %v3807
        %3857 = vmatpush.bf16.msra.mxu0 %v3805
        %3858 = vmatmul.bf16.gmra.mxu0 %v3750
        %v3859 = vpop.f32.mrf.mxu0
        %v3860 = vadd.f32 %v3753, %v3859
        %v3861 = vpop.f32.mrf.mxu0
        %v3862 = vadd.f32 %v3753, %v3861
        %3863 = vdwg.mxu0
        %v3864 = vld [vmem:[%s944] sm:$0xff]
        %v3865 = vld [vmem:[%s944 + $0x8] sm:$0xff]
        %v3866 = vmul.f32 %v3860, %v3864
        %v3867 = vmul.f32 %v3862, %v3865
        %v3868 = vadd.f32 %v3846, %v3866
        %v3869 = vadd.f32 %v3848, %v3867
        %v3870 = vld [vmem:[#allocation23] sm:$0xf]
        %v3871 = vld [vmem:[#allocation23 + $0x4] sm:$0xf]
        %v3872 = vld [vmem:[#allocation23 + $0x8] sm:$0xf]
        %v3873 = vld [vmem:[#allocation23 + $0xc] sm:$0xf]
        %v3874 = vld [vmem:[#allocation25] sm:$0x1]
        %v3875 = vpack.c.bf16 %v3869, %v3868
        %v3877 = vperm.slane %v3874, 0
        %v3883 = vunpack.c.l.b16 %v3870
        %v3884 = vunpack.c.l.b16 %v3871
        %v3885 = vunpack.c.l.b16 %v3872
        %v3886 = vunpack.c.l.b16 %v3873
        %v3887 = vpack.c.b16 %v3884, %v3883
        %v3888 = vpack.c.b16 %v3886, %v3885
        %vm3891 = vcmask 261120
        %v3893 = vsel %vm3891, %v3875, 0
        %3895 = vmatpush.bf16.msra.mxu0 0
        %3896 = vmatpush.bf16.msra.mxu0 0
        %3897 = vmatpush.bf16.msra.mxu0 0
        %3898 = vmatpush.bf16.msra.mxu0 0
        %3899 = vmatpush.bf16.msra.mxu0 0
        %3900 = vmatpush.bf16.msra.mxu0 0
        %3901 = vmatpush.bf16.msra.mxu0 %v3888
        %3902 = vmatpush.bf16.msra.mxu0 %v3887
        %3903 = vmatmul.bf16.gmra.mxu0 %v3893
        %v3904 = vpop.f32.mrf.mxu0
        %v3905 = vadd.f32 %v3877, %v3904
        %v3906 = vpop.f32.mrf.mxu0
        %v3907 = vadd.f32 %v3877, %v3906
        %3908 = vdwg.mxu0
        %v3909 = vmul.f32 %v3905, 0.2
        %v3910 = vmul.f32 %v3907, 0.2
        %v3911 = vmax.f32 %v3905, %v3909
        %v3912 = vmax.f32 %v3907, %v3910
        %v3913 = vld [vmem:[#allocation26] sm:$0xff]
        %v3914 = vld [vmem:[#allocation26 + $0x8] sm:$0xff]
        %v3915 = vld [vmem:[#allocation26 + $0x10] sm:$0xff]
        %v3916 = vld [vmem:[#allocation26 + $0x18] sm:$0xff]
        %v3917 = vld [vmem:[#allocation26 + $0x20] sm:$0xff]
        %v3918 = vld [vmem:[#allocation26 + $0x28] sm:$0xff]
        %v3919 = vld [vmem:[#allocation26 + $0x30] sm:$0xff]
        %v3920 = vld [vmem:[#allocation26 + $0x38] sm:$0xff]
        %v3921 = vld [vmem:[#allocation26 + $0x40] sm:$0xff]
        %v3922 = vld [vmem:[#allocation26 + $0x48] sm:$0xff]
        %v3923 = vld [vmem:[#allocation26 + $0x50] sm:$0xff]
        %v3924 = vld [vmem:[#allocation26 + $0x58] sm:$0xff]
        %v3925 = vld [vmem:[#allocation26 + $0x60] sm:$0xff]
        %v3926 = vld [vmem:[#allocation26 + $0x68] sm:$0xff]
        %v3927 = vld [vmem:[#allocation26 + $0x70] sm:$0xff]
        %v3928 = vld [vmem:[#allocation26 + $0x78] sm:$0xff]
        %v3929 = vld [vmem:[%s17] sm:$0x3]
        %v3930 = vpack.c.bf16 %v3912, %v3911
        %v3932 = vperm.slane %v3929, 0
        %v3933 = vperm.slane %v3929, 1
        %v3952 = vunpack.c.l.b16 %v3913
        %v3953 = vunpack.c.h.b16 %v3913
        %v3954 = vunpack.c.l.b16 %v3914
        %v3955 = vunpack.c.h.b16 %v3914
        %v3956 = vunpack.c.l.b16 %v3915
        %v3957 = vunpack.c.h.b16 %v3915
        %v3958 = vunpack.c.l.b16 %v3916
        %v3959 = vunpack.c.h.b16 %v3916
        %v3960 = vunpack.c.l.b16 %v3917
        %v3961 = vunpack.c.h.b16 %v3917
        %v3962 = vunpack.c.l.b16 %v3918
        %v3963 = vunpack.c.h.b16 %v3918
        %v3964 = vunpack.c.l.b16 %v3919
        %v3965 = vunpack.c.h.b16 %v3919
        %v3966 = vunpack.c.l.b16 %v3920
        %v3967 = vunpack.c.h.b16 %v3920
        %v3968 = vunpack.c.l.b16 %v3921
        %v3969 = vunpack.c.h.b16 %v3921
        %v3970 = vunpack.c.l.b16 %v3922
        %v3971 = vunpack.c.h.b16 %v3922
        %v3972 = vunpack.c.l.b16 %v3923
        %v3973 = vunpack.c.h.b16 %v3923
        %v3974 = vunpack.c.l.b16 %v3924
        %v3975 = vunpack.c.h.b16 %v3924
        %v3976 = vunpack.c.l.b16 %v3925
        %v3977 = vunpack.c.h.b16 %v3925
        %v3978 = vunpack.c.l.b16 %v3926
        %v3979 = vunpack.c.h.b16 %v3926
        %v3980 = vunpack.c.l.b16 %v3927
        %v3981 = vunpack.c.h.b16 %v3927
        %v3982 = vunpack.c.l.b16 %v3928
        %v3983 = vunpack.c.h.b16 %v3928
        %v3984 = vpack.c.b16 %v3954, %v3952
        %v3985 = vpack.c.b16 %v3955, %v3953
        %v3986 = vpack.c.b16 %v3958, %v3956
        %v3987 = vpack.c.b16 %v3959, %v3957
        %v3988 = vpack.c.b16 %v3962, %v3960
        %v3989 = vpack.c.b16 %v3963, %v3961
        %v3990 = vpack.c.b16 %v3966, %v3964
        %v3991 = vpack.c.b16 %v3967, %v3965
        %v3992 = vpack.c.b16 %v3970, %v3968
        %v3993 = vpack.c.b16 %v3971, %v3969
        %v3994 = vpack.c.b16 %v3974, %v3972
        %v3995 = vpack.c.b16 %v3975, %v3973
        %v3996 = vpack.c.b16 %v3978, %v3976
        %v3997 = vpack.c.b16 %v3979, %v3977
        %v3998 = vpack.c.b16 %v3982, %v3980
        %v3999 = vpack.c.b16 %v3983, %v3981
        %4016 = vmatpush.bf16.msra.mxu0 %v3998
        %4017 = vmatpush.bf16.msra.mxu0 %v3996
        %4018 = vmatpush.bf16.msra.mxu0 %v3994
        %4019 = vmatpush.bf16.msra.mxu0 %v3992
        %4020 = vmatpush.bf16.msra.mxu0 %v3990
        %4021 = vmatpush.bf16.msra.mxu0 %v3988
        %4022 = vmatpush.bf16.msra.mxu0 %v3986
        %4023 = vmatpush.bf16.msra.mxu0 %v3984
        %4024 = vmatmul.bf16.gmra.mxu0 %v3930
        %v4025 = vpop.f32.mrf.mxu0
        %v4026 = vadd.f32 %v3932, %v4025
        %v4027 = vpop.f32.mrf.mxu0
        %v4028 = vadd.f32 %v3932, %v4027
        %4029 = vdwg.mxu0
        %4030 = vmatpush.bf16.msra.mxu0 %v3999
        %4031 = vmatpush.bf16.msra.mxu0 %v3997
        %4032 = vmatpush.bf16.msra.mxu0 %v3995
        %4033 = vmatpush.bf16.msra.mxu0 %v3993
        %4034 = vmatpush.bf16.msra.mxu0 %v3991
        %4035 = vmatpush.bf16.msra.mxu0 %v3989
        %4036 = vmatpush.bf16.msra.mxu0 %v3987
        %4037 = vmatpush.bf16.msra.mxu0 %v3985
        %4038 = vmatmul.bf16.gmra.mxu0 %v3930
        %v4039 = vpop.f32.mrf.mxu0
        %v4040 = vadd.f32 %v3933, %v4039
        %v4041 = vpop.f32.mrf.mxu0
        %v4042 = vadd.f32 %v3933, %v4041
        %4043 = vdwg.mxu0
        %v4044 = vmul.f32 %v4026, 0.2
        %v4045 = vmul.f32 %v4040, 0.2
        %v4046 = vmul.f32 %v4028, 0.2
        %v4047 = vmul.f32 %v4042, 0.2
        %v4048 = vmax.f32 %v4026, %v4044
        %v4049 = vmax.f32 %v4040, %v4045
        %v4050 = vmax.f32 %v4028, %v4046
        %v4051 = vmax.f32 %v4042, %v4047
        %v4052 = vld [vmem:[#allocation28] sm:$0xff]
        %v4053 = vld [vmem:[#allocation28 + $0x8] sm:$0xff]
        %v4054 = vld [vmem:[#allocation28 + $0x10] sm:$0xff]
        %v4055 = vld [vmem:[#allocation28 + $0x18] sm:$0xff]
        %v4056 = vld [vmem:[#allocation28 + $0x20] sm:$0xff]
        %v4057 = vld [vmem:[#allocation28 + $0x28] sm:$0xff]
        %v4058 = vld [vmem:[#allocation28 + $0x30] sm:$0xff]
        %v4059 = vld [vmem:[#allocation28 + $0x38] sm:$0xff]
        %v4060 = vld [vmem:[#allocation28 + $0x40] sm:$0xff]
        %v4061 = vld [vmem:[#allocation28 + $0x48] sm:$0xff]
        %v4062 = vld [vmem:[#allocation28 + $0x50] sm:$0xff]
        %v4063 = vld [vmem:[#allocation28 + $0x58] sm:$0xff]
        %v4064 = vld [vmem:[#allocation28 + $0x60] sm:$0xff]
        %v4065 = vld [vmem:[#allocation28 + $0x68] sm:$0xff]
        %v4066 = vld [vmem:[#allocation28 + $0x70] sm:$0xff]
        %v4067 = vld [vmem:[#allocation28 + $0x78] sm:$0xff]
        %v4068 = vld [vmem:[#allocation28 + $0x80] sm:$0xff]
        %v4069 = vld [vmem:[#allocation28 + $0x88] sm:$0xff]
        %v4070 = vld [vmem:[#allocation28 + $0x90] sm:$0xff]
        %v4071 = vld [vmem:[#allocation28 + $0x98] sm:$0xff]
        %v4072 = vld [vmem:[#allocation28 + $0xa0] sm:$0xff]
        %v4073 = vld [vmem:[#allocation28 + $0xa8] sm:$0xff]
        %v4074 = vld [vmem:[#allocation28 + $0xb0] sm:$0xff]
        %v4075 = vld [vmem:[#allocation28 + $0xb8] sm:$0xff]
        %v4076 = vld [vmem:[#allocation28 + $0xc0] sm:$0xff]
        %v4077 = vld [vmem:[#allocation28 + $0xc8] sm:$0xff]
        %v4078 = vld [vmem:[#allocation28 + $0xd0] sm:$0xff]
        %v4079 = vld [vmem:[#allocation28 + $0xd8] sm:$0xff]
        %v4080 = vld [vmem:[#allocation28 + $0xe0] sm:$0xff]
        %v4081 = vld [vmem:[#allocation28 + $0xe8] sm:$0xff]
        %v4082 = vld [vmem:[#allocation28 + $0xf0] sm:$0xff]
        %v4083 = vld [vmem:[#allocation28 + $0xf8] sm:$0xff]
        %v4084 = vld [vmem:[#allocation28 + $0x100] sm:$0xff]
        %v4085 = vld [vmem:[#allocation28 + $0x108] sm:$0xff]
        %v4086 = vld [vmem:[#allocation28 + $0x110] sm:$0xff]
        %v4087 = vld [vmem:[#allocation28 + $0x118] sm:$0xff]
        %v4088 = vld [vmem:[#allocation28 + $0x120] sm:$0xff]
        %v4089 = vld [vmem:[#allocation28 + $0x128] sm:$0xff]
        %v4090 = vld [vmem:[#allocation28 + $0x130] sm:$0xff]
        %v4091 = vld [vmem:[#allocation28 + $0x138] sm:$0xff]
        %v4092 = vld [vmem:[#allocation28 + $0x140] sm:$0xff]
        %v4093 = vld [vmem:[#allocation28 + $0x148] sm:$0xff]
        %v4094 = vld [vmem:[#allocation28 + $0x150] sm:$0xff]
        %v4095 = vld [vmem:[#allocation28 + $0x158] sm:$0xff]
        %v4096 = vld [vmem:[#allocation28 + $0x160] sm:$0xff]
        %v4097 = vld [vmem:[#allocation28 + $0x168] sm:$0xff]
        %v4098 = vld [vmem:[#allocation28 + $0x170] sm:$0xff]
        %v4099 = vld [vmem:[#allocation28 + $0x178] sm:$0xff]
        %v4100 = vld [vmem:[#allocation28 + $0x180] sm:$0xff]
        %v4101 = vld [vmem:[#allocation28 + $0x188] sm:$0xff]
        %v4102 = vld [vmem:[#allocation28 + $0x190] sm:$0xff]
        %v4103 = vld [vmem:[#allocation28 + $0x198] sm:$0xff]
        %v4104 = vld [vmem:[#allocation28 + $0x1a0] sm:$0xff]
        %v4105 = vld [vmem:[#allocation28 + $0x1a8] sm:$0xff]
        %v4106 = vld [vmem:[#allocation28 + $0x1b0] sm:$0xff]
        %v4107 = vld [vmem:[#allocation28 + $0x1b8] sm:$0xff]
        %v4108 = vld [vmem:[#allocation28 + $0x1c0] sm:$0xff]
        %v4109 = vld [vmem:[#allocation28 + $0x1c8] sm:$0xff]
        %v4110 = vld [vmem:[#allocation28 + $0x1d0] sm:$0xff]
        %v4111 = vld [vmem:[#allocation28 + $0x1d8] sm:$0xff]
        %v4112 = vld [vmem:[#allocation28 + $0x1e0] sm:$0xff]
        %v4113 = vld [vmem:[#allocation28 + $0x1e8] sm:$0xff]
        %v4114 = vld [vmem:[#allocation28 + $0x1f0] sm:$0xff]
        %v4115 = vld [vmem:[#allocation28 + $0x1f8] sm:$0xff]
        %v4116 = vld [vmem:[%s19] sm:$0xf]
        %v4117 = vpack.c.bf16 %v4050, %v4048
        %v4118 = vpack.c.bf16 %v4051, %v4049
        %v4120 = vperm.slane %v4116, 0
        %v4121 = vperm.slane %v4116, 1
        %v4122 = vperm.slane %v4116, 2
        %v4123 = vperm.slane %v4116, 3
        %v4192 = vunpack.c.l.b16 %v4052
        %v4193 = vunpack.c.h.b16 %v4052
        %v4194 = vunpack.c.l.b16 %v4053
        %v4195 = vunpack.c.h.b16 %v4053
        %v4196 = vunpack.c.l.b16 %v4054
        %v4197 = vunpack.c.h.b16 %v4054
        %v4198 = vunpack.c.l.b16 %v4055
        %v4199 = vunpack.c.h.b16 %v4055
        %v4200 = vunpack.c.l.b16 %v4056
        %v4201 = vunpack.c.h.b16 %v4056
        %v4202 = vunpack.c.l.b16 %v4057
        %v4203 = vunpack.c.h.b16 %v4057
        %v4204 = vunpack.c.l.b16 %v4058
        %v4205 = vunpack.c.h.b16 %v4058
        %v4206 = vunpack.c.l.b16 %v4059
        %v4207 = vunpack.c.h.b16 %v4059
        %v4208 = vunpack.c.l.b16 %v4060
        %v4209 = vunpack.c.h.b16 %v4060
        %v4210 = vunpack.c.l.b16 %v4061
        %v4211 = vunpack.c.h.b16 %v4061
        %v4212 = vunpack.c.l.b16 %v4062
        %v4213 = vunpack.c.h.b16 %v4062
        %v4214 = vunpack.c.l.b16 %v4063
        %v4215 = vunpack.c.h.b16 %v4063
        %v4216 = vunpack.c.l.b16 %v4064
        %v4217 = vunpack.c.h.b16 %v4064
        %v4218 = vunpack.c.l.b16 %v4065
        %v4219 = vunpack.c.h.b16 %v4065
        %v4220 = vunpack.c.l.b16 %v4066
        %v4221 = vunpack.c.h.b16 %v4066
        %v4222 = vunpack.c.l.b16 %v4067
        %v4223 = vunpack.c.h.b16 %v4067
        %v4224 = vunpack.c.l.b16 %v4068
        %v4225 = vunpack.c.h.b16 %v4068
        %v4226 = vunpack.c.l.b16 %v4069
        %v4227 = vunpack.c.h.b16 %v4069
        %v4228 = vunpack.c.l.b16 %v4070
        %v4229 = vunpack.c.h.b16 %v4070
        %v4230 = vunpack.c.l.b16 %v4071
        %v4231 = vunpack.c.h.b16 %v4071
        %v4232 = vunpack.c.l.b16 %v4072
        %v4233 = vunpack.c.h.b16 %v4072
        %v4234 = vunpack.c.l.b16 %v4073
        %v4235 = vunpack.c.h.b16 %v4073
        %v4236 = vunpack.c.l.b16 %v4074
        %v4237 = vunpack.c.h.b16 %v4074
        %v4238 = vunpack.c.l.b16 %v4075
        %v4239 = vunpack.c.h.b16 %v4075
        %v4240 = vunpack.c.l.b16 %v4076
        %v4241 = vunpack.c.h.b16 %v4076
        %v4242 = vunpack.c.l.b16 %v4077
        %v4243 = vunpack.c.h.b16 %v4077
        %v4244 = vunpack.c.l.b16 %v4078
        %v4245 = vunpack.c.h.b16 %v4078
        %v4246 = vunpack.c.l.b16 %v4079
        %v4247 = vunpack.c.h.b16 %v4079
        %v4248 = vunpack.c.l.b16 %v4080
        %v4249 = vunpack.c.h.b16 %v4080
        %v4250 = vunpack.c.l.b16 %v4081
        %v4251 = vunpack.c.h.b16 %v4081
        %v4252 = vunpack.c.l.b16 %v4082
        %v4253 = vunpack.c.h.b16 %v4082
        %v4254 = vunpack.c.l.b16 %v4083
        %v4255 = vunpack.c.h.b16 %v4083
        %v4256 = vunpack.c.l.b16 %v4084
        %v4257 = vunpack.c.h.b16 %v4084
        %v4258 = vunpack.c.l.b16 %v4085
        %v4259 = vunpack.c.h.b16 %v4085
        %v4260 = vunpack.c.l.b16 %v4086
        %v4261 = vunpack.c.h.b16 %v4086
        %v4262 = vunpack.c.l.b16 %v4087
        %v4263 = vunpack.c.h.b16 %v4087
        %v4264 = vunpack.c.l.b16 %v4088
        %v4265 = vunpack.c.h.b16 %v4088
        %v4266 = vunpack.c.l.b16 %v4089
        %v4267 = vunpack.c.h.b16 %v4089
        %v4268 = vunpack.c.l.b16 %v4090
        %v4269 = vunpack.c.h.b16 %v4090
        %v4270 = vunpack.c.l.b16 %v4091
        %v4271 = vunpack.c.h.b16 %v4091
        %v4272 = vunpack.c.l.b16 %v4092
        %v4273 = vunpack.c.h.b16 %v4092
        %v4274 = vunpack.c.l.b16 %v4093
        %v4275 = vunpack.c.h.b16 %v4093
        %v4276 = vunpack.c.l.b16 %v4094
        %v4277 = vunpack.c.h.b16 %v4094
        %v4278 = vunpack.c.l.b16 %v4095
        %v4279 = vunpack.c.h.b16 %v4095
        %v4280 = vunpack.c.l.b16 %v4096
        %v4281 = vunpack.c.h.b16 %v4096
        %v4282 = vunpack.c.l.b16 %v4097
        %v4283 = vunpack.c.h.b16 %v4097
        %v4284 = vunpack.c.l.b16 %v4098
        %v4285 = vunpack.c.h.b16 %v4098
        %v4286 = vunpack.c.l.b16 %v4099
        %v4287 = vunpack.c.h.b16 %v4099
        %v4288 = vunpack.c.l.b16 %v4100
        %v4289 = vunpack.c.h.b16 %v4100
        %v4290 = vunpack.c.l.b16 %v4101
        %v4291 = vunpack.c.h.b16 %v4101
        %v4292 = vunpack.c.l.b16 %v4102
        %v4293 = vunpack.c.h.b16 %v4102
        %v4294 = vunpack.c.l.b16 %v4103
        %v4295 = vunpack.c.h.b16 %v4103
        %v4296 = vunpack.c.l.b16 %v4104
        %v4297 = vunpack.c.h.b16 %v4104
        %v4298 = vunpack.c.l.b16 %v4105
        %v4299 = vunpack.c.h.b16 %v4105
        %v4300 = vunpack.c.l.b16 %v4106
        %v4301 = vunpack.c.h.b16 %v4106
        %v4302 = vunpack.c.l.b16 %v4107
        %v4303 = vunpack.c.h.b16 %v4107
        %v4304 = vunpack.c.l.b16 %v4108
        %v4305 = vunpack.c.h.b16 %v4108
        %v4306 = vunpack.c.l.b16 %v4109
        %v4307 = vunpack.c.h.b16 %v4109
        %v4308 = vunpack.c.l.b16 %v4110
        %v4309 = vunpack.c.h.b16 %v4110
        %v4310 = vunpack.c.l.b16 %v4111
        %v4311 = vunpack.c.h.b16 %v4111
        %v4312 = vunpack.c.l.b16 %v4112
        %v4313 = vunpack.c.h.b16 %v4112
        %v4314 = vunpack.c.l.b16 %v4113
        %v4315 = vunpack.c.h.b16 %v4113
        %v4316 = vunpack.c.l.b16 %v4114
        %v4317 = vunpack.c.h.b16 %v4114
        %v4318 = vunpack.c.l.b16 %v4115
        %v4319 = vunpack.c.h.b16 %v4115
        %v4320 = vpack.c.b16 %v4196, %v4192
        %v4321 = vpack.c.b16 %v4197, %v4193
        %v4322 = vpack.c.b16 %v4198, %v4194
        %v4323 = vpack.c.b16 %v4199, %v4195
        %v4324 = vpack.c.b16 %v4204, %v4200
        %v4325 = vpack.c.b16 %v4205, %v4201
        %v4326 = vpack.c.b16 %v4206, %v4202
        %v4327 = vpack.c.b16 %v4207, %v4203
        %v4328 = vpack.c.b16 %v4212, %v4208
        %v4329 = vpack.c.b16 %v4213, %v4209
        %v4330 = vpack.c.b16 %v4214, %v4210
        %v4331 = vpack.c.b16 %v4215, %v4211
        %v4332 = vpack.c.b16 %v4220, %v4216
        %v4333 = vpack.c.b16 %v4221, %v4217
        %v4334 = vpack.c.b16 %v4222, %v4218
        %v4335 = vpack.c.b16 %v4223, %v4219
        %v4336 = vpack.c.b16 %v4228, %v4224
        %v4337 = vpack.c.b16 %v4229, %v4225
        %v4338 = vpack.c.b16 %v4230, %v4226
        %v4339 = vpack.c.b16 %v4231, %v4227
        %v4340 = vpack.c.b16 %v4236, %v4232
        %v4341 = vpack.c.b16 %v4237, %v4233
        %v4342 = vpack.c.b16 %v4238, %v4234
        %v4343 = vpack.c.b16 %v4239, %v4235
        %v4344 = vpack.c.b16 %v4244, %v4240
        %v4345 = vpack.c.b16 %v4245, %v4241
        %v4346 = vpack.c.b16 %v4246, %v4242
        %v4347 = vpack.c.b16 %v4247, %v4243
        %v4348 = vpack.c.b16 %v4252, %v4248
        %v4349 = vpack.c.b16 %v4253, %v4249
        %v4350 = vpack.c.b16 %v4254, %v4250
        %v4351 = vpack.c.b16 %v4255, %v4251
        %v4352 = vpack.c.b16 %v4260, %v4256
        %v4353 = vpack.c.b16 %v4261, %v4257
        %v4354 = vpack.c.b16 %v4262, %v4258
        %v4355 = vpack.c.b16 %v4263, %v4259
        %v4356 = vpack.c.b16 %v4268, %v4264
        %v4357 = vpack.c.b16 %v4269, %v4265
        %v4358 = vpack.c.b16 %v4270, %v4266
        %v4359 = vpack.c.b16 %v4271, %v4267
        %v4360 = vpack.c.b16 %v4276, %v4272
        %v4361 = vpack.c.b16 %v4277, %v4273
        %v4362 = vpack.c.b16 %v4278, %v4274
        %v4363 = vpack.c.b16 %v4279, %v4275
        %v4364 = vpack.c.b16 %v4284, %v4280
        %v4365 = vpack.c.b16 %v4285, %v4281
        %v4366 = vpack.c.b16 %v4286, %v4282
        %v4367 = vpack.c.b16 %v4287, %v4283
        %v4368 = vpack.c.b16 %v4292, %v4288
        %v4369 = vpack.c.b16 %v4293, %v4289
        %v4370 = vpack.c.b16 %v4294, %v4290
        %v4371 = vpack.c.b16 %v4295, %v4291
        %v4372 = vpack.c.b16 %v4300, %v4296
        %v4373 = vpack.c.b16 %v4301, %v4297
        %v4374 = vpack.c.b16 %v4302, %v4298
        %v4375 = vpack.c.b16 %v4303, %v4299
        %v4376 = vpack.c.b16 %v4308, %v4304
        %v4377 = vpack.c.b16 %v4309, %v4305
        %v4378 = vpack.c.b16 %v4310, %v4306
        %v4379 = vpack.c.b16 %v4311, %v4307
        %v4380 = vpack.c.b16 %v4316, %v4312
        %v4381 = vpack.c.b16 %v4317, %v4313
        %v4382 = vpack.c.b16 %v4318, %v4314
        %v4383 = vpack.c.b16 %v4319, %v4315
        %4448 = vmatpush.bf16.msra.mxu0 %v4348
        %4449 = vmatpush.bf16.msra.mxu0 %v4344
        %4450 = vmatpush.bf16.msra.mxu0 %v4340
        %4451 = vmatpush.bf16.msra.mxu0 %v4336
        %4452 = vmatpush.bf16.msra.mxu0 %v4332
        %4453 = vmatpush.bf16.msra.mxu0 %v4328
        %4454 = vmatpush.bf16.msra.mxu0 %v4324
        %4455 = vmatpush.bf16.msra.mxu0 %v4320
        %4456 = vmatmul.bf16.gmra.mxu0 %v4117
        %v4457 = vpop.f32.mrf.mxu0
        %v4458 = vadd.f32 %v4120, %v4457
        %v4459 = vpop.f32.mrf.mxu0
        %v4460 = vadd.f32 %v4120, %v4459
        %4461 = vdwg.mxu0
        %4462 = vmatpush.bf16.msra.mxu0 %v4380
        %4463 = vmatpush.bf16.msra.mxu0 %v4376
        %4464 = vmatpush.bf16.msra.mxu0 %v4372
        %4465 = vmatpush.bf16.msra.mxu0 %v4368
        %4466 = vmatpush.bf16.msra.mxu0 %v4364
        %4467 = vmatpush.bf16.msra.mxu0 %v4360
        %4468 = vmatpush.bf16.msra.mxu0 %v4356
        %4469 = vmatpush.bf16.msra.mxu0 %v4352
        %4470 = vmatmul.bf16.gmra.mxu0 %v4118
        %v4471 = vpop.f32.mrf.mxu0
        %v4472 = vadd.f32 %v4458, %v4471
        %v4473 = vpop.f32.mrf.mxu0
        %v4474 = vadd.f32 %v4460, %v4473
        %4475 = vdwg.mxu0
        %4476 = vmatpush.bf16.msra.mxu0 %v4349
        %4477 = vmatpush.bf16.msra.mxu0 %v4345
        %4478 = vmatpush.bf16.msra.mxu0 %v4341
        %4479 = vmatpush.bf16.msra.mxu0 %v4337
        %4480 = vmatpush.bf16.msra.mxu0 %v4333
        %4481 = vmatpush.bf16.msra.mxu0 %v4329
        %4482 = vmatpush.bf16.msra.mxu0 %v4325
        %4483 = vmatpush.bf16.msra.mxu0 %v4321
        %4484 = vmatmul.bf16.gmra.mxu0 %v4117
        %v4485 = vpop.f32.mrf.mxu0
        %v4486 = vadd.f32 %v4121, %v4485
        %v4487 = vpop.f32.mrf.mxu0
        %v4488 = vadd.f32 %v4121, %v4487
        %4489 = vdwg.mxu0
        %4490 = vmatpush.bf16.msra.mxu0 %v4381
        %4491 = vmatpush.bf16.msra.mxu0 %v4377
        %4492 = vmatpush.bf16.msra.mxu0 %v4373
        %4493 = vmatpush.bf16.msra.mxu0 %v4369
        %4494 = vmatpush.bf16.msra.mxu0 %v4365
        %4495 = vmatpush.bf16.msra.mxu0 %v4361
        %4496 = vmatpush.bf16.msra.mxu0 %v4357
        %4497 = vmatpush.bf16.msra.mxu0 %v4353
        %4498 = vmatmul.bf16.gmra.mxu0 %v4118
        %v4499 = vpop.f32.mrf.mxu0
        %v4500 = vadd.f32 %v4486, %v4499
        %v4501 = vpop.f32.mrf.mxu0
        %v4502 = vadd.f32 %v4488, %v4501
        %4503 = vdwg.mxu0
        %4504 = vmatpush.bf16.msra.mxu0 %v4350
        %4505 = vmatpush.bf16.msra.mxu0 %v4346
        %4506 = vmatpush.bf16.msra.mxu0 %v4342
        %4507 = vmatpush.bf16.msra.mxu0 %v4338
        %4508 = vmatpush.bf16.msra.mxu0 %v4334
        %4509 = vmatpush.bf16.msra.mxu0 %v4330
        %4510 = vmatpush.bf16.msra.mxu0 %v4326
        %4511 = vmatpush.bf16.msra.mxu0 %v4322
        %4512 = vmatmul.bf16.gmra.mxu0 %v4117
        %v4513 = vpop.f32.mrf.mxu0
        %v4514 = vadd.f32 %v4122, %v4513
        %v4515 = vpop.f32.mrf.mxu0
        %v4516 = vadd.f32 %v4122, %v4515
        %4517 = vdwg.mxu0
        %4518 = vmatpush.bf16.msra.mxu0 %v4382
        %4519 = vmatpush.bf16.msra.mxu0 %v4378
        %4520 = vmatpush.bf16.msra.mxu0 %v4374
        %4521 = vmatpush.bf16.msra.mxu0 %v4370
        %4522 = vmatpush.bf16.msra.mxu0 %v4366
        %4523 = vmatpush.bf16.msra.mxu0 %v4362
        %4524 = vmatpush.bf16.msra.mxu0 %v4358
        %4525 = vmatpush.bf16.msra.mxu0 %v4354
        %4526 = vmatmul.bf16.gmra.mxu0 %v4118
        %v4527 = vpop.f32.mrf.mxu0
        %v4528 = vadd.f32 %v4514, %v4527
        %v4529 = vpop.f32.mrf.mxu0
        %v4530 = vadd.f32 %v4516, %v4529
        %4531 = vdwg.mxu0
        %4532 = vmatpush.bf16.msra.mxu0 %v4351
        %4533 = vmatpush.bf16.msra.mxu0 %v4347
        %4534 = vmatpush.bf16.msra.mxu0 %v4343
        %4535 = vmatpush.bf16.msra.mxu0 %v4339
        %4536 = vmatpush.bf16.msra.mxu0 %v4335
        %4537 = vmatpush.bf16.msra.mxu0 %v4331
        %4538 = vmatpush.bf16.msra.mxu0 %v4327
        %4539 = vmatpush.bf16.msra.mxu0 %v4323
        %4540 = vmatmul.bf16.gmra.mxu0 %v4117
        %v4541 = vpop.f32.mrf.mxu0
        %v4542 = vadd.f32 %v4123, %v4541
        %v4543 = vpop.f32.mrf.mxu0
        %v4544 = vadd.f32 %v4123, %v4543
        %4545 = vdwg.mxu0
        %4546 = vmatpush.bf16.msra.mxu0 %v4383
        %4547 = vmatpush.bf16.msra.mxu0 %v4379
        %4548 = vmatpush.bf16.msra.mxu0 %v4375
        %4549 = vmatpush.bf16.msra.mxu0 %v4371
        %4550 = vmatpush.bf16.msra.mxu0 %v4367
        %4551 = vmatpush.bf16.msra.mxu0 %v4363
        %4552 = vmatpush.bf16.msra.mxu0 %v4359
        %4553 = vmatpush.bf16.msra.mxu0 %v4355
        %4554 = vmatmul.bf16.gmra.mxu0 %v4118
        %v4555 = vpop.f32.mrf.mxu0
        %v4556 = vadd.f32 %v4542, %v4555
        %v4557 = vpop.f32.mrf.mxu0
        %v4558 = vadd.f32 %v4544, %v4557
        %4559 = vdwg.mxu0
        %v4560 = vmul.f32 %v4472, 0.2
        %v4561 = vmul.f32 %v4500, 0.2
        %v4562 = vmul.f32 %v4528, 0.2
        %v4563 = vmul.f32 %v4556, 0.2
        %v4564 = vmul.f32 %v4474, 0.2
        %v4565 = vmul.f32 %v4502, 0.2
        %v4566 = vmul.f32 %v4530, 0.2
        %v4567 = vmul.f32 %v4558, 0.2
        %v4568 = vmax.f32 %v4472, %v4560
        %v4569 = vmax.f32 %v4500, %v4561
        %v4570 = vmax.f32 %v4528, %v4562
        %v4571 = vmax.f32 %v4556, %v4563
        %v4572 = vmax.f32 %v4474, %v4564
        %v4573 = vmax.f32 %v4502, %v4565
        %v4574 = vmax.f32 %v4530, %v4566
        %v4575 = vmax.f32 %v4558, %v4567
        %v4576 = vld [vmem:[#allocation29] sm:$0xff]
        %v4577 = vld [vmem:[#allocation29 + $0x8] sm:$0xff]
        %v4578 = vld [vmem:[#allocation29 + $0x10] sm:$0xff]
        %v4579 = vld [vmem:[#allocation29 + $0x18] sm:$0xff]
        %v4580 = vld [vmem:[#allocation29 + $0x20] sm:$0xff]
        %v4581 = vld [vmem:[#allocation29 + $0x28] sm:$0xff]
        %v4582 = vld [vmem:[#allocation29 + $0x30] sm:$0xff]
        %v4583 = vld [vmem:[#allocation29 + $0x38] sm:$0xff]
        %v4584 = vld [vmem:[#allocation29 + $0x40] sm:$0xff]
        %v4585 = vld [vmem:[#allocation29 + $0x48] sm:$0xff]
        %v4586 = vld [vmem:[#allocation29 + $0x50] sm:$0xff]
        %v4587 = vld [vmem:[#allocation29 + $0x58] sm:$0xff]
        %v4588 = vld [vmem:[#allocation29 + $0x60] sm:$0xff]
        %v4589 = vld [vmem:[#allocation29 + $0x68] sm:$0xff]
        %v4590 = vld [vmem:[#allocation29 + $0x70] sm:$0xff]
        %v4591 = vld [vmem:[#allocation29 + $0x78] sm:$0xff]
        %v4592 = vld [vmem:[#allocation29 + $0x80] sm:$0xff]
        %v4593 = vld [vmem:[#allocation29 + $0x88] sm:$0xff]
        %v4594 = vld [vmem:[#allocation29 + $0x90] sm:$0xff]
        %v4595 = vld [vmem:[#allocation29 + $0x98] sm:$0xff]
        %v4596 = vld [vmem:[#allocation29 + $0xa0] sm:$0xff]
        %v4597 = vld [vmem:[#allocation29 + $0xa8] sm:$0xff]
        %v4598 = vld [vmem:[#allocation29 + $0xb0] sm:$0xff]
        %v4599 = vld [vmem:[#allocation29 + $0xb8] sm:$0xff]
        %v4600 = vld [vmem:[#allocation29 + $0xc0] sm:$0xff]
        %v4601 = vld [vmem:[#allocation29 + $0xc8] sm:$0xff]
        %v4602 = vld [vmem:[#allocation29 + $0xd0] sm:$0xff]
        %v4603 = vld [vmem:[#allocation29 + $0xd8] sm:$0xff]
        %v4604 = vld [vmem:[#allocation29 + $0xe0] sm:$0xff]
        %v4605 = vld [vmem:[#allocation29 + $0xe8] sm:$0xff]
        %v4606 = vld [vmem:[#allocation29 + $0xf0] sm:$0xff]
        %v4607 = vld [vmem:[#allocation29 + $0xf8] sm:$0xff]
        %v4608 = vld [vmem:[#allocation29 + $0x100] sm:$0xff]
        %v4609 = vld [vmem:[#allocation29 + $0x108] sm:$0xff]
        %v4610 = vld [vmem:[#allocation29 + $0x110] sm:$0xff]
        %v4611 = vld [vmem:[#allocation29 + $0x118] sm:$0xff]
        %v4612 = vld [vmem:[#allocation29 + $0x120] sm:$0xff]
        %v4613 = vld [vmem:[#allocation29 + $0x128] sm:$0xff]
        %v4614 = vld [vmem:[#allocation29 + $0x130] sm:$0xff]
        %v4615 = vld [vmem:[#allocation29 + $0x138] sm:$0xff]
        %v4616 = vld [vmem:[#allocation29 + $0x140] sm:$0xff]
        %v4617 = vld [vmem:[#allocation29 + $0x148] sm:$0xff]
        %v4618 = vld [vmem:[#allocation29 + $0x150] sm:$0xff]
        %v4619 = vld [vmem:[#allocation29 + $0x158] sm:$0xff]
        %v4620 = vld [vmem:[#allocation29 + $0x160] sm:$0xff]
        %v4621 = vld [vmem:[#allocation29 + $0x168] sm:$0xff]
        %v4622 = vld [vmem:[#allocation29 + $0x170] sm:$0xff]
        %v4623 = vld [vmem:[#allocation29 + $0x178] sm:$0xff]
        %v4624 = vld [vmem:[#allocation29 + $0x180] sm:$0xff]
        %v4625 = vld [vmem:[#allocation29 + $0x188] sm:$0xff]
        %v4626 = vld [vmem:[#allocation29 + $0x190] sm:$0xff]
        %v4627 = vld [vmem:[#allocation29 + $0x198] sm:$0xff]
        %v4628 = vld [vmem:[#allocation29 + $0x1a0] sm:$0xff]
        %v4629 = vld [vmem:[#allocation29 + $0x1a8] sm:$0xff]
        %v4630 = vld [vmem:[#allocation29 + $0x1b0] sm:$0xff]
        %v4631 = vld [vmem:[#allocation29 + $0x1b8] sm:$0xff]
        %v4632 = vld [vmem:[#allocation29 + $0x1c0] sm:$0xff]
        %v4633 = vld [vmem:[#allocation29 + $0x1c8] sm:$0xff]
        %v4634 = vld [vmem:[#allocation29 + $0x1d0] sm:$0xff]
        %v4635 = vld [vmem:[#allocation29 + $0x1d8] sm:$0xff]
        %v4636 = vld [vmem:[#allocation29 + $0x1e0] sm:$0xff]
        %v4637 = vld [vmem:[#allocation29 + $0x1e8] sm:$0xff]
        %v4638 = vld [vmem:[#allocation29 + $0x1f0] sm:$0xff]
        %v4639 = vld [vmem:[#allocation29 + $0x1f8] sm:$0xff]
        %v4640 = vld [vmem:[%s21] sm:$0x3]
        %v4641 = vpack.c.bf16 %v4572, %v4568
        %v4642 = vpack.c.bf16 %v4573, %v4569
        %v4643 = vpack.c.bf16 %v4574, %v4570
        %v4644 = vpack.c.bf16 %v4575, %v4571
        %v4646 = vperm.slane %v4640, 0
        %v4647 = vperm.slane %v4640, 1
        %v4714 = vunpack.c.l.b16 %v4576
        %v4715 = vunpack.c.h.b16 %v4576
        %v4716 = vunpack.c.l.b16 %v4577
        %v4717 = vunpack.c.h.b16 %v4577
        %v4718 = vunpack.c.l.b16 %v4578
        %v4719 = vunpack.c.h.b16 %v4578
        %v4720 = vunpack.c.l.b16 %v4579
        %v4721 = vunpack.c.h.b16 %v4579
        %v4722 = vunpack.c.l.b16 %v4580
        %v4723 = vunpack.c.h.b16 %v4580
        %v4724 = vunpack.c.l.b16 %v4581
        %v4725 = vunpack.c.h.b16 %v4581
        %v4726 = vunpack.c.l.b16 %v4582
        %v4727 = vunpack.c.h.b16 %v4582
        %v4728 = vunpack.c.l.b16 %v4583
        %v4729 = vunpack.c.h.b16 %v4583
        %v4730 = vunpack.c.l.b16 %v4584
        %v4731 = vunpack.c.h.b16 %v4584
        %v4732 = vunpack.c.l.b16 %v4585
        %v4733 = vunpack.c.h.b16 %v4585
        %v4734 = vunpack.c.l.b16 %v4586
        %v4735 = vunpack.c.h.b16 %v4586
        %v4736 = vunpack.c.l.b16 %v4587
        %v4737 = vunpack.c.h.b16 %v4587
        %v4738 = vunpack.c.l.b16 %v4588
        %v4739 = vunpack.c.h.b16 %v4588
        %v4740 = vunpack.c.l.b16 %v4589
        %v4741 = vunpack.c.h.b16 %v4589
        %v4742 = vunpack.c.l.b16 %v4590
        %v4743 = vunpack.c.h.b16 %v4590
        %v4744 = vunpack.c.l.b16 %v4591
        %v4745 = vunpack.c.h.b16 %v4591
        %v4746 = vunpack.c.l.b16 %v4592
        %v4747 = vunpack.c.h.b16 %v4592
        %v4748 = vunpack.c.l.b16 %v4593
        %v4749 = vunpack.c.h.b16 %v4593
        %v4750 = vunpack.c.l.b16 %v4594
        %v4751 = vunpack.c.h.b16 %v4594
        %v4752 = vunpack.c.l.b16 %v4595
        %v4753 = vunpack.c.h.b16 %v4595
        %v4754 = vunpack.c.l.b16 %v4596
        %v4755 = vunpack.c.h.b16 %v4596
        %v4756 = vunpack.c.l.b16 %v4597
        %v4757 = vunpack.c.h.b16 %v4597
        %v4758 = vunpack.c.l.b16 %v4598
        %v4759 = vunpack.c.h.b16 %v4598
        %v4760 = vunpack.c.l.b16 %v4599
        %v4761 = vunpack.c.h.b16 %v4599
        %v4762 = vunpack.c.l.b16 %v4600
        %v4763 = vunpack.c.h.b16 %v4600
        %v4764 = vunpack.c.l.b16 %v4601
        %v4765 = vunpack.c.h.b16 %v4601
        %v4766 = vunpack.c.l.b16 %v4602
        %v4767 = vunpack.c.h.b16 %v4602
        %v4768 = vunpack.c.l.b16 %v4603
        %v4769 = vunpack.c.h.b16 %v4603
        %v4770 = vunpack.c.l.b16 %v4604
        %v4771 = vunpack.c.h.b16 %v4604
        %v4772 = vunpack.c.l.b16 %v4605
        %v4773 = vunpack.c.h.b16 %v4605
        %v4774 = vunpack.c.l.b16 %v4606
        %v4775 = vunpack.c.h.b16 %v4606
        %v4776 = vunpack.c.l.b16 %v4607
        %v4777 = vunpack.c.h.b16 %v4607
        %v4778 = vunpack.c.l.b16 %v4608
        %v4779 = vunpack.c.h.b16 %v4608
        %v4780 = vunpack.c.l.b16 %v4609
        %v4781 = vunpack.c.h.b16 %v4609
        %v4782 = vunpack.c.l.b16 %v4610
        %v4783 = vunpack.c.h.b16 %v4610
        %v4784 = vunpack.c.l.b16 %v4611
        %v4785 = vunpack.c.h.b16 %v4611
        %v4786 = vunpack.c.l.b16 %v4612
        %v4787 = vunpack.c.h.b16 %v4612
        %v4788 = vunpack.c.l.b16 %v4613
        %v4789 = vunpack.c.h.b16 %v4613
        %v4790 = vunpack.c.l.b16 %v4614
        %v4791 = vunpack.c.h.b16 %v4614
        %v4792 = vunpack.c.l.b16 %v4615
        %v4793 = vunpack.c.h.b16 %v4615
        %v4794 = vunpack.c.l.b16 %v4616
        %v4795 = vunpack.c.h.b16 %v4616
        %v4796 = vunpack.c.l.b16 %v4617
        %v4797 = vunpack.c.h.b16 %v4617
        %v4798 = vunpack.c.l.b16 %v4618
        %v4799 = vunpack.c.h.b16 %v4618
        %v4800 = vunpack.c.l.b16 %v4619
        %v4801 = vunpack.c.h.b16 %v4619
        %v4802 = vunpack.c.l.b16 %v4620
        %v4803 = vunpack.c.h.b16 %v4620
        %v4804 = vunpack.c.l.b16 %v4621
        %v4805 = vunpack.c.h.b16 %v4621
        %v4806 = vunpack.c.l.b16 %v4622
        %v4807 = vunpack.c.h.b16 %v4622
        %v4808 = vunpack.c.l.b16 %v4623
        %v4809 = vunpack.c.h.b16 %v4623
        %v4810 = vunpack.c.l.b16 %v4624
        %v4811 = vunpack.c.h.b16 %v4624
        %v4812 = vunpack.c.l.b16 %v4625
        %v4813 = vunpack.c.h.b16 %v4625
        %v4814 = vunpack.c.l.b16 %v4626
        %v4815 = vunpack.c.h.b16 %v4626
        %v4816 = vunpack.c.l.b16 %v4627
        %v4817 = vunpack.c.h.b16 %v4627
        %v4818 = vunpack.c.l.b16 %v4628
        %v4819 = vunpack.c.h.b16 %v4628
        %v4820 = vunpack.c.l.b16 %v4629
        %v4821 = vunpack.c.h.b16 %v4629
        %v4822 = vunpack.c.l.b16 %v4630
        %v4823 = vunpack.c.h.b16 %v4630
        %v4824 = vunpack.c.l.b16 %v4631
        %v4825 = vunpack.c.h.b16 %v4631
        %v4826 = vunpack.c.l.b16 %v4632
        %v4827 = vunpack.c.h.b16 %v4632
        %v4828 = vunpack.c.l.b16 %v4633
        %v4829 = vunpack.c.h.b16 %v4633
        %v4830 = vunpack.c.l.b16 %v4634
        %v4831 = vunpack.c.h.b16 %v4634
        %v4832 = vunpack.c.l.b16 %v4635
        %v4833 = vunpack.c.h.b16 %v4635
        %v4834 = vunpack.c.l.b16 %v4636
        %v4835 = vunpack.c.h.b16 %v4636
        %v4836 = vunpack.c.l.b16 %v4637
        %v4837 = vunpack.c.h.b16 %v4637
        %v4838 = vunpack.c.l.b16 %v4638
        %v4839 = vunpack.c.h.b16 %v4638
        %v4840 = vunpack.c.l.b16 %v4639
        %v4841 = vunpack.c.h.b16 %v4639
        %v4842 = vpack.c.b16 %v4716, %v4714
        %v4843 = vpack.c.b16 %v4717, %v4715
        %v4844 = vpack.c.b16 %v4720, %v4718
        %v4845 = vpack.c.b16 %v4721, %v4719
        %v4846 = vpack.c.b16 %v4724, %v4722
        %v4847 = vpack.c.b16 %v4725, %v4723
        %v4848 = vpack.c.b16 %v4728, %v4726
        %v4849 = vpack.c.b16 %v4729, %v4727
        %v4850 = vpack.c.b16 %v4732, %v4730
        %v4851 = vpack.c.b16 %v4733, %v4731
        %v4852 = vpack.c.b16 %v4736, %v4734
        %v4853 = vpack.c.b16 %v4737, %v4735
        %v4854 = vpack.c.b16 %v4740, %v4738
        %v4855 = vpack.c.b16 %v4741, %v4739
        %v4856 = vpack.c.b16 %v4744, %v4742
        %v4857 = vpack.c.b16 %v4745, %v4743
        %v4858 = vpack.c.b16 %v4748, %v4746
        %v4859 = vpack.c.b16 %v4749, %v4747
        %v4860 = vpack.c.b16 %v4752, %v4750
        %v4861 = vpack.c.b16 %v4753, %v4751
        %v4862 = vpack.c.b16 %v4756, %v4754
        %v4863 = vpack.c.b16 %v4757, %v4755
        %v4864 = vpack.c.b16 %v4760, %v4758
        %v4865 = vpack.c.b16 %v4761, %v4759
        %v4866 = vpack.c.b16 %v4764, %v4762
        %v4867 = vpack.c.b16 %v4765, %v4763
        %v4868 = vpack.c.b16 %v4768, %v4766
        %v4869 = vpack.c.b16 %v4769, %v4767
        %v4870 = vpack.c.b16 %v4772, %v4770
        %v4871 = vpack.c.b16 %v4773, %v4771
        %v4872 = vpack.c.b16 %v4776, %v4774
        %v4873 = vpack.c.b16 %v4777, %v4775
        %v4874 = vpack.c.b16 %v4780, %v4778
        %v4875 = vpack.c.b16 %v4781, %v4779
        %v4876 = vpack.c.b16 %v4784, %v4782
        %v4877 = vpack.c.b16 %v4785, %v4783
        %v4878 = vpack.c.b16 %v4788, %v4786
        %v4879 = vpack.c.b16 %v4789, %v4787
        %v4880 = vpack.c.b16 %v4792, %v4790
        %v4881 = vpack.c.b16 %v4793, %v4791
        %v4882 = vpack.c.b16 %v4796, %v4794
        %v4883 = vpack.c.b16 %v4797, %v4795
        %v4884 = vpack.c.b16 %v4800, %v4798
        %v4885 = vpack.c.b16 %v4801, %v4799
        %v4886 = vpack.c.b16 %v4804, %v4802
        %v4887 = vpack.c.b16 %v4805, %v4803
        %v4888 = vpack.c.b16 %v4808, %v4806
        %v4889 = vpack.c.b16 %v4809, %v4807
        %v4890 = vpack.c.b16 %v4812, %v4810
        %v4891 = vpack.c.b16 %v4813, %v4811
        %v4892 = vpack.c.b16 %v4816, %v4814
        %v4893 = vpack.c.b16 %v4817, %v4815
        %v4894 = vpack.c.b16 %v4820, %v4818
        %v4895 = vpack.c.b16 %v4821, %v4819
        %v4896 = vpack.c.b16 %v4824, %v4822
        %v4897 = vpack.c.b16 %v4825, %v4823
        %v4898 = vpack.c.b16 %v4828, %v4826
        %v4899 = vpack.c.b16 %v4829, %v4827
        %v4900 = vpack.c.b16 %v4832, %v4830
        %v4901 = vpack.c.b16 %v4833, %v4831
        %v4902 = vpack.c.b16 %v4836, %v4834
        %v4903 = vpack.c.b16 %v4837, %v4835
        %v4904 = vpack.c.b16 %v4840, %v4838
        %v4905 = vpack.c.b16 %v4841, %v4839
        %4970 = vmatpush.bf16.msra.mxu0 %v4856
        %4971 = vmatpush.bf16.msra.mxu0 %v4854
        %4972 = vmatpush.bf16.msra.mxu0 %v4852
        %4973 = vmatpush.bf16.msra.mxu0 %v4850
        %4974 = vmatpush.bf16.msra.mxu0 %v4848
        %4975 = vmatpush.bf16.msra.mxu0 %v4846
        %4976 = vmatpush.bf16.msra.mxu0 %v4844
        %4977 = vmatpush.bf16.msra.mxu0 %v4842
        %4978 = vmatmul.bf16.gmra.mxu0 %v4641
        %v4979 = vpop.f32.mrf.mxu0
        %v4980 = vadd.f32 %v4646, %v4979
        %v4981 = vpop.f32.mrf.mxu0
        %v4982 = vadd.f32 %v4646, %v4981
        %4983 = vdwg.mxu0
        %4984 = vmatpush.bf16.msra.mxu0 %v4872
        %4985 = vmatpush.bf16.msra.mxu0 %v4870
        %4986 = vmatpush.bf16.msra.mxu0 %v4868
        %4987 = vmatpush.bf16.msra.mxu0 %v4866
        %4988 = vmatpush.bf16.msra.mxu0 %v4864
        %4989 = vmatpush.bf16.msra.mxu0 %v4862
        %4990 = vmatpush.bf16.msra.mxu0 %v4860
        %4991 = vmatpush.bf16.msra.mxu0 %v4858
        %4992 = vmatmul.bf16.gmra.mxu0 %v4642
        %v4993 = vpop.f32.mrf.mxu0
        %v4994 = vadd.f32 %v4980, %v4993
        %v4995 = vpop.f32.mrf.mxu0
        %v4996 = vadd.f32 %v4982, %v4995
        %4997 = vdwg.mxu0
        %4998 = vmatpush.bf16.msra.mxu0 %v4888
        %4999 = vmatpush.bf16.msra.mxu0 %v4886
        %5000 = vmatpush.bf16.msra.mxu0 %v4884
        %5001 = vmatpush.bf16.msra.mxu0 %v4882
        %5002 = vmatpush.bf16.msra.mxu0 %v4880
        %5003 = vmatpush.bf16.msra.mxu0 %v4878
        %5004 = vmatpush.bf16.msra.mxu0 %v4876
        %5005 = vmatpush.bf16.msra.mxu0 %v4874
        %5006 = vmatmul.bf16.gmra.mxu0 %v4643
        %v5007 = vpop.f32.mrf.mxu0
        %v5008 = vadd.f32 %v4994, %v5007
        %v5009 = vpop.f32.mrf.mxu0
        %v5010 = vadd.f32 %v4996, %v5009
        %5011 = vdwg.mxu0
        %5012 = vmatpush.bf16.msra.mxu0 %v4904
        %5013 = vmatpush.bf16.msra.mxu0 %v4902
        %5014 = vmatpush.bf16.msra.mxu0 %v4900
        %5015 = vmatpush.bf16.msra.mxu0 %v4898
        %5016 = vmatpush.bf16.msra.mxu0 %v4896
        %5017 = vmatpush.bf16.msra.mxu0 %v4894
        %5018 = vmatpush.bf16.msra.mxu0 %v4892
        %5019 = vmatpush.bf16.msra.mxu0 %v4890
        %5020 = vmatmul.bf16.gmra.mxu0 %v4644
        %v5021 = vpop.f32.mrf.mxu0
        %v5022 = vadd.f32 %v5008, %v5021
        %v5023 = vpop.f32.mrf.mxu0
        %v5024 = vadd.f32 %v5010, %v5023
        %5025 = vdwg.mxu0
        %5026 = vmatpush.bf16.msra.mxu0 %v4857
        %5027 = vmatpush.bf16.msra.mxu0 %v4855
        %5028 = vmatpush.bf16.msra.mxu0 %v4853
        %5029 = vmatpush.bf16.msra.mxu0 %v4851
        %5030 = vmatpush.bf16.msra.mxu0 %v4849
        %5031 = vmatpush.bf16.msra.mxu0 %v4847
        %5032 = vmatpush.bf16.msra.mxu0 %v4845
        %5033 = vmatpush.bf16.msra.mxu0 %v4843
        %5034 = vmatmul.bf16.gmra.mxu0 %v4641
        %v5035 = vpop.f32.mrf.mxu0
        %v5036 = vadd.f32 %v4647, %v5035
        %v5037 = vpop.f32.mrf.mxu0
        %v5038 = vadd.f32 %v4647, %v5037
        %5039 = vdwg.mxu0
        %5040 = vmatpush.bf16.msra.mxu0 %v4873
        %5041 = vmatpush.bf16.msra.mxu0 %v4871
        %5042 = vmatpush.bf16.msra.mxu0 %v4869
        %5043 = vmatpush.bf16.msra.mxu0 %v4867
        %5044 = vmatpush.bf16.msra.mxu0 %v4865
        %5045 = vmatpush.bf16.msra.mxu0 %v4863
        %5046 = vmatpush.bf16.msra.mxu0 %v4861
        %5047 = vmatpush.bf16.msra.mxu0 %v4859
        %5048 = vmatmul.bf16.gmra.mxu0 %v4642
        %v5049 = vpop.f32.mrf.mxu0
        %v5050 = vadd.f32 %v5036, %v5049
        %v5051 = vpop.f32.mrf.mxu0
        %v5052 = vadd.f32 %v5038, %v5051
        %5053 = vdwg.mxu0
        %5054 = vmatpush.bf16.msra.mxu0 %v4889
        %5055 = vmatpush.bf16.msra.mxu0 %v4887
        %5056 = vmatpush.bf16.msra.mxu0 %v4885
        %5057 = vmatpush.bf16.msra.mxu0 %v4883
        %5058 = vmatpush.bf16.msra.mxu0 %v4881
        %5059 = vmatpush.bf16.msra.mxu0 %v4879
        %5060 = vmatpush.bf16.msra.mxu0 %v4877
        %5061 = vmatpush.bf16.msra.mxu0 %v4875
        %5062 = vmatmul.bf16.gmra.mxu0 %v4643
        %v5063 = vpop.f32.mrf.mxu0
        %v5064 = vadd.f32 %v5050, %v5063
        %v5065 = vpop.f32.mrf.mxu0
        %v5066 = vadd.f32 %v5052, %v5065
        %5067 = vdwg.mxu0
        %5068 = vmatpush.bf16.msra.mxu0 %v4905
        %5069 = vmatpush.bf16.msra.mxu0 %v4903
        %5070 = vmatpush.bf16.msra.mxu0 %v4901
        %5071 = vmatpush.bf16.msra.mxu0 %v4899
        %5072 = vmatpush.bf16.msra.mxu0 %v4897
        %5073 = vmatpush.bf16.msra.mxu0 %v4895
        %5074 = vmatpush.bf16.msra.mxu0 %v4893
        %5075 = vmatpush.bf16.msra.mxu0 %v4891
        %5076 = vmatmul.bf16.gmra.mxu0 %v4644
        %v5077 = vpop.f32.mrf.mxu0
        %v5078 = vadd.f32 %v5064, %v5077
        %v5079 = vpop.f32.mrf.mxu0
        %v5080 = vadd.f32 %v5066, %v5079
        %5081 = vdwg.mxu0
        %v5082 = vmul.f32 %v5022, 0.2
        %v5083 = vmul.f32 %v5078, 0.2
        %v5084 = vmul.f32 %v5024, 0.2
        %v5085 = vmul.f32 %v5080, 0.2
        %v5086 = vmax.f32 %v5022, %v5082
        %v5087 = vmax.f32 %v5078, %v5083
        %v5088 = vmax.f32 %v5024, %v5084
        %v5089 = vmax.f32 %v5080, %v5085
        %v5090 = vld [vmem:[#allocation31] sm:$0xff]
        %v5091 = vld [vmem:[#allocation31 + $0x8] sm:$0xf]
        %v5092 = vld [vmem:[#allocation31 + $0xc] sm:$0xff]
        %v5093 = vld [vmem:[#allocation31 + $0x14] sm:$0xf]
        %v5094 = vld [vmem:[#allocation31 + $0x18] sm:$0xff]
        %v5095 = vld [vmem:[#allocation31 + $0x20] sm:$0xf]
        %v5096 = vld [vmem:[#allocation31 + $0x24] sm:$0xff]
        %v5097 = vld [vmem:[#allocation31 + $0x2c] sm:$0xf]
        %v5098 = vld [vmem:[#allocation31 + $0x30] sm:$0xff]
        %v5099 = vld [vmem:[#allocation31 + $0x38] sm:$0xf]
        %v5100 = vld [vmem:[#allocation31 + $0x3c] sm:$0xff]
        %v5101 = vld [vmem:[#allocation31 + $0x44] sm:$0xf]
        %v5102 = vld [vmem:[#allocation31 + $0x48] sm:$0xff]
        %v5103 = vld [vmem:[#allocation31 + $0x50] sm:$0xf]
        %v5104 = vld [vmem:[#allocation31 + $0x54] sm:$0xff]
        %v5105 = vld [vmem:[#allocation31 + $0x5c] sm:$0xf]
        %v5106 = vld [vmem:[#allocation31 + $0x60] sm:$0xff]
        %v5107 = vld [vmem:[#allocation31 + $0x68] sm:$0xf]
        %v5108 = vld [vmem:[#allocation31 + $0x6c] sm:$0xff]
        %v5109 = vld [vmem:[#allocation31 + $0x74] sm:$0xf]
        %v5110 = vld [vmem:[#allocation31 + $0x78] sm:$0xff]
        %v5111 = vld [vmem:[#allocation31 + $0x80] sm:$0xf]
        %v5112 = vld [vmem:[#allocation31 + $0x84] sm:$0xff]
        %v5113 = vld [vmem:[#allocation31 + $0x8c] sm:$0xf]
        %v5114 = vld [vmem:[#allocation31 + $0x90] sm:$0xff]
        %v5115 = vld [vmem:[#allocation31 + $0x98] sm:$0xf]
        %v5116 = vld [vmem:[#allocation31 + $0x9c] sm:$0xff]
        %v5117 = vld [vmem:[#allocation31 + $0xa4] sm:$0xf]
        %v5118 = vld [vmem:[#allocation31 + $0xa8] sm:$0xff]
        %v5119 = vld [vmem:[#allocation31 + $0xb0] sm:$0xf]
        %v5120 = vld [vmem:[#allocation31 + $0xb4] sm:$0xff]
        %v5121 = vld [vmem:[#allocation31 + $0xbc] sm:$0xf]
        %v5122 = vld [vmem:[#allocation31 + $0xc0] sm:$0xff]
        %v5123 = vld [vmem:[#allocation31 + $0xc8] sm:$0xf]
        %v5124 = vld [vmem:[#allocation31 + $0xcc] sm:$0xff]
        %v5125 = vld [vmem:[#allocation31 + $0xd4] sm:$0xf]
        %v5126 = vld [vmem:[#allocation31 + $0xd8] sm:$0xff]
        %v5127 = vld [vmem:[#allocation31 + $0xe0] sm:$0xf]
        %v5128 = vld [vmem:[#allocation31 + $0xe4] sm:$0xff]
        %v5129 = vld [vmem:[#allocation31 + $0xec] sm:$0xf]
        %v5130 = vld [vmem:[#allocation31 + $0xf0] sm:$0xff]
        %v5131 = vld [vmem:[#allocation31 + $0xf8] sm:$0xf]
        %v5132 = vld [vmem:[#allocation31 + $0xfc] sm:$0xff]
        %v5133 = vld [vmem:[#allocation31 + $0x104] sm:$0xf]
        %v5134 = vld [vmem:[#allocation31 + $0x108] sm:$0xff]
        %v5135 = vld [vmem:[#allocation31 + $0x110] sm:$0xf]
        %v5136 = vld [vmem:[#allocation31 + $0x114] sm:$0xff]
        %v5137 = vld [vmem:[#allocation31 + $0x11c] sm:$0xf]
        %v5138 = vld [vmem:[#allocation31 + $0x120] sm:$0xff]
        %v5139 = vld [vmem:[#allocation31 + $0x128] sm:$0xf]
        %v5140 = vld [vmem:[#allocation31 + $0x12c] sm:$0xff]
        %v5141 = vld [vmem:[#allocation31 + $0x134] sm:$0xf]
        %v5142 = vld [vmem:[#allocation31 + $0x138] sm:$0xff]
        %v5143 = vld [vmem:[#allocation31 + $0x140] sm:$0xf]
        %v5144 = vld [vmem:[#allocation31 + $0x144] sm:$0xff]
        %v5145 = vld [vmem:[#allocation31 + $0x14c] sm:$0xf]
        %v5146 = vld [vmem:[#allocation31 + $0x150] sm:$0xff]
        %v5147 = vld [vmem:[#allocation31 + $0x158] sm:$0xf]
        %v5148 = vld [vmem:[#allocation31 + $0x15c] sm:$0xff]
        %v5149 = vld [vmem:[#allocation31 + $0x164] sm:$0xf]
        %v5150 = vld [vmem:[#allocation31 + $0x168] sm:$0xff]
        %v5151 = vld [vmem:[#allocation31 + $0x170] sm:$0xf]
        %v5152 = vld [vmem:[#allocation31 + $0x174] sm:$0xff]
        %v5153 = vld [vmem:[#allocation31 + $0x17c] sm:$0xf]
        %v5154 = vld [vmem:[%s23] sm:$0x7]
        %v5155 = vpack.c.bf16 %v5088, %v5086
        %v5156 = vpack.c.bf16 %v5089, %v5087
        %v5158 = vperm.slane %v5154, 0
        %v5159 = vperm.slane %v5154, 1
        %v5160 = vperm.slane %v5154, 2
        %v5228 = vunpack.c.l.b16 %v5090
        %v5229 = vunpack.c.h.b16 %v5090
        %v5230 = vunpack.c.l.b16 %v5091
        %v5231 = vunpack.c.l.b16 %v5092
        %v5232 = vunpack.c.h.b16 %v5092
        %v5233 = vunpack.c.l.b16 %v5093
        %v5234 = vunpack.c.l.b16 %v5094
        %v5235 = vunpack.c.h.b16 %v5094
        %v5236 = vunpack.c.l.b16 %v5095
        %v5237 = vunpack.c.l.b16 %v5096
        %v5238 = vunpack.c.h.b16 %v5096
        %v5239 = vunpack.c.l.b16 %v5097
        %v5240 = vunpack.c.l.b16 %v5098
        %v5241 = vunpack.c.h.b16 %v5098
        %v5242 = vunpack.c.l.b16 %v5099
        %v5243 = vunpack.c.l.b16 %v5100
        %v5244 = vunpack.c.h.b16 %v5100
        %v5245 = vunpack.c.l.b16 %v5101
        %v5246 = vunpack.c.l.b16 %v5102
        %v5247 = vunpack.c.h.b16 %v5102
        %v5248 = vunpack.c.l.b16 %v5103
        %v5249 = vunpack.c.l.b16 %v5104
        %v5250 = vunpack.c.h.b16 %v5104
        %v5251 = vunpack.c.l.b16 %v5105
        %v5252 = vunpack.c.l.b16 %v5106
        %v5253 = vunpack.c.h.b16 %v5106
        %v5254 = vunpack.c.l.b16 %v5107
        %v5255 = vunpack.c.l.b16 %v5108
        %v5256 = vunpack.c.h.b16 %v5108
        %v5257 = vunpack.c.l.b16 %v5109
        %v5258 = vunpack.c.l.b16 %v5110
        %v5259 = vunpack.c.h.b16 %v5110
        %v5260 = vunpack.c.l.b16 %v5111
        %v5261 = vunpack.c.l.b16 %v5112
        %v5262 = vunpack.c.h.b16 %v5112
        %v5263 = vunpack.c.l.b16 %v5113
        %v5264 = vunpack.c.l.b16 %v5114
        %v5265 = vunpack.c.h.b16 %v5114
        %v5266 = vunpack.c.l.b16 %v5115
        %v5267 = vunpack.c.l.b16 %v5116
        %v5268 = vunpack.c.h.b16 %v5116
        %v5269 = vunpack.c.l.b16 %v5117
        %v5270 = vunpack.c.l.b16 %v5118
        %v5271 = vunpack.c.h.b16 %v5118
        %v5272 = vunpack.c.l.b16 %v5119
        %v5273 = vunpack.c.l.b16 %v5120
        %v5274 = vunpack.c.h.b16 %v5120
        %v5275 = vunpack.c.l.b16 %v5121
        %v5276 = vunpack.c.l.b16 %v5122
        %v5277 = vunpack.c.h.b16 %v5122
        %v5278 = vunpack.c.l.b16 %v5123
        %v5279 = vunpack.c.l.b16 %v5124
        %v5280 = vunpack.c.h.b16 %v5124
        %v5281 = vunpack.c.l.b16 %v5125
        %v5282 = vunpack.c.l.b16 %v5126
        %v5283 = vunpack.c.h.b16 %v5126
        %v5284 = vunpack.c.l.b16 %v5127
        %v5285 = vunpack.c.l.b16 %v5128
        %v5286 = vunpack.c.h.b16 %v5128
        %v5287 = vunpack.c.l.b16 %v5129
        %v5288 = vunpack.c.l.b16 %v5130
        %v5289 = vunpack.c.h.b16 %v5130
        %v5290 = vunpack.c.l.b16 %v5131
        %v5291 = vunpack.c.l.b16 %v5132
        %v5292 = vunpack.c.h.b16 %v5132
        %v5293 = vunpack.c.l.b16 %v5133
        %v5294 = vunpack.c.l.b16 %v5134
        %v5295 = vunpack.c.h.b16 %v5134
        %v5296 = vunpack.c.l.b16 %v5135
        %v5297 = vunpack.c.l.b16 %v5136
        %v5298 = vunpack.c.h.b16 %v5136
        %v5299 = vunpack.c.l.b16 %v5137
        %v5300 = vunpack.c.l.b16 %v5138
        %v5301 = vunpack.c.h.b16 %v5138
        %v5302 = vunpack.c.l.b16 %v5139
        %v5303 = vunpack.c.l.b16 %v5140
        %v5304 = vunpack.c.h.b16 %v5140
        %v5305 = vunpack.c.l.b16 %v5141
        %v5306 = vunpack.c.l.b16 %v5142
        %v5307 = vunpack.c.h.b16 %v5142
        %v5308 = vunpack.c.l.b16 %v5143
        %v5309 = vunpack.c.l.b16 %v5144
        %v5310 = vunpack.c.h.b16 %v5144
        %v5311 = vunpack.c.l.b16 %v5145
        %v5312 = vunpack.c.l.b16 %v5146
        %v5313 = vunpack.c.h.b16 %v5146
        %v5314 = vunpack.c.l.b16 %v5147
        %v5315 = vunpack.c.l.b16 %v5148
        %v5316 = vunpack.c.h.b16 %v5148
        %v5317 = vunpack.c.l.b16 %v5149
        %v5318 = vunpack.c.l.b16 %v5150
        %v5319 = vunpack.c.h.b16 %v5150
        %v5320 = vunpack.c.l.b16 %v5151
        %v5321 = vunpack.c.l.b16 %v5152
        %v5322 = vunpack.c.h.b16 %v5152
        %v5323 = vunpack.c.l.b16 %v5153
        %v5324 = vpack.c.b16 %v5231, %v5228
        %v5325 = vpack.c.b16 %v5232, %v5229
        %v5326 = vpack.c.b16 %v5233, %v5230
        %v5327 = vpack.c.b16 %v5237, %v5234
        %v5328 = vpack.c.b16 %v5238, %v5235
        %v5329 = vpack.c.b16 %v5239, %v5236
        %v5330 = vpack.c.b16 %v5243, %v5240
        %v5331 = vpack.c.b16 %v5244, %v5241
        %v5332 = vpack.c.b16 %v5245, %v5242
        %v5333 = vpack.c.b16 %v5249, %v5246
        %v5334 = vpack.c.b16 %v5250, %v5247
        %v5335 = vpack.c.b16 %v5251, %v5248
        %v5336 = vpack.c.b16 %v5255, %v5252
        %v5337 = vpack.c.b16 %v5256, %v5253
        %v5338 = vpack.c.b16 %v5257, %v5254
        %v5339 = vpack.c.b16 %v5261, %v5258
        %v5340 = vpack.c.b16 %v5262, %v5259
        %v5341 = vpack.c.b16 %v5263, %v5260
        %v5342 = vpack.c.b16 %v5267, %v5264
        %v5343 = vpack.c.b16 %v5268, %v5265
        %v5344 = vpack.c.b16 %v5269, %v5266
        %v5345 = vpack.c.b16 %v5273, %v5270
        %v5346 = vpack.c.b16 %v5274, %v5271
        %v5347 = vpack.c.b16 %v5275, %v5272
        %v5348 = vpack.c.b16 %v5279, %v5276
        %v5349 = vpack.c.b16 %v5280, %v5277
        %v5350 = vpack.c.b16 %v5281, %v5278
        %v5351 = vpack.c.b16 %v5285, %v5282
        %v5352 = vpack.c.b16 %v5286, %v5283
        %v5353 = vpack.c.b16 %v5287, %v5284
        %v5354 = vpack.c.b16 %v5291, %v5288
        %v5355 = vpack.c.b16 %v5292, %v5289
        %v5356 = vpack.c.b16 %v5293, %v5290
        %v5357 = vpack.c.b16 %v5297, %v5294
        %v5358 = vpack.c.b16 %v5298, %v5295
        %v5359 = vpack.c.b16 %v5299, %v5296
        %v5360 = vpack.c.b16 %v5303, %v5300
        %v5361 = vpack.c.b16 %v5304, %v5301
        %v5362 = vpack.c.b16 %v5305, %v5302
        %v5363 = vpack.c.b16 %v5309, %v5306
        %v5364 = vpack.c.b16 %v5310, %v5307
        %v5365 = vpack.c.b16 %v5311, %v5308
        %v5366 = vpack.c.b16 %v5315, %v5312
        %v5367 = vpack.c.b16 %v5316, %v5313
        %v5368 = vpack.c.b16 %v5317, %v5314
        %v5369 = vpack.c.b16 %v5321, %v5318
        %v5370 = vpack.c.b16 %v5322, %v5319
        %v5371 = vpack.c.b16 %v5323, %v5320
        %5420 = vmatpush.bf16.msra.mxu0 %v5345
        %5421 = vmatpush.bf16.msra.mxu0 %v5342
        %5422 = vmatpush.bf16.msra.mxu0 %v5339
        %5423 = vmatpush.bf16.msra.mxu0 %v5336
        %5424 = vmatpush.bf16.msra.mxu0 %v5333
        %5425 = vmatpush.bf16.msra.mxu0 %v5330
        %5426 = vmatpush.bf16.msra.mxu0 %v5327
        %5427 = vmatpush.bf16.msra.mxu0 %v5324
        %5428 = vmatmul.bf16.gmra.mxu0 %v5155
        %v5429 = vpop.f32.mrf.mxu0
        %v5430 = vadd.f32 %v5158, %v5429
        %v5431 = vpop.f32.mrf.mxu0
        %v5432 = vadd.f32 %v5158, %v5431
        %5433 = vdwg.mxu0
        %5434 = vmatpush.bf16.msra.mxu0 %v5369
        %5435 = vmatpush.bf16.msra.mxu0 %v5366
        %5436 = vmatpush.bf16.msra.mxu0 %v5363
        %5437 = vmatpush.bf16.msra.mxu0 %v5360
        %5438 = vmatpush.bf16.msra.mxu0 %v5357
        %5439 = vmatpush.bf16.msra.mxu0 %v5354
        %5440 = vmatpush.bf16.msra.mxu0 %v5351
        %5441 = vmatpush.bf16.msra.mxu0 %v5348
        %5442 = vmatmul.bf16.gmra.mxu0 %v5156
        %v5443 = vpop.f32.mrf.mxu0
        %v5444 = vadd.f32 %v5430, %v5443
        %v5445 = vpop.f32.mrf.mxu0
        %v5446 = vadd.f32 %v5432, %v5445
        %5447 = vdwg.mxu0
        %5448 = vmatpush.bf16.msra.mxu0 %v5346
        %5449 = vmatpush.bf16.msra.mxu0 %v5343
        %5450 = vmatpush.bf16.msra.mxu0 %v5340
        %5451 = vmatpush.bf16.msra.mxu0 %v5337
        %5452 = vmatpush.bf16.msra.mxu0 %v5334
        %5453 = vmatpush.bf16.msra.mxu0 %v5331
        %5454 = vmatpush.bf16.msra.mxu0 %v5328
        %5455 = vmatpush.bf16.msra.mxu0 %v5325
        %5456 = vmatmul.bf16.gmra.mxu0 %v5155
        %v5457 = vpop.f32.mrf.mxu0
        %v5458 = vadd.f32 %v5159, %v5457
        %v5459 = vpop.f32.mrf.mxu0
        %v5460 = vadd.f32 %v5159, %v5459
        %5461 = vdwg.mxu0
        %5462 = vmatpush.bf16.msra.mxu0 %v5370
        %5463 = vmatpush.bf16.msra.mxu0 %v5367
        %5464 = vmatpush.bf16.msra.mxu0 %v5364
        %5465 = vmatpush.bf16.msra.mxu0 %v5361
        %5466 = vmatpush.bf16.msra.mxu0 %v5358
        %5467 = vmatpush.bf16.msra.mxu0 %v5355
        %5468 = vmatpush.bf16.msra.mxu0 %v5352
        %5469 = vmatpush.bf16.msra.mxu0 %v5349
        %5470 = vmatmul.bf16.gmra.mxu0 %v5156
        %v5471 = vpop.f32.mrf.mxu0
        %v5472 = vadd.f32 %v5458, %v5471
        %v5473 = vpop.f32.mrf.mxu0
        %v5474 = vadd.f32 %v5460, %v5473
        %5475 = vdwg.mxu0
        %5476 = vmatpush.bf16.msra.mxu0 %v5347
        %5477 = vmatpush.bf16.msra.mxu0 %v5344
        %5478 = vmatpush.bf16.msra.mxu0 %v5341
        %5479 = vmatpush.bf16.msra.mxu0 %v5338
        %5480 = vmatpush.bf16.msra.mxu0 %v5335
        %5481 = vmatpush.bf16.msra.mxu0 %v5332
        %5482 = vmatpush.bf16.msra.mxu0 %v5329
        %5483 = vmatpush.bf16.msra.mxu0 %v5326
        %5484 = vmatmul.bf16.gmra.mxu0 %v5155
        %v5485 = vpop.f32.mrf.mxu0
        %v5486 = vadd.f32 %v5160, %v5485
        %v5487 = vpop.f32.mrf.mxu0
        %v5488 = vadd.f32 %v5160, %v5487
        %5489 = vdwg.mxu0
        %5490 = vmatpush.bf16.msra.mxu0 %v5371
        %5491 = vmatpush.bf16.msra.mxu0 %v5368
        %5492 = vmatpush.bf16.msra.mxu0 %v5365
        %5493 = vmatpush.bf16.msra.mxu0 %v5362
        %5494 = vmatpush.bf16.msra.mxu0 %v5359
        %5495 = vmatpush.bf16.msra.mxu0 %v5356
        %5496 = vmatpush.bf16.msra.mxu0 %v5353
        %5497 = vmatpush.bf16.msra.mxu0 %v5350
        %5498 = vmatmul.bf16.gmra.mxu0 %v5156
        %v5499 = vpop.f32.mrf.mxu0
        %v5500 = vadd.f32 %v5486, %v5499
        %v5501 = vpop.f32.mrf.mxu0
        %v5502 = vadd.f32 %v5488, %v5501
        %5503 = vdwg.mxu0
        %5504 = vst [vmem:[%s1099] sm:$0xff] %v5444
        %5505 = vst [vmem:[%s1099 + $0x8] sm:$0xff] %v5472
        %5506 = vst [vmem:[%s1099 + $0x10] sm:$0xff] %v5500
        %5507 = vst [vmem:[%s1099 + $0x18] sm:$0xff] %v5446
        %5508 = vst [vmem:[%s1099 + $0x20] sm:$0xff] %v5474
        %5509 = vst [vmem:[%s1099 + $0x28] sm:$0xff] %v5502
        %5510 = vst [vmem:[%s1106] sm:$0xff] %v3846
        %5511 = vst [vmem:[%s1106 + $0x8] sm:$0xff] %v3860
        %5512 = vst [vmem:[%s1106 + $0x10] sm:$0xff] %v3848
        %5513 = vst [vmem:[%s1106 + $0x18] sm:$0xff] %v3862
        %s5514 = sand.u32 %s579, 1
        %s5515 = scalar_lea.sflag [#allocation4], %s5514
        %s5516 = sand.u32 %s579, 1
        %s5517 = smul.addr %s5516, 48
        %s5518 = scalar_lea.vmem [#allocation32], %s5517
        %s5519 = sand.u32 %s605, 1
        %s5520 = scalar_lea.sflag [#allocation34], %s5519
        %s5521 = sand.u32 %s605, 1
        %s5522 = smul.addr %s5521, 32
        %s5523 = scalar_lea.vmem [#allocation33], %s5522
        // Predicated region
        $region193: #{tpu_custom_call.1} parent=115 // pred_check
          %p5524 = pneg %p589
        $region194: #{tpu_custom_call.1} parent=115 // pred_check_branch
          %5526 = sbr.rel (%p5524) target = $region196
        $region195: #{tpu_custom_call.1} parent=115 // pred_region
          %s5527 = smul.u32 2, %s57
          %5529 = vsyncadd %s5515, 0
          %s5530 = smul.addr %s5527, 3
          %s5531 = smul.addr %s5530, 8
          %s5532 = scalar_lea.hbm %s24, %s5531
          %s5533 = sshll.u32 %s5518, 4
          %s5534 = int_to_ptr.vmem [resolvable:$true] %s5533
          %s5535 = sshll.u32 %s5532, 4
          %s5536 = int_to_ptr.hbm [resolvable:$true] %s5535
          %5541 = dma.vmem_to_hbm [thread:$0]  %s5534, 768, %s5536, %s5515, 384, 384, 24
        $region196: #{tpu_custom_call.1} parent=115 // pred_fallthru
          _
        // Predicated region
        $region197: #{tpu_custom_call.1} parent=115 // pred_check
          %p5542 = pneg %p615
        $region198: #{tpu_custom_call.1} parent=115 // pred_check_branch
          %5544 = sbr.rel (%p5542) target = $region200
        $region199: #{tpu_custom_call.1} parent=115 // pred_region
          %s5545 = smul.u32 2, %s57
          %5547 = vsyncadd %s5520, 0
          %s5548 = smul.addr %s5545, 2
          %s5549 = smul.addr %s5548, 8
          %s5550 = scalar_lea.hbm %s25, %s5549
          %s5551 = sshll.u32 %s5523, 4
          %s5552 = int_to_ptr.vmem [resolvable:$true] %s5551
          %s5553 = sshll.u32 %s5550, 4
          %s5554 = int_to_ptr.hbm [resolvable:$true] %s5553
          %5559 = dma.vmem_to_hbm [thread:$0]  %s5552, 512, %s5554, %s5520, 256, 256, 16
        $region200: #{tpu_custom_call.1} parent=115 // pred_fallthru
          _
      $region116: #{tpu_custom_call.1} parent=5 // pred_fallthru
        _
      %p5560 = scmp.le.s32.totalorder 2, %s52
      // Predicated region
      $region201: #{tpu_custom_call.1} parent=5 // pred_check
        %p5561 = pneg %p5560
      $region202: #{tpu_custom_call.1} parent=5 // pred_check_branch
        %5563 = sbr.rel (%p5561) target = $region204
      $region203: #{tpu_custom_call.1} parent=5 // pred_region
        %s5564 = ssub.s32 %s52, 2
        // Predicated region
        $region205: #{tpu_custom_call.1} parent=203 // pred_check
          %p5565 = pneg %p595
        $region206: #{tpu_custom_call.1} parent=203 // pred_check_branch
          %5567 = sbr.rel (%p5565) target = $region208
        $region207: #{tpu_custom_call.1} parent=203 // pred_region
          %s5568 = sand.u32 %s580, 1
          %s5569 = scalar_lea.sflag [#allocation4], %s5568
          %s5570 = sand.u32 %s580, 1
          %s5571 = smul.addr %s5570, 48
          %s5572 = scalar_lea.vmem [#allocation32], %s5571
          %5574 = dma.done %s5569, 768
        $region208: #{tpu_custom_call.1} parent=203 // pred_fallthru
          _
        // Predicated region
        $region209: #{tpu_custom_call.1} parent=203 // pred_check
          %p5575 = pneg %p621
        $region210: #{tpu_custom_call.1} parent=203 // pred_check_branch
          %5577 = sbr.rel (%p5575) target = $region212
        $region211: #{tpu_custom_call.1} parent=203 // pred_region
          %s5578 = sand.u32 %s606, 1
          %s5579 = scalar_lea.sflag [#allocation34], %s5578
          %s5580 = sand.u32 %s606, 1
          %s5581 = smul.addr %s5580, 32
          %s5582 = scalar_lea.vmem [#allocation33], %s5581
          %5584 = dma.done %s5579, 512
        $region212: #{tpu_custom_call.1} parent=203 // pred_fallthru
          _
      $region204: #{tpu_custom_call.1} parent=5 // pred_fallthru
        _
    $region6: #{tpu_custom_call.1} parent=1 // loop_footer
      %s56 = sadd.s32 1, %s52
    $region7: #{tpu_custom_call.1} parent=1 // loop_footer_branch
      %51 = sbr.rel target = $region3
    $region8: #{tpu_custom_call.1} parent=1 // loop_exit
      _
    %5585 = vsyncpa [#allocation3], 1
    %s5586 = scalar_lea.sflag [#allocation3], 1
    %5587 = vsyncpa %s5586, 1
    %5588 = vsyncpa [#allocation6], 1
    %s5589 = scalar_lea.sflag [#allocation6], 1
    %5590 = vsyncpa %s5589, 1
    %5591 = vsyncpa [#allocation9], 1
    %5592 = vsyncpa [#allocation12], 1
    %5593 = vsyncpa [#allocation15], 1
    %5594 = vsyncpa [#allocation18], 1
    %5595 = vsyncpa [#allocation21], 1
    %5596 = vsyncpa [#allocation24], 1
    %5597 = vsyncpa [#allocation27], 1
    %5598 = vsyncpa [#allocation30], 1
    %5599 = vsyncpa [#allocation4], 1
    %s5600 = scalar_lea.sflag [#allocation4], 1
    %5601 = vsyncpa %s5600, 1
    %5602 = vsyncpa [#allocation34], 1
    %s5603 = scalar_lea.sflag [#allocation34], 1
    %5604 = vsyncpa %s5603, 1

</llo_original>
